<compile_context>
chip_gen: v7x
topology: tpu7x:2x2x1
jax: 0.10.0
libtpu: 0.0.40
codegen_flags: <defaults>
</compile_context>

<pallas_src>
import math
import jax
import jax.numpy as jnp
from jax import lax
from jax.experimental import pallas as pl
from jax.experimental.pallas import tpu as pltpu

NEG_SLOPE = 0.2
LANES = 128


def conv_stats_kernel(x_ref, w_ref, conv_ref, stats_ref):
    """Conv (as k*k accumulated matmuls) + per-tile BN partial sums.

    x_ref:     (k, TH, W + k - 1, C_in)   bf16  row-shifted input stack for this tile
    w_ref:     (k*k, C_in, Cp)            bf16  per-(kh,kw) weight slabs, Cp lane-padded
    conv_ref:  (TH*W, Cp)                 f32   conv output tile (lane-dense)
    stats_ref: (1, 2, Cp)                 f32   [sum, sum_of_squares] over this tile
    """
    k_taps, th, wpad, cin = x_ref.shape
    wout = wpad - (k_taps - 1)
    cp = w_ref.shape[-1]

    # Upcast once for the (cheap, layout-safe) width slicing; recast per-patch for
    # the bf16 MXU matmul (lossless: values are already bf16-quantized in HBM).
    x32 = x_ref[...].astype(jnp.float32)          # (k, TH, W+k-1, C_in)
    wmat = w_ref[...]                             # (k*k, C_in, Cp) bf16

    acc = None
    for kh in range(k_taps):
        for kw in range(k_taps):
            patch = x32[kh, :, kw:kw + wout, :].reshape(th * wout, cin)
            d = jnp.dot(patch.astype(jnp.bfloat16), wmat[kh * k_taps + kw],
                        preferred_element_type=jnp.float32)
            acc = d if acc is None else acc + d   # (TH*W, Cp) f32

    conv_ref[...] = acc

    s1 = jnp.sum(acc, axis=0, keepdims=True)          # (1, Cp)
    s2 = jnp.sum(acc * acc, axis=0, keepdims=True)    # (1, Cp)
    stats_ref[...] = jnp.concatenate([s1, s2], axis=0).reshape(1, 2, cp)


def bn_act_kernel(conv_ref, scale_ref, shift_ref, out_ref):
    """Folded BatchNorm affine (single FMA) + LeakyReLU(0.2)."""
    y = conv_ref[...] * scale_ref[...] + shift_ref[...]
    out_ref[...] = jnp.maximum(y, NEG_SLOPE * y)


def conv_block_forward(x_nchw, weight, bias, gamma, beta, *,
                       kernel_size=3, stride=1, eps=1e-5):
    """x_nchw: (N, C_in, H, W); weight: (C_out, C_in, k, k); bias/gamma/beta: (C_out,)."""
    assert stride == 1, "only stride=1 exercised here"
    k = kernel_size
    assert k % 2 == 1
    del bias  # Conv bias before training-mode BatchNorm cancels exactly ((x+b)-mean).

    N, C_in, H, W = x_nchw.shape
    C_out = weight.shape[0]
    pad = k // 2
    Cp = ((C_out + LANES - 1) // LANES) * LANES          # lane-dense channel padding
    M = N * H * W

    # Row-tile height: largest divisor of H whose f32 conv-out block stays <= ~2 MiB.
    TH = 1
    for cand in range(H, 0, -1):
        if H % cand == 0 and cand * W * Cp * 4 <= 2 * 1024 * 1024:
            TH = cand
            break
    R = H // TH
    BLK = TH * W                                          # rows per tile

    # ---- glue: NCHW -> NHWC, spatial pad, k row-shifted views (k-x, not k*k-x) ----
    x_nhwc = jnp.transpose(x_nchw, (0, 2, 3, 1)).astype(jnp.float32)
    xp = jnp.pad(x_nhwc, ((0, 0), (pad, pad), (pad, pad), (0, 0)))
    xs = jnp.stack([xp[:, kh:kh + H] for kh in range(k)], axis=1)     # (N, k, H, W+2p, C_in)
    xs = xs.reshape(N * k, H, W + 2 * pad, C_in).astype(jnp.bfloat16)

    # Weights as (k*k, C_in, Cp), matching (kh, kw) tap order; zero-pad channels.
    wk = jnp.transpose(weight, (2, 3, 1, 0)).reshape(k * k, C_in, C_out)
    wk = jnp.pad(wk, ((0, 0), (0, 0), (0, Cp - C_out))).astype(jnp.bfloat16)

    vmem_limit = 32 * 1024 * 1024

    # ---- kernel 1: conv + per-tile partial statistics -------------------------------
    conv_flops = 2 * M * (k * k * C_in) * Cp
    conv, stats = pl.pallas_call(
        conv_stats_kernel,
        out_shape=(jax.ShapeDtypeStruct((M, Cp), jnp.float32),
                   jax.ShapeDtypeStruct((N * R, 2, Cp), jnp.float32)),
        grid=(N, R),
        in_specs=[
            pl.BlockSpec((k, TH, W + 2 * pad, C_in), lambda n, r: (n, r, 0, 0)),
            pl.BlockSpec((k * k, C_in, Cp), lambda n, r: (0, 0, 0)),
        ],
        out_specs=(
            pl.BlockSpec((BLK, Cp), lambda n, r: (n * R + r, 0)),
            pl.BlockSpec((1, 2, Cp), lambda n, r: (n * R + r, 0, 0)),
        ),
        compiler_params=pltpu.CompilerParams(
            dimension_semantics=("parallel", "parallel"),
            vmem_limit_bytes=vmem_limit),
        cost_estimate=pl.CostEstimate(
            flops=conv_flops, transcendentals=0,
            bytes_accessed=xs.size * 2 + wk.size * 2 + M * Cp * 4 + N * R * 2 * Cp * 4),
    )(xs, wk)

    # ---- tiny per-channel reduction + BN folding (plain JAX, O(C_out) work) ---------
    psum = jnp.sum(stats[:, 0, :], axis=0)                # (Cp,)
    psq = jnp.sum(stats[:, 1, :], axis=0)                 # (Cp,)
    mean = psum / M
    var = jnp.maximum(psq / M - mean * mean, 0.0)         # biased variance (training BN)
    gamma_p = jnp.pad(gamma.astype(jnp.float32), (0, Cp - C_out))
    beta_p = jnp.pad(beta.astype(jnp.float32), (0, Cp - C_out))
    scale = gamma_p * lax.rsqrt(var + eps)
    shift = beta_p - mean * scale
    scale = scale.reshape(1, Cp)
    shift = shift.reshape(1, Cp)

    # ---- kernel 2: normalize (single FMA) + LeakyReLU, tiled & lane-dense -----------
    y = pl.pallas_call(
        bn_act_kernel,
        out_shape=jax.ShapeDtypeStruct((M, Cp), jnp.float32),
        grid=(M // BLK,),
        in_specs=[
            pl.BlockSpec((BLK, Cp), lambda i: (i, 0)),
            pl.BlockSpec((1, Cp), lambda i: (0, 0)),
            pl.BlockSpec((1, Cp), lambda i: (0, 0)),
        ],
        out_specs=pl.BlockSpec((BLK, Cp), lambda i: (i, 0)),
        compiler_params=pltpu.CompilerParams(
            dimension_semantics=("parallel",),
            vmem_limit_bytes=vmem_limit),
        cost_estimate=pl.CostEstimate(
            flops=3 * M * Cp, transcendentals=0,
            bytes_accessed=2 * M * Cp * 4 + 2 * Cp * 4),
    )(conv, scale, shift)

    # ---- glue: drop channel padding, back to NCHW ----
    out = y[:, :C_out].reshape(N, H, W, C_out)
    return jnp.transpose(out, (0, 3, 1, 2))


def _reference(x_nchw, weight, bias, gamma, beta, k=3):
    # Pure-JAX reference with identical math (for a sanity check).
    N, C_in, H, W = x_nchw.shape
    C_out = weight.shape[0]
    pad = k // 2
    x = jnp.transpose(x_nchw, (0, 2, 3, 1))
    xp = jnp.pad(x, ((0, 0), (pad, pad), (pad, pad), (0, 0)))
    cols = []
    for kh in range(k):
        for kw in range(k):
            cols.append(xp[:, kh:kh + H, kw:kw + W, :])
    patches = jnp.concatenate(cols, axis=-1).reshape(N * H * W, k * k * C_in)
    w_mat = jnp.transpose(weight, (2, 3, 1, 0)).reshape(k * k * C_in, C_out)
    acc = patches @ w_mat + bias[None, :]
    mean = acc.mean(axis=0, keepdims=True)
    var = ((acc - mean) ** 2).mean(axis=0, keepdims=True)
    y = gamma[None, :] * (acc - mean) / jnp.sqrt(var + 1e-5) + beta[None, :]
    y = jnp.where(y > 0, y, NEG_SLOPE * y)
    return jnp.transpose(y.reshape(N, H, W, C_out), (0, 3, 1, 2))


if __name__ == "__main__":
    # Small shapes consistent with the module: batch=2, in_ch=4, out_ch=8, 16x16 spatial.
    N, C_in, C_out, H, W, k = 2, 4, 8, 16, 16, 3

    key = jax.random.PRNGKey(0)
    kx, kw_, kb = jax.random.split(key, 3)

    x = jax.random.normal(kx, (N, C_in, H, W), dtype=jnp.float32)

    # Deterministic param init mimicking PyTorch defaults:
    # Conv2d: U(-bound, bound) with bound = 1/sqrt(C_in*k*k); BN: gamma=1, beta=0.
    bound = 1.0 / math.sqrt(C_in * k * k)
    weight = jax.random.uniform(kw_, (C_out, C_in, k, k), jnp.float32, -bound, bound)
    bias = jax.random.uniform(kb, (C_out,), jnp.float32, -bound, bound)
    gamma = jnp.ones((C_out,), jnp.float32)
    beta = jnp.zeros((C_out,), jnp.float32)

    out = conv_block_forward(x, weight, bias, gamma, beta, kernel_size=k, stride=1)
    out = jax.block_until_ready(out)

    ref = _reference(x, weight, bias, gamma, beta, k=k)
    assert out.shape == (N, C_out, H, W)
    # 2e-2 tolerance: kernel uses bf16 matmul operands (f32 accumulation/statistics).
    assert jnp.allclose(out, ref, atol=2e-2, rtol=2e-2), "mismatch vs reference"

    print("KERNEL_OK")
</pallas_src>

<mosaic_0001>
module attributes {stable_mosaic.version = 11 : i64} {
  func.func @conv_stats_kernel(%arg0: i32, %arg1: i32, %arg2: memref<3x16x18x4xbf16, #tpu.memory_space<vmem>>, %arg3: memref<9x4x128xbf16, #tpu.memory_space<vmem>>, %arg4: memref<256x128xf32, #tpu.memory_space<vmem>>, %arg5: memref<1x2x128xf32, #tpu.memory_space<vmem>>) attributes {dimension_semantics = [#tpu.dimension_semantics<parallel>, #tpu.dimension_semantics<parallel>], iteration_bounds = array<i64: 2, 1>, scalar_prefetch = 0 : i64, scratch_operands = 0 : i64, tpu.core_type = #tpu.core_type<tc>, window_params = [{transform_indices = @transform_0, window_bounds = array<i64: 3, 16, 18, 4>}, {pipeline_mode = #tpu.pipeline_mode<synchronous>, transform_indices = @transform_1, window_bounds = array<i64: 9, 4, 128>}, {transform_indices = @transform_2, window_bounds = array<i64: 256, 128>}, {transform_indices = @transform_3, window_bounds = array<i64: 1, 2, 128>}]} {
    %c0 = arith.constant 0 : index
    %c0_0 = arith.constant 0 : index
    %c0_1 = arith.constant 0 : index
    %c0_2 = arith.constant 0 : index
    %0 = vector.load %arg2[%c0, %c0_0, %c0_1, %c0_2] : memref<3x16x18x4xbf16, #tpu.memory_space<vmem>>, vector<3x16x18x4xbf16>
    %1 = arith.extf %0 : vector<3x16x18x4xbf16> to vector<3x16x18x4xf32>
    %c0_3 = arith.constant 0 : index
    %c0_4 = arith.constant 0 : index
    %c0_5 = arith.constant 0 : index
    %2 = vector.load %arg3[%c0_3, %c0_4, %c0_5] : memref<9x4x128xbf16, #tpu.memory_space<vmem>>, vector<9x4x128xbf16>
    %3 = vector.extract_strided_slice %1 {offsets = [0, 0, 0, 0], sizes = [1, 16, 16, 4], strides = [1, 1, 1, 1]} : vector<3x16x18x4xf32> to vector<1x16x16x4xf32>
    %4 = vector.shape_cast %3 : vector<1x16x16x4xf32> to vector<16x16x4xf32>
    %5 = vector.shape_cast %4 : vector<16x16x4xf32> to vector<256x4xf32>
    %6 = arith.truncf %5 : vector<256x4xf32> to vector<256x4xbf16>
    %7 = vector.extract_strided_slice %2 {offsets = [0, 0, 0], sizes = [1, 4, 128], strides = [1, 1, 1]} : vector<9x4x128xbf16> to vector<1x4x128xbf16>
    %8 = vector.shape_cast %7 : vector<1x4x128xbf16> to vector<4x128xbf16>
    %cst = arith.constant dense<0.000000e+00> : vector<256x128xf32>
    %9 = tpu.matmul %6, %8, %cst {dimension_numbers = #tpu.dot_dimension_numbers<[1], [0], [0], [1], [0, 0, 1, 1], [], []>} : vector<256x4xbf16>, vector<4x128xbf16>, vector<256x128xf32> -> vector<256x128xf32>
    %10 = vector.extract_strided_slice %1 {offsets = [0, 0, 1, 0], sizes = [1, 16, 16, 4], strides = [1, 1, 1, 1]} : vector<3x16x18x4xf32> to vector<1x16x16x4xf32>
    %11 = vector.shape_cast %10 : vector<1x16x16x4xf32> to vector<16x16x4xf32>
    %12 = vector.shape_cast %11 : vector<16x16x4xf32> to vector<256x4xf32>
    %13 = arith.truncf %12 : vector<256x4xf32> to vector<256x4xbf16>
    %14 = vector.extract_strided_slice %2 {offsets = [1, 0, 0], sizes = [1, 4, 128], strides = [1, 1, 1]} : vector<9x4x128xbf16> to vector<1x4x128xbf16>
    %15 = vector.shape_cast %14 : vector<1x4x128xbf16> to vector<4x128xbf16>
    %cst_6 = arith.constant dense<0.000000e+00> : vector<256x128xf32>
    %16 = tpu.matmul %13, %15, %cst_6 {dimension_numbers = #tpu.dot_dimension_numbers<[1], [0], [0], [1], [0, 0, 1, 1], [], []>} : vector<256x4xbf16>, vector<4x128xbf16>, vector<256x128xf32> -> vector<256x128xf32>
    %17 = arith.addf %9, %16 : vector<256x128xf32>
    %18 = vector.extract_strided_slice %1 {offsets = [0, 0, 2, 0], sizes = [1, 16, 16, 4], strides = [1, 1, 1, 1]} : vector<3x16x18x4xf32> to vector<1x16x16x4xf32>
    %19 = vector.shape_cast %18 : vector<1x16x16x4xf32> to vector<16x16x4xf32>
    %20 = vector.shape_cast %19 : vector<16x16x4xf32> to vector<256x4xf32>
    %21 = arith.truncf %20 : vector<256x4xf32> to vector<256x4xbf16>
    %22 = vector.extract_strided_slice %2 {offsets = [2, 0, 0], sizes = [1, 4, 128], strides = [1, 1, 1]} : vector<9x4x128xbf16> to vector<1x4x128xbf16>
    %23 = vector.shape_cast %22 : vector<1x4x128xbf16> to vector<4x128xbf16>
    %cst_7 = arith.constant dense<0.000000e+00> : vector<256x128xf32>
    %24 = tpu.matmul %21, %23, %cst_7 {dimension_numbers = #tpu.dot_dimension_numbers<[1], [0], [0], [1], [0, 0, 1, 1], [], []>} : vector<256x4xbf16>, vector<4x128xbf16>, vector<256x128xf32> -> vector<256x128xf32>
    %25 = arith.addf %17, %24 : vector<256x128xf32>
    %26 = vector.extract_strided_slice %1 {offsets = [1, 0, 0, 0], sizes = [1, 16, 16, 4], strides = [1, 1, 1, 1]} : vector<3x16x18x4xf32> to vector<1x16x16x4xf32>
    %27 = vector.shape_cast %26 : vector<1x16x16x4xf32> to vector<16x16x4xf32>
    %28 = vector.shape_cast %27 : vector<16x16x4xf32> to vector<256x4xf32>
    %29 = arith.truncf %28 : vector<256x4xf32> to vector<256x4xbf16>
    %30 = vector.extract_strided_slice %2 {offsets = [3, 0, 0], sizes = [1, 4, 128], strides = [1, 1, 1]} : vector<9x4x128xbf16> to vector<1x4x128xbf16>
    %31 = vector.shape_cast %30 : vector<1x4x128xbf16> to vector<4x128xbf16>
    %cst_8 = arith.constant dense<0.000000e+00> : vector<256x128xf32>
    %32 = tpu.matmul %29, %31, %cst_8 {dimension_numbers = #tpu.dot_dimension_numbers<[1], [0], [0], [1], [0, 0, 1, 1], [], []>} : vector<256x4xbf16>, vector<4x128xbf16>, vector<256x128xf32> -> vector<256x128xf32>
    %33 = arith.addf %25, %32 : vector<256x128xf32>
    %34 = vector.extract_strided_slice %1 {offsets = [1, 0, 1, 0], sizes = [1, 16, 16, 4], strides = [1, 1, 1, 1]} : vector<3x16x18x4xf32> to vector<1x16x16x4xf32>
    %35 = vector.shape_cast %34 : vector<1x16x16x4xf32> to vector<16x16x4xf32>
    %36 = vector.shape_cast %35 : vector<16x16x4xf32> to vector<256x4xf32>
    %37 = arith.truncf %36 : vector<256x4xf32> to vector<256x4xbf16>
    %38 = vector.extract_strided_slice %2 {offsets = [4, 0, 0], sizes = [1, 4, 128], strides = [1, 1, 1]} : vector<9x4x128xbf16> to vector<1x4x128xbf16>
    %39 = vector.shape_cast %38 : vector<1x4x128xbf16> to vector<4x128xbf16>
    %cst_9 = arith.constant dense<0.000000e+00> : vector<256x128xf32>
    %40 = tpu.matmul %37, %39, %cst_9 {dimension_numbers = #tpu.dot_dimension_numbers<[1], [0], [0], [1], [0, 0, 1, 1], [], []>} : vector<256x4xbf16>, vector<4x128xbf16>, vector<256x128xf32> -> vector<256x128xf32>
    %41 = arith.addf %33, %40 : vector<256x128xf32>
    %42 = vector.extract_strided_slice %1 {offsets = [1, 0, 2, 0], sizes = [1, 16, 16, 4], strides = [1, 1, 1, 1]} : vector<3x16x18x4xf32> to vector<1x16x16x4xf32>
    %43 = vector.shape_cast %42 : vector<1x16x16x4xf32> to vector<16x16x4xf32>
    %44 = vector.shape_cast %43 : vector<16x16x4xf32> to vector<256x4xf32>
    %45 = arith.truncf %44 : vector<256x4xf32> to vector<256x4xbf16>
    %46 = vector.extract_strided_slice %2 {offsets = [5, 0, 0], sizes = [1, 4, 128], strides = [1, 1, 1]} : vector<9x4x128xbf16> to vector<1x4x128xbf16>
    %47 = vector.shape_cast %46 : vector<1x4x128xbf16> to vector<4x128xbf16>
    %cst_10 = arith.constant dense<0.000000e+00> : vector<256x128xf32>
    %48 = tpu.matmul %45, %47, %cst_10 {dimension_numbers = #tpu.dot_dimension_numbers<[1], [0], [0], [1], [0, 0, 1, 1], [], []>} : vector<256x4xbf16>, vector<4x128xbf16>, vector<256x128xf32> -> vector<256x128xf32>
    %49 = arith.addf %41, %48 : vector<256x128xf32>
    %50 = vector.extract_strided_slice %1 {offsets = [2, 0, 0, 0], sizes = [1, 16, 16, 4], strides = [1, 1, 1, 1]} : vector<3x16x18x4xf32> to vector<1x16x16x4xf32>
    %51 = vector.shape_cast %50 : vector<1x16x16x4xf32> to vector<16x16x4xf32>
    %52 = vector.shape_cast %51 : vector<16x16x4xf32> to vector<256x4xf32>
    %53 = arith.truncf %52 : vector<256x4xf32> to vector<256x4xbf16>
    %54 = vector.extract_strided_slice %2 {offsets = [6, 0, 0], sizes = [1, 4, 128], strides = [1, 1, 1]} : vector<9x4x128xbf16> to vector<1x4x128xbf16>
    %55 = vector.shape_cast %54 : vector<1x4x128xbf16> to vector<4x128xbf16>
    %cst_11 = arith.constant dense<0.000000e+00> : vector<256x128xf32>
    %56 = tpu.matmul %53, %55, %cst_11 {dimension_numbers = #tpu.dot_dimension_numbers<[1], [0], [0], [1], [0, 0, 1, 1], [], []>} : vector<256x4xbf16>, vector<4x128xbf16>, vector<256x128xf32> -> vector<256x128xf32>
    %57 = arith.addf %49, %56 : vector<256x128xf32>
    %58 = vector.extract_strided_slice %1 {offsets = [2, 0, 1, 0], sizes = [1, 16, 16, 4], strides = [1, 1, 1, 1]} : vector<3x16x18x4xf32> to vector<1x16x16x4xf32>
    %59 = vector.shape_cast %58 : vector<1x16x16x4xf32> to vector<16x16x4xf32>
    %60 = vector.shape_cast %59 : vector<16x16x4xf32> to vector<256x4xf32>
    %61 = arith.truncf %60 : vector<256x4xf32> to vector<256x4xbf16>
    %62 = vector.extract_strided_slice %2 {offsets = [7, 0, 0], sizes = [1, 4, 128], strides = [1, 1, 1]} : vector<9x4x128xbf16> to vector<1x4x128xbf16>
    %63 = vector.shape_cast %62 : vector<1x4x128xbf16> to vector<4x128xbf16>
    %cst_12 = arith.constant dense<0.000000e+00> : vector<256x128xf32>
    %64 = tpu.matmul %61, %63, %cst_12 {dimension_numbers = #tpu.dot_dimension_numbers<[1], [0], [0], [1], [0, 0, 1, 1], [], []>} : vector<256x4xbf16>, vector<4x128xbf16>, vector<256x128xf32> -> vector<256x128xf32>
    %65 = arith.addf %57, %64 : vector<256x128xf32>
    %66 = vector.extract_strided_slice %1 {offsets = [2, 0, 2, 0], sizes = [1, 16, 16, 4], strides = [1, 1, 1, 1]} : vector<3x16x18x4xf32> to vector<1x16x16x4xf32>
    %67 = vector.shape_cast %66 : vector<1x16x16x4xf32> to vector<16x16x4xf32>
    %68 = vector.shape_cast %67 : vector<16x16x4xf32> to vector<256x4xf32>
    %69 = arith.truncf %68 : vector<256x4xf32> to vector<256x4xbf16>
    %70 = vector.extract_strided_slice %2 {offsets = [8, 0, 0], sizes = [1, 4, 128], strides = [1, 1, 1]} : vector<9x4x128xbf16> to vector<1x4x128xbf16>
    %71 = vector.shape_cast %70 : vector<1x4x128xbf16> to vector<4x128xbf16>
    %cst_13 = arith.constant dense<0.000000e+00> : vector<256x128xf32>
    %72 = tpu.matmul %69, %71, %cst_13 {dimension_numbers = #tpu.dot_dimension_numbers<[1], [0], [0], [1], [0, 0, 1, 1], [], []>} : vector<256x4xbf16>, vector<4x128xbf16>, vector<256x128xf32> -> vector<256x128xf32>
    %73 = arith.addf %65, %72 : vector<256x128xf32>
    %c0_14 = arith.constant 0 : index
    %c0_15 = arith.constant 0 : index
    %74 = vector.load %arg4[%c0_14, %c0_15] : memref<256x128xf32, #tpu.memory_space<vmem>>, vector<256x128xf32>
    tpu.vector_store %arg4[%c0_14, %c0_15], %73 {strides = array<i32>} : memref<256x128xf32, #tpu.memory_space<vmem>>, vector<256x128xf32>,
    %cst_16 = arith.constant dense<0.000000e+00> : vector<128xf32>
    %75 = vector.multi_reduction <add>, %73, %cst_16 [0] : vector<256x128xf32> to vector<128xf32>
    %76 = vector.shape_cast %75 : vector<128xf32> to vector<1x128xf32>
    %77 = arith.mulf %73, %73 : vector<256x128xf32>
    %cst_17 = arith.constant dense<0.000000e+00> : vector<128xf32>
    %78 = vector.multi_reduction <add>, %77, %cst_17 [0] : vector<256x128xf32> to vector<128xf32>
    %79 = vector.shape_cast %78 : vector<128xf32> to vector<1x128xf32>
    %80 = tpu.concatenate %76, %79 in 0 : vector<1x128xf32>, vector<1x128xf32> -> vector<2x128xf32>
    %81 = vector.shape_cast %80 : vector<2x128xf32> to vector<1x2x128xf32>
    %c0_18 = arith.constant 0 : index
    %c0_19 = arith.constant 0 : index
    %c0_20 = arith.constant 0 : index
    %82 = vector.load %arg5[%c0_18, %c0_19, %c0_20] : memref<1x2x128xf32, #tpu.memory_space<vmem>>, vector<1x2x128xf32>
    tpu.vector_store %arg5[%c0_18, %c0_19, %c0_20], %81 {strides = array<i32>} : memref<1x2x128xf32, #tpu.memory_space<vmem>>, vector<1x2x128xf32>,
    return
  }
  func.func @transform_0(%arg0: i32, %arg1: i32) -> (i32, i32, i32, i32) {
    %c0_i32 = arith.constant 0 : i32
    %c0_i32_0 = arith.constant 0 : i32
    %c0_i32_1 = arith.constant 0 : i32
    return %arg0, %arg1, %c0_i32, %c0_i32_0 : i32, i32, i32, i32
  }
  func.func @transform_1(%arg0: i32, %arg1: i32) -> (i32, i32, i32) {
    %c0_i32 = arith.constant 0 : i32
    %c0_i32_0 = arith.constant 0 : i32
    %c0_i32_1 = arith.constant 0 : i32
    %c0_i32_2 = arith.constant 0 : i32
    return %c0_i32, %c0_i32_0, %c0_i32_1 : i32, i32, i32
  }
  func.func @transform_2(%arg0: i32, %arg1: i32) -> (i32, i32) {
    %c1_i32 = arith.constant 1 : i32
    %0 = arith.muli %arg0, %c1_i32 : i32
    %1 = arith.addi %0, %arg1 : i32
    %c0_i32 = arith.constant 0 : i32
    %c0_i32_0 = arith.constant 0 : i32
    return %1, %c0_i32 : i32, i32
  }
  func.func @transform_3(%arg0: i32, %arg1: i32) -> (i32, i32, i32) {
    %c1_i32 = arith.constant 1 : i32
    %0 = arith.muli %arg0, %c1_i32 : i32
    %1 = arith.addi %0, %arg1 : i32
    %c0_i32 = arith.constant 0 : i32
    %c0_i32_0 = arith.constant 0 : i32
    %c0_i32_1 = arith.constant 0 : i32
    return %1, %c0_i32, %c0_i32_0 : i32, i32, i32
  }
}

</mosaic_0001>

<llo_original>
// kernel: tpu_custom_call.1
$region0: #{tpu_custom_call.1}
  #allocation0 [shape = 'u32[]', space=smem, size = 0x4, offset = 0x4, fixed_abs, tag = 'smem constant byte address 0x4 - core index']
  #allocation1 [shape = 'u32[144,128]{1,0:T(1,128)}', space=vmem, size = 0x12000, scoped, tag = 'internal scratch']
  %s0 = inlined_call_operand.vmem [shape: bf16[6,16,18,4], index: 0, kind: input, shape index: {}]
  %s1 = inlined_call_operand.vmem [shape: bf16[9,4,128], index: 1, kind: input, shape index: {}]
  %s2 = inlined_call_operand.hbm [shape: f32[512,128], index: 2, kind: output, shape index: {0}]
  %s3 = inlined_call_operand.hbm [shape: f32[2,2,128], index: 3, kind: output, shape index: {1}]
  %4 = xla_tuple %s2, %s3
  %s5 = sld [smem:[#allocation0]]
  $region49: #{tpu_custom_call.1} parent=0
    _
  %s7 = ssub.s32 1, %s5
  %s8 = scalar_select 0, %s7, %s5
  $region1: #{tpu_custom_call.1} parent=0
    #allocation2 [shape = 'u8[262144]{0}', space=vmem, size = 0x40000, scoped, tag = 'output window, operand 0']
    #allocation3 [shape = 's32[2]{0}', space=sflag, size = 0x8, scoped, tag = 'scoped memory for tpu_custom_call.1']
    #allocation4 [shape = 'u8[2048]{0}', space=vmem, size = 0x800, scoped, tag = 'output window, operand 1']
    #allocation5 [shape = 's32[2]{0}', space=sflag, size = 0x8, scoped, tag = 'scoped memory for tpu_custom_call.1']
    %9 = vsyncpa [#allocation3], 0
    %s10 = scalar_lea.sflag [#allocation3], 1
    %11 = vsyncpa %s10, 0
    %12 = vsyncpa [#allocation5], 0
    %s13 = scalar_lea.sflag [#allocation5], 1
    %14 = vsyncpa %s13, 0
    loop: start=0, step=1, limit=4
    $region2: #{tpu_custom_call.1} parent=1 // loop_pre_header
      _
    $region3: #{tpu_custom_call.1} parent=1 // loop_header
      %s16 = sphi 0, %s20
      %p17 = scmp.ge.s32.totalorder %s16, 4
      %s23 = sphi 0, %s35
      %s24 = sphi 0, %s31
      %s25 = sphi 0, %s23
      %s26 = sphi 0, %s24
      %s27 = sphi 0, %s25
      %s28 = sphi 0, %s26
      %s40 = sphi 0, %s42
      %s43 = sphi 0, %s40
      %s44 = sphi 0, %s43
      %s60 = sphi 0, %s44
      %s64 = sphi 0, %s64
      %s66 = sphi 0, %s64
      %s67 = sphi 0, %s66
      %s81 = sphi 0, %s67
      %s89 = sphi 0, %s91
      %s92 = sphi 0, %s89
      %s93 = sphi 0, %s92
      %s109 = sphi 0, %s93
      %s117 = sphi 0, %s119
      %s120 = sphi 0, %s117
      %s121 = sphi 0, %s120
      %s137 = sphi 0, %s121
    $region4: #{tpu_custom_call.1} parent=1 // loop_header_branch
      %19 = sbr.rel (%p17) target = $region8
    $region5: #{tpu_custom_call.1} parent=1 // loop_body
      %s21 = ssub.s32 %s16, 1
      %s22 = ssub.s32 %s16, 2
      %s29 = sadd.s32 1, %s24
      %p30 = scmp.ge.s32.totalorder %s29, 1
      %s31 = scalar_select %p30, 0, %s29
      %s32 = sadd.s32 1, %s23
      %s33 = scalar_select %p30, %s32, %s23
      %p34 = scmp.ge.s32.totalorder %s33, 2
      %s35 = scalar_select %p34, 0, %s33
      %s36 = ssub.s32 %s23, %s35
      %s37 = ssub.s32 %s24, %s31
      %s38 = sor.u32 %s36, %s37
      %p39 = scmp.eq.s32.totalorder %s38, 0
      %s41 = sadd.s32 %s40, 1
      %s42 = scalar_select %p39, %s40, %s41
      %p45 = pneg %p39
      %p46 = scmp.eq.s32.totalorder %s16, 1
      %p47 = por %p45, %p46
      %p48 = scmp.ne.s32.totalorder %s40, %s43
      %p49 = scmp.eq.s32.totalorder %s16, 0
      %p50 = por %p48, %p49
      %p51 = scmp.ne.s32.totalorder %s40, %s43
      %p52 = scmp.eq.s32.totalorder %s21, 1
      %p53 = por %p51, %p52
      %p54 = scmp.ne.s32.totalorder %s43, %s44
      %p55 = scmp.eq.s32.totalorder %s21, 0
      %p56 = por %p54, %p55
      %p57 = scmp.ne.s32.totalorder %s43, %s44
      %p58 = scmp.eq.s32.totalorder %s22, 1
      %p59 = por %p57, %p58
      %p61 = scmp.ne.s32.totalorder %s44, %s60
      %p62 = scmp.eq.s32.totalorder %s22, 0
      %p63 = por %p61, %p62
      %s65 = sadd.s32 %s64, 1
      %p68 = scmp.eq.s32.totalorder %s16, 1
      %p69 = scmp.ne.s32.totalorder %s64, %s66
      %p70 = scmp.eq.s32.totalorder %s16, 0
      %p71 = por %p69, %p70
      %p72 = scmp.ne.s32.totalorder %s64, %s66
      %p73 = scmp.eq.s32.totalorder %s21, 1
      %p74 = por %p72, %p73
      %p75 = scmp.ne.s32.totalorder %s66, %s67
      %p76 = scmp.eq.s32.totalorder %s21, 0
      %p77 = por %p75, %p76
      %p78 = scmp.ne.s32.totalorder %s66, %s67
      %p79 = scmp.eq.s32.totalorder %s22, 1
      %p80 = por %p78, %p79
      %p82 = scmp.ne.s32.totalorder %s67, %s81
      %p83 = scmp.eq.s32.totalorder %s22, 0
      %p84 = por %p82, %p83
      %s85 = sadd.s32 %s23, %s24
      %s86 = sadd.s32 %s35, %s31
      %s87 = ssub.s32 %s85, %s86
      %p88 = scmp.eq.s32.totalorder %s87, 0
      %s90 = sadd.s32 %s89, 1
      %s91 = scalar_select %p88, %s89, %s90
      %p94 = pneg %p88
      %p95 = scmp.eq.s32.totalorder %s16, 1
      %p96 = por %p94, %p95
      %p97 = scmp.ne.s32.totalorder %s89, %s92
      %p98 = scmp.eq.s32.totalorder %s16, 0
      %p99 = por %p97, %p98
      %p100 = scmp.ne.s32.totalorder %s89, %s92
      %p101 = scmp.eq.s32.totalorder %s21, 1
      %p102 = por %p100, %p101
      %p103 = scmp.ne.s32.totalorder %s92, %s93
      %p104 = scmp.eq.s32.totalorder %s21, 0
      %p105 = por %p103, %p104
      %p106 = scmp.ne.s32.totalorder %s92, %s93
      %p107 = scmp.eq.s32.totalorder %s22, 1
      %p108 = por %p106, %p107
      %p110 = scmp.ne.s32.totalorder %s93, %s109
      %p111 = scmp.eq.s32.totalorder %s22, 0
      %p112 = por %p110, %p111
      %s113 = sadd.s32 %s23, %s24
      %s114 = sadd.s32 %s35, %s31
      %s115 = ssub.s32 %s113, %s114
      %p116 = scmp.eq.s32.totalorder %s115, 0
      %s118 = sadd.s32 %s117, 1
      %s119 = scalar_select %p116, %s117, %s118
      %p122 = pneg %p116
      %p123 = scmp.eq.s32.totalorder %s16, 1
      %p124 = por %p122, %p123
      %p125 = scmp.ne.s32.totalorder %s117, %s120
      %p126 = scmp.eq.s32.totalorder %s16, 0
      %p127 = por %p125, %p126
      %p128 = scmp.ne.s32.totalorder %s117, %s120
      %p129 = scmp.eq.s32.totalorder %s21, 1
      %p130 = por %p128, %p129
      %p131 = scmp.ne.s32.totalorder %s120, %s121
      %p132 = scmp.eq.s32.totalorder %s21, 0
      %p133 = por %p131, %p132
      %p134 = scmp.ne.s32.totalorder %s120, %s121
      %p135 = scmp.eq.s32.totalorder %s22, 1
      %p136 = por %p134, %p135
      %p138 = scmp.ne.s32.totalorder %s121, %s137
      %p139 = scmp.eq.s32.totalorder %s22, 0
      %p140 = por %p138, %p139
      %p141 = scmp.le.s32.totalorder 1, %s16
      %p142 = scmp.lt.s32.totalorder %s16, 3
      %p143 = pnand %p141, %p142
      %p144 = pneg %p143
      // Predicated region
      $region9: #{tpu_custom_call.1} parent=5 // pred_check
        _
      $region10: #{tpu_custom_call.1} parent=5 // pred_check_branch
        %146 = sbr.rel (%p143) target = $region12
      $region11: #{tpu_custom_call.1} parent=5 // pred_region
        %s147 = ssub.s32 %s16, 1
        // Predicated region
        $region13: #{tpu_custom_call.1} parent=11 // pred_check
          %p148 = pneg %p77
        $region14: #{tpu_custom_call.1} parent=11 // pred_check_branch
          %150 = sbr.rel (%p148) target = $region16
        $region15: #{tpu_custom_call.1} parent=11 // pred_region
          _
        $region16: #{tpu_custom_call.1} parent=11 // pred_fallthru
          _
      $region12: #{tpu_custom_call.1} parent=5 // pred_fallthru
        _
      %p151 = scmp.lt.s32.totalorder %s16, 2
      // Predicated region
      $region17: #{tpu_custom_call.1} parent=5 // pred_check
        %p152 = pneg %p151
      $region18: #{tpu_custom_call.1} parent=5 // pred_check_branch
        %154 = sbr.rel (%p152) target = $region20
      $region19: #{tpu_custom_call.1} parent=5 // pred_region
        // Predicated region
        $region21: #{tpu_custom_call.1} parent=19 // pred_check
          %p155 = pneg %p50
        $region22: #{tpu_custom_call.1} parent=19 // pred_check_branch
          %157 = sbr.rel (%p155) target = $region24
        $region23: #{tpu_custom_call.1} parent=19 // pred_region
          %s158 = smul.u32 3, %s23
          %s159 = smul.u32 16, %s24
          %p160 = scmp.lt.s32.totalorder %s158, 5
          %s161 = scalar_select %p160, %s158, 5
          %p162 = scmp.lt.s32.totalorder %s159, 15
          %s163 = scalar_select %p162, %s159, 15
          %s164 = smul.addr %s163, 3
          %s165 = smul.addr %s161, 48
          %s166 = sadd.s32 %s164, %s165
          %s167 = smul.addr %s166, 4
          %s168 = scalar_lea.vmem %s0, %s167
          %s169 = smul.u32 3, %s23
          %s170 = smul.u32 16, %s24
        $region24: #{tpu_custom_call.1} parent=19 // pred_fallthru
          _
      $region20: #{tpu_custom_call.1} parent=5 // pred_fallthru
        _
      %p171 = scmp.le.s32.totalorder 1, %s16
      %p172 = scmp.lt.s32.totalorder %s16, 3
      %p173 = pnand %p171, %p172
      %p174 = pneg %p173
      // Predicated region
      $region25: #{tpu_custom_call.1} parent=5 // pred_check
        _
      $region26: #{tpu_custom_call.1} parent=5 // pred_check_branch
        %176 = sbr.rel (%p173) target = $region28
      $region27: #{tpu_custom_call.1} parent=5 // pred_region
        %s177 = ssub.s32 %s16, 1
        %s178 = smul.u32 3, %s25
        %s179 = smul.u32 16, %s26
        %p180 = scmp.lt.s32.totalorder %s178, 5
        %s181 = scalar_select %p180, %s178, 5
        %p182 = scmp.lt.s32.totalorder %s179, 15
        %s183 = scalar_select %p182, %s179, 15
        %s184 = smul.addr %s183, 3
        %s185 = smul.addr %s181, 48
        %s186 = sadd.s32 %s184, %s185
        %s187 = smul.addr %s186, 4
        %s188 = scalar_lea.vmem %s0, %s187
        %p189 = pneg %p56
        %p190 = pneg %p53
        %p191 = pneg %p77
        %p192 = pneg %p74
        %p193 = pneg %p105
        %p194 = pneg %p102
        %s195 = sand.u32 %s92, 1
        %s196 = scalar_lea.sflag [#allocation3], %s195
        %s197 = sand.u32 %s92, 1
        %s198 = smul.addr %s197, 256
        %s199 = scalar_lea.vmem [#allocation2], %s198
        %p200 = pneg %p133
        %p201 = pneg %p130
        %s202 = sand.u32 %s120, 1
        %s203 = scalar_lea.sflag [#allocation5], %s202
        %s204 = sand.u32 %s120, 1
        %s205 = smul.addr %s204, 2
        %s206 = scalar_lea.vmem [#allocation4], %s205
        %s207 = smul.u32 3, %s25
        %s208 = smul.u32 16, %s26
        %p209 = scmp.lt.s32.totalorder %s207, 5
        %s210 = scalar_select %p209, %s207, 5
        %p211 = scmp.lt.s32.totalorder %s208, 15
        %s212 = scalar_select %p211, %s208, 15
        %s213 = smul.addr %s212, 3
        %s214 = smul.addr %s210, 48
        %s215 = sadd.s32 %s213, %s214
        %s216 = smul.addr %s215, 4
        %s217 = scalar_lea.vmem %s0, %s216
        %s218 = smul.u32 3, %s25
        %s219 = smul.u32 16, %s26
        %s220 = sadd.s32 %s25, %s26
        %s221 = smul.u32 32, %s220
        %s222 = sadd.s32 %s25, %s26
        %v224 = vld [vmem:[%s217] sm:$0xf]
        %v225 = vld [vmem:[%s217 + $0x4] sm:$0xf]
        %v226 = vld [vmem:[%s217 + $0x8] sm:$0x1]
        %v227 = vld [vmem:[%s217 + $0xc] sm:$0xf]
        %v228 = vld [vmem:[%s217 + $0x10] sm:$0xf]
        %v229 = vld [vmem:[%s217 + $0x14] sm:$0x1]
        %v230 = vld [vmem:[%s217 + $0x18] sm:$0xf]
        %v231 = vld [vmem:[%s217 + $0x1c] sm:$0xf]
        %v232 = vld [vmem:[%s217 + $0x20] sm:$0x1]
        %v233 = vld [vmem:[%s217 + $0x24] sm:$0xf]
        %v234 = vld [vmem:[%s217 + $0x28] sm:$0xf]
        %v235 = vld [vmem:[%s217 + $0x2c] sm:$0x1]
        %v236 = vld [vmem:[%s217 + $0x30] sm:$0xf]
        %v237 = vld [vmem:[%s217 + $0x34] sm:$0xf]
        %v238 = vld [vmem:[%s217 + $0x38] sm:$0x1]
        %v239 = vld [vmem:[%s217 + $0x3c] sm:$0xf]
        %v240 = vld [vmem:[%s217 + $0x40] sm:$0xf]
        %v241 = vld [vmem:[%s217 + $0x44] sm:$0x1]
        %v242 = vld [vmem:[%s217 + $0x48] sm:$0xf]
        %v243 = vld [vmem:[%s217 + $0x4c] sm:$0xf]
        %v244 = vld [vmem:[%s217 + $0x50] sm:$0x1]
        %v245 = vld [vmem:[%s217 + $0x54] sm:$0xf]
        %v246 = vld [vmem:[%s217 + $0x58] sm:$0xf]
        %v247 = vld [vmem:[%s217 + $0x5c] sm:$0x1]
        %v248 = vld [vmem:[%s217 + $0x60] sm:$0xf]
        %v249 = vld [vmem:[%s217 + $0x64] sm:$0xf]
        %v250 = vld [vmem:[%s217 + $0x68] sm:$0x1]
        %v251 = vld [vmem:[%s217 + $0x6c] sm:$0xf]
        %v252 = vld [vmem:[%s217 + $0x70] sm:$0xf]
        %v253 = vld [vmem:[%s217 + $0x74] sm:$0x1]
        %v254 = vld [vmem:[%s217 + $0x78] sm:$0xf]
        %v255 = vld [vmem:[%s217 + $0x7c] sm:$0xf]
        %v256 = vld [vmem:[%s217 + $0x80] sm:$0x1]
        %v257 = vld [vmem:[%s217 + $0x84] sm:$0xf]
        %v258 = vld [vmem:[%s217 + $0x88] sm:$0xf]
        %v259 = vld [vmem:[%s217 + $0x8c] sm:$0x1]
        %v260 = vld [vmem:[%s217 + $0x90] sm:$0xf]
        %v261 = vld [vmem:[%s217 + $0x94] sm:$0xf]
        %v262 = vld [vmem:[%s217 + $0x98] sm:$0x1]
        %v263 = vld [vmem:[%s217 + $0x9c] sm:$0xf]
        %v264 = vld [vmem:[%s217 + $0xa0] sm:$0xf]
        %v265 = vld [vmem:[%s217 + $0xa4] sm:$0x1]
        %v266 = vld [vmem:[%s217 + $0xa8] sm:$0xf]
        %v267 = vld [vmem:[%s217 + $0xac] sm:$0xf]
        %v268 = vld [vmem:[%s217 + $0xb0] sm:$0x1]
        %v269 = vld [vmem:[%s217 + $0xb4] sm:$0xf]
        %v270 = vld [vmem:[%s217 + $0xb8] sm:$0xf]
        %v271 = vld [vmem:[%s217 + $0xbc] sm:$0x1]
        %v272 = vld [vmem:[%s217 + $0xc0] sm:$0xf]
        %v273 = vld [vmem:[%s217 + $0xc4] sm:$0xf]
        %v274 = vld [vmem:[%s217 + $0xc8] sm:$0x1]
        %v275 = vld [vmem:[%s217 + $0xcc] sm:$0xf]
        %v276 = vld [vmem:[%s217 + $0xd0] sm:$0xf]
        %v277 = vld [vmem:[%s217 + $0xd4] sm:$0x1]
        %v278 = vld [vmem:[%s217 + $0xd8] sm:$0xf]
        %v279 = vld [vmem:[%s217 + $0xdc] sm:$0xf]
        %v280 = vld [vmem:[%s217 + $0xe0] sm:$0x1]
        %v281 = vld [vmem:[%s217 + $0xe4] sm:$0xf]
        %v282 = vld [vmem:[%s217 + $0xe8] sm:$0xf]
        %v283 = vld [vmem:[%s217 + $0xec] sm:$0x1]
        %v284 = vld [vmem:[%s217 + $0xf0] sm:$0xf]
        %v285 = vld [vmem:[%s217 + $0xf4] sm:$0xf]
        %v286 = vld [vmem:[%s217 + $0xf8] sm:$0x1]
        %v287 = vld [vmem:[%s217 + $0xfc] sm:$0xf]
        %v288 = vld [vmem:[%s217 + $0x100] sm:$0xf]
        %v289 = vld [vmem:[%s217 + $0x104] sm:$0x1]
        %v290 = vld [vmem:[%s217 + $0x108] sm:$0xf]
        %v291 = vld [vmem:[%s217 + $0x10c] sm:$0xf]
        %v292 = vld [vmem:[%s217 + $0x110] sm:$0x1]
        %v293 = vld [vmem:[%s217 + $0x114] sm:$0xf]
        %v294 = vld [vmem:[%s217 + $0x118] sm:$0xf]
        %v295 = vld [vmem:[%s217 + $0x11c] sm:$0x1]
        %v296 = vld [vmem:[%s217 + $0x120] sm:$0xf]
        %v297 = vld [vmem:[%s217 + $0x124] sm:$0xf]
        %v298 = vld [vmem:[%s217 + $0x128] sm:$0x1]
        %v299 = vld [vmem:[%s217 + $0x12c] sm:$0xf]
        %v300 = vld [vmem:[%s217 + $0x130] sm:$0xf]
        %v301 = vld [vmem:[%s217 + $0x134] sm:$0x1]
        %v302 = vld [vmem:[%s217 + $0x138] sm:$0xf]
        %v303 = vld [vmem:[%s217 + $0x13c] sm:$0xf]
        %v304 = vld [vmem:[%s217 + $0x140] sm:$0x1]
        %v305 = vld [vmem:[%s217 + $0x144] sm:$0xf]
        %v306 = vld [vmem:[%s217 + $0x148] sm:$0xf]
        %v307 = vld [vmem:[%s217 + $0x14c] sm:$0x1]
        %v308 = vld [vmem:[%s217 + $0x150] sm:$0xf]
        %v309 = vld [vmem:[%s217 + $0x154] sm:$0xf]
        %v310 = vld [vmem:[%s217 + $0x158] sm:$0x1]
        %v311 = vld [vmem:[%s217 + $0x15c] sm:$0xf]
        %v312 = vld [vmem:[%s217 + $0x160] sm:$0xf]
        %v313 = vld [vmem:[%s217 + $0x164] sm:$0x1]
        %v314 = vld [vmem:[%s217 + $0x168] sm:$0xf]
        %v315 = vld [vmem:[%s217 + $0x16c] sm:$0xf]
        %v316 = vld [vmem:[%s217 + $0x170] sm:$0x1]
        %v317 = vld [vmem:[%s217 + $0x174] sm:$0xf]
        %v318 = vld [vmem:[%s217 + $0x178] sm:$0xf]
        %v319 = vld [vmem:[%s217 + $0x17c] sm:$0x1]
        %v320 = vld [vmem:[%s217 + $0x180] sm:$0xf]
        %v321 = vld [vmem:[%s217 + $0x184] sm:$0xf]
        %v322 = vld [vmem:[%s217 + $0x188] sm:$0x1]
        %v323 = vld [vmem:[%s217 + $0x18c] sm:$0xf]
        %v324 = vld [vmem:[%s217 + $0x190] sm:$0xf]
        %v325 = vld [vmem:[%s217 + $0x194] sm:$0x1]
        %v326 = vld [vmem:[%s217 + $0x198] sm:$0xf]
        %v327 = vld [vmem:[%s217 + $0x19c] sm:$0xf]
        %v328 = vld [vmem:[%s217 + $0x1a0] sm:$0x1]
        %v329 = vld [vmem:[%s217 + $0x1a4] sm:$0xf]
        %v330 = vld [vmem:[%s217 + $0x1a8] sm:$0xf]
        %v331 = vld [vmem:[%s217 + $0x1ac] sm:$0x1]
        %v332 = vld [vmem:[%s217 + $0x1b0] sm:$0xf]
        %v333 = vld [vmem:[%s217 + $0x1b4] sm:$0xf]
        %v334 = vld [vmem:[%s217 + $0x1b8] sm:$0x1]
        %v335 = vld [vmem:[%s217 + $0x1bc] sm:$0xf]
        %v336 = vld [vmem:[%s217 + $0x1c0] sm:$0xf]
        %v337 = vld [vmem:[%s217 + $0x1c4] sm:$0x1]
        %v338 = vld [vmem:[%s217 + $0x1c8] sm:$0xf]
        %v339 = vld [vmem:[%s217 + $0x1cc] sm:$0xf]
        %v340 = vld [vmem:[%s217 + $0x1d0] sm:$0x1]
        %v341 = vld [vmem:[%s217 + $0x1d4] sm:$0xf]
        %v342 = vld [vmem:[%s217 + $0x1d8] sm:$0xf]
        %v343 = vld [vmem:[%s217 + $0x1dc] sm:$0x1]
        %v344 = vld [vmem:[%s217 + $0x1e0] sm:$0xf]
        %v345 = vld [vmem:[%s217 + $0x1e4] sm:$0xf]
        %v346 = vld [vmem:[%s217 + $0x1e8] sm:$0x1]
        %v347 = vld [vmem:[%s217 + $0x1ec] sm:$0xf]
        %v348 = vld [vmem:[%s217 + $0x1f0] sm:$0xf]
        %v349 = vld [vmem:[%s217 + $0x1f4] sm:$0x1]
        %v350 = vld [vmem:[%s217 + $0x1f8] sm:$0xf]
        %v351 = vld [vmem:[%s217 + $0x1fc] sm:$0xf]
        %v352 = vld [vmem:[%s217 + $0x200] sm:$0x1]
        %v353 = vld [vmem:[%s217 + $0x204] sm:$0xf]
        %v354 = vld [vmem:[%s217 + $0x208] sm:$0xf]
        %v355 = vld [vmem:[%s217 + $0x20c] sm:$0x1]
        %v356 = vld [vmem:[%s217 + $0x210] sm:$0xf]
        %v357 = vld [vmem:[%s217 + $0x214] sm:$0xf]
        %v358 = vld [vmem:[%s217 + $0x218] sm:$0x1]
        %v359 = vld [vmem:[%s217 + $0x21c] sm:$0xf]
        %v360 = vld [vmem:[%s217 + $0x220] sm:$0xf]
        %v361 = vld [vmem:[%s217 + $0x224] sm:$0x1]
        %v362 = vld [vmem:[%s217 + $0x228] sm:$0xf]
        %v363 = vld [vmem:[%s217 + $0x22c] sm:$0xf]
        %v364 = vld [vmem:[%s217 + $0x230] sm:$0x1]
        %v365 = vld [vmem:[%s217 + $0x234] sm:$0xf]
        %v366 = vld [vmem:[%s217 + $0x238] sm:$0xf]
        %v367 = vld [vmem:[%s217 + $0x23c] sm:$0x1]
        %v368 = vunpack.c.l.bf16 %v224
        %v369 = vunpack.c.l.bf16 %v225
        %v370 = vunpack.c.l.bf16 %v226
        %v371 = vunpack.c.l.bf16 %v227
        %v372 = vunpack.c.l.bf16 %v228
        %v373 = vunpack.c.l.bf16 %v229
        %v374 = vunpack.c.l.bf16 %v230
        %v375 = vunpack.c.l.bf16 %v231
        %v376 = vunpack.c.l.bf16 %v232
        %v377 = vunpack.c.l.bf16 %v233
        %v378 = vunpack.c.l.bf16 %v234
        %v379 = vunpack.c.l.bf16 %v235
        %v380 = vunpack.c.l.bf16 %v236
        %v381 = vunpack.c.l.bf16 %v237
        %v382 = vunpack.c.l.bf16 %v238
        %v383 = vunpack.c.l.bf16 %v239
        %v384 = vunpack.c.l.bf16 %v240
        %v385 = vunpack.c.l.bf16 %v241
        %v386 = vunpack.c.l.bf16 %v242
        %v387 = vunpack.c.l.bf16 %v243
        %v388 = vunpack.c.l.bf16 %v244
        %v389 = vunpack.c.l.bf16 %v245
        %v390 = vunpack.c.l.bf16 %v246
        %v391 = vunpack.c.l.bf16 %v247
        %v392 = vunpack.c.l.bf16 %v248
        %v393 = vunpack.c.l.bf16 %v249
        %v394 = vunpack.c.l.bf16 %v250
        %v395 = vunpack.c.l.bf16 %v251
        %v396 = vunpack.c.l.bf16 %v252
        %v397 = vunpack.c.l.bf16 %v253
        %v398 = vunpack.c.l.bf16 %v254
        %v399 = vunpack.c.l.bf16 %v255
        %v400 = vunpack.c.l.bf16 %v256
        %v401 = vunpack.c.l.bf16 %v257
        %v402 = vunpack.c.l.bf16 %v258
        %v403 = vunpack.c.l.bf16 %v259
        %v404 = vunpack.c.l.bf16 %v260
        %v405 = vunpack.c.l.bf16 %v261
        %v406 = vunpack.c.l.bf16 %v262
        %v407 = vunpack.c.l.bf16 %v263
        %v408 = vunpack.c.l.bf16 %v264
        %v409 = vunpack.c.l.bf16 %v265
        %v410 = vunpack.c.l.bf16 %v266
        %v411 = vunpack.c.l.bf16 %v267
        %v412 = vunpack.c.l.bf16 %v268
        %v413 = vunpack.c.l.bf16 %v269
        %v414 = vunpack.c.l.bf16 %v270
        %v415 = vunpack.c.l.bf16 %v271
        %v416 = vunpack.c.l.bf16 %v272
        %v417 = vunpack.c.l.bf16 %v273
        %v418 = vunpack.c.l.bf16 %v274
        %v419 = vunpack.c.l.bf16 %v275
        %v420 = vunpack.c.l.bf16 %v276
        %v421 = vunpack.c.l.bf16 %v277
        %v422 = vunpack.c.l.bf16 %v278
        %v423 = vunpack.c.l.bf16 %v279
        %v424 = vunpack.c.l.bf16 %v280
        %v425 = vunpack.c.l.bf16 %v281
        %v426 = vunpack.c.l.bf16 %v282
        %v427 = vunpack.c.l.bf16 %v283
        %v428 = vunpack.c.l.bf16 %v284
        %v429 = vunpack.c.l.bf16 %v285
        %v430 = vunpack.c.l.bf16 %v286
        %v431 = vunpack.c.l.bf16 %v287
        %v432 = vunpack.c.l.bf16 %v288
        %v433 = vunpack.c.l.bf16 %v289
        %v434 = vunpack.c.l.bf16 %v290
        %v435 = vunpack.c.l.bf16 %v291
        %v436 = vunpack.c.l.bf16 %v292
        %v437 = vunpack.c.l.bf16 %v293
        %v438 = vunpack.c.l.bf16 %v294
        %v439 = vunpack.c.l.bf16 %v295
        %v440 = vunpack.c.l.bf16 %v296
        %v441 = vunpack.c.l.bf16 %v297
        %v442 = vunpack.c.l.bf16 %v298
        %v443 = vunpack.c.l.bf16 %v299
        %v444 = vunpack.c.l.bf16 %v300
        %v445 = vunpack.c.l.bf16 %v301
        %v446 = vunpack.c.l.bf16 %v302
        %v447 = vunpack.c.l.bf16 %v303
        %v448 = vunpack.c.l.bf16 %v304
        %v449 = vunpack.c.l.bf16 %v305
        %v450 = vunpack.c.l.bf16 %v306
        %v451 = vunpack.c.l.bf16 %v307
        %v452 = vunpack.c.l.bf16 %v308
        %v453 = vunpack.c.l.bf16 %v309
        %v454 = vunpack.c.l.bf16 %v310
        %v455 = vunpack.c.l.bf16 %v311
        %v456 = vunpack.c.l.bf16 %v312
        %v457 = vunpack.c.l.bf16 %v313
        %v458 = vunpack.c.l.bf16 %v314
        %v459 = vunpack.c.l.bf16 %v315
        %v460 = vunpack.c.l.bf16 %v316
        %v461 = vunpack.c.l.bf16 %v317
        %v462 = vunpack.c.l.bf16 %v318
        %v463 = vunpack.c.l.bf16 %v319
        %v464 = vunpack.c.l.bf16 %v320
        %v465 = vunpack.c.l.bf16 %v321
        %v466 = vunpack.c.l.bf16 %v322
        %v467 = vunpack.c.l.bf16 %v323
        %v468 = vunpack.c.l.bf16 %v324
        %v469 = vunpack.c.l.bf16 %v325
        %v470 = vunpack.c.l.bf16 %v326
        %v471 = vunpack.c.l.bf16 %v327
        %v472 = vunpack.c.l.bf16 %v328
        %v473 = vunpack.c.l.bf16 %v329
        %v474 = vunpack.c.l.bf16 %v330
        %v475 = vunpack.c.l.bf16 %v331
        %v476 = vunpack.c.l.bf16 %v332
        %v477 = vunpack.c.l.bf16 %v333
        %v478 = vunpack.c.l.bf16 %v334
        %v479 = vunpack.c.l.bf16 %v335
        %v480 = vunpack.c.l.bf16 %v336
        %v481 = vunpack.c.l.bf16 %v337
        %v482 = vunpack.c.l.bf16 %v338
        %v483 = vunpack.c.l.bf16 %v339
        %v484 = vunpack.c.l.bf16 %v340
        %v485 = vunpack.c.l.bf16 %v341
        %v486 = vunpack.c.l.bf16 %v342
        %v487 = vunpack.c.l.bf16 %v343
        %v488 = vunpack.c.l.bf16 %v344
        %v489 = vunpack.c.l.bf16 %v345
        %v490 = vunpack.c.l.bf16 %v346
        %v491 = vunpack.c.l.bf16 %v347
        %v492 = vunpack.c.l.bf16 %v348
        %v493 = vunpack.c.l.bf16 %v349
        %v494 = vunpack.c.l.bf16 %v350
        %v495 = vunpack.c.l.bf16 %v351
        %v496 = vunpack.c.l.bf16 %v352
        %v497 = vunpack.c.l.bf16 %v353
        %v498 = vunpack.c.l.bf16 %v354
        %v499 = vunpack.c.l.bf16 %v355
        %v500 = vunpack.c.l.bf16 %v356
        %v501 = vunpack.c.l.bf16 %v357
        %v502 = vunpack.c.l.bf16 %v358
        %v503 = vunpack.c.l.bf16 %v359
        %v504 = vunpack.c.l.bf16 %v360
        %v505 = vunpack.c.l.bf16 %v361
        %v506 = vunpack.c.l.bf16 %v362
        %v507 = vunpack.c.l.bf16 %v363
        %v508 = vunpack.c.l.bf16 %v364
        %v509 = vunpack.c.l.bf16 %v365
        %v510 = vunpack.c.l.bf16 %v366
        %v511 = vunpack.c.l.bf16 %v367
        %v512 = vld [vmem:[%s1] sm:$0x3]
        %v513 = vld [vmem:[%s1 + $0x2] sm:$0x3]
        %v514 = vld [vmem:[%s1 + $0x4] sm:$0x3]
        %v515 = vld [vmem:[%s1 + $0x6] sm:$0x3]
        %v516 = vld [vmem:[%s1 + $0x8] sm:$0x3]
        %v517 = vld [vmem:[%s1 + $0xa] sm:$0x3]
        %v518 = vld [vmem:[%s1 + $0xc] sm:$0x3]
        %v519 = vld [vmem:[%s1 + $0xe] sm:$0x3]
        %v520 = vld [vmem:[%s1 + $0x10] sm:$0x3]
        %v521 = vpack.c.bf16 %v369, %v368
        %v522 = vpack.c.bf16 %v372, %v371
        %v523 = vpack.c.bf16 %v375, %v374
        %v524 = vpack.c.bf16 %v378, %v377
        %v525 = vpack.c.bf16 %v381, %v380
        %v526 = vpack.c.bf16 %v384, %v383
        %v527 = vpack.c.bf16 %v387, %v386
        %v528 = vpack.c.bf16 %v390, %v389
        %v529 = vpack.c.bf16 %v393, %v392
        %v530 = vpack.c.bf16 %v396, %v395
        %v531 = vpack.c.bf16 %v399, %v398
        %v532 = vpack.c.bf16 %v402, %v401
        %v533 = vpack.c.bf16 %v405, %v404
        %v534 = vpack.c.bf16 %v408, %v407
        %v535 = vpack.c.bf16 %v411, %v410
        %v536 = vpack.c.bf16 %v414, %v413
        %vm585 = vcmask 1046528
        %v586 = vrot.slane %v368, 1
        %v587 = vrot.slane %v369, 1
        %v588 = vsel %vm585, %v586, %v587
        %v589 = vrot.slane %v370, 1
        %v590 = vsel %vm585, %v587, %v589
        %v591 = vrot.slane %v371, 1
        %v592 = vrot.slane %v372, 1
        %v593 = vsel %vm585, %v591, %v592
        %v594 = vrot.slane %v373, 1
        %v595 = vsel %vm585, %v592, %v594
        %v596 = vrot.slane %v374, 1
        %v597 = vrot.slane %v375, 1
        %v598 = vsel %vm585, %v596, %v597
        %v599 = vrot.slane %v376, 1
        %v600 = vsel %vm585, %v597, %v599
        %v601 = vrot.slane %v377, 1
        %v602 = vrot.slane %v378, 1
        %v603 = vsel %vm585, %v601, %v602
        %v604 = vrot.slane %v379, 1
        %v605 = vsel %vm585, %v602, %v604
        %v606 = vrot.slane %v380, 1
        %v607 = vrot.slane %v381, 1
        %v608 = vsel %vm585, %v606, %v607
        %v609 = vrot.slane %v382, 1
        %v610 = vsel %vm585, %v607, %v609
        %v611 = vrot.slane %v383, 1
        %v612 = vrot.slane %v384, 1
        %v613 = vsel %vm585, %v611, %v612
        %v614 = vrot.slane %v385, 1
        %v615 = vsel %vm585, %v612, %v614
        %v616 = vrot.slane %v386, 1
        %v617 = vrot.slane %v387, 1
        %v618 = vsel %vm585, %v616, %v617
        %v619 = vrot.slane %v388, 1
        %v620 = vsel %vm585, %v617, %v619
        %v621 = vrot.slane %v389, 1
        %v622 = vrot.slane %v390, 1
        %v623 = vsel %vm585, %v621, %v622
        %v624 = vrot.slane %v391, 1
        %v625 = vsel %vm585, %v622, %v624
        %v626 = vrot.slane %v392, 1
        %v627 = vrot.slane %v393, 1
        %v628 = vsel %vm585, %v626, %v627
        %v629 = vrot.slane %v394, 1
        %v630 = vsel %vm585, %v627, %v629
        %v631 = vrot.slane %v395, 1
        %v632 = vrot.slane %v396, 1
        %v633 = vsel %vm585, %v631, %v632
        %v634 = vrot.slane %v397, 1
        %v635 = vsel %vm585, %v632, %v634
        %v636 = vrot.slane %v398, 1
        %v637 = vrot.slane %v399, 1
        %v638 = vsel %vm585, %v636, %v637
        %v639 = vrot.slane %v400, 1
        %v640 = vsel %vm585, %v637, %v639
        %v641 = vrot.slane %v401, 1
        %v642 = vrot.slane %v402, 1
        %v643 = vsel %vm585, %v641, %v642
        %v644 = vrot.slane %v403, 1
        %v645 = vsel %vm585, %v642, %v644
        %v646 = vrot.slane %v404, 1
        %v647 = vrot.slane %v405, 1
        %v648 = vsel %vm585, %v646, %v647
        %v649 = vrot.slane %v406, 1
        %v650 = vsel %vm585, %v647, %v649
        %v651 = vrot.slane %v407, 1
        %v652 = vrot.slane %v408, 1
        %v653 = vsel %vm585, %v651, %v652
        %v654 = vrot.slane %v409, 1
        %v655 = vsel %vm585, %v652, %v654
        %v656 = vrot.slane %v410, 1
        %v657 = vrot.slane %v411, 1
        %v658 = vsel %vm585, %v656, %v657
        %v659 = vrot.slane %v412, 1
        %v660 = vsel %vm585, %v657, %v659
        %v661 = vrot.slane %v413, 1
        %v662 = vrot.slane %v414, 1
        %v663 = vsel %vm585, %v661, %v662
        %v664 = vrot.slane %v415, 1
        %v665 = vsel %vm585, %v662, %v664
        %v698 = vpack.c.bf16 %v590, %v588
        %v699 = vpack.c.bf16 %v595, %v593
        %v700 = vpack.c.bf16 %v600, %v598
        %v701 = vpack.c.bf16 %v605, %v603
        %v702 = vpack.c.bf16 %v610, %v608
        %v703 = vpack.c.bf16 %v615, %v613
        %v704 = vpack.c.bf16 %v620, %v618
        %v705 = vpack.c.bf16 %v625, %v623
        %v706 = vpack.c.bf16 %v630, %v628
        %v707 = vpack.c.bf16 %v635, %v633
        %v708 = vpack.c.bf16 %v640, %v638
        %v709 = vpack.c.bf16 %v645, %v643
        %v710 = vpack.c.bf16 %v650, %v648
        %v711 = vpack.c.bf16 %v655, %v653
        %v712 = vpack.c.bf16 %v660, %v658
        %v713 = vpack.c.bf16 %v665, %v663
        %vm714 = vcmask 31744
        %v716 = vsel %vm714, %v698, 0
        %v719 = vsel %vm714, %v699, 0
        %v722 = vsel %vm714, %v700, 0
        %v725 = vsel %vm714, %v701, 0
        %v728 = vsel %vm714, %v702, 0
        %v731 = vsel %vm714, %v703, 0
        %v734 = vsel %vm714, %v704, 0
        %v737 = vsel %vm714, %v705, 0
        %v740 = vsel %vm714, %v706, 0
        %v743 = vsel %vm714, %v707, 0
        %v746 = vsel %vm714, %v708, 0
        %v749 = vsel %vm714, %v709, 0
        %v752 = vsel %vm714, %v710, 0
        %v755 = vsel %vm714, %v711, 0
        %v758 = vsel %vm714, %v712, 0
        %v761 = vsel %vm714, %v713, 0
        %vm763 = vcmask 1041408
        %v765 = vsel %vm763, %v513, 0
        %767 = vmatprep.subr.bf16.mxu0 0
        %768 = vmatpush1.bf16.msra.mxu0 %v765
        %769 = vmatprep.subr.bf16.mxu0 0
        %770 = vmatpush1.bf16.msra.mxu0 0
        %771 = vmatprep.subr.bf16.mxu0 0
        %772 = vmatpush1.bf16.msra.mxu0 0
        %773 = vmatprep.subr.bf16.mxu0 0
        %774 = vmatpush1.bf16.msra.mxu0 0
        %775 = vmatprep.subr.bf16.mxu0 0
        %776 = vmatpush1.bf16.msra.mxu0 0
        %777 = vmatprep.subr.bf16.mxu0 0
        %778 = vmatpush1.bf16.msra.mxu0 0
        %779 = vmatprep.subr.bf16.mxu0 0
        %780 = vmatpush1.bf16.msra.mxu0 0
        %781 = vmatprep.subr.bf16.mxu0 0
        %782 = vmatpush1.bf16.msra.mxu0 0
        %783 = vmatprep.subr.bf16.mxu0 0
        %784 = vmatpush1.bf16.msra.mxu0 0
        %785 = vmatprep.subr.bf16.mxu0 0
        %786 = vmatpush1.bf16.msra.mxu0 0
        %787 = vmatprep.subr.bf16.mxu0 0
        %788 = vmatpush1.bf16.msra.mxu0 0
        %789 = vmatprep.subr.bf16.mxu0 0
        %790 = vmatpush1.bf16.msra.mxu0 0
        %791 = vmatprep.subr.bf16.mxu0 0
        %792 = vmatpush1.bf16.msra.mxu0 0
        %793 = vmatprep.subr.bf16.mxu0 0
        %794 = vmatpush1.bf16.msra.mxu0 0
        %795 = vmatprep.subr.bf16.mxu0 0
        %796 = vmatpush1.bf16.msra.mxu0 0
        %797 = vmatprep.subr.bf16.mxu0 0
        %798 = vmatpush1.bf16.msra.mxu0 0
        %799 = vmatprep.mubr.bf16.mxu0 0
        %800 = vmatmul.mubr.bf16.gmra.mrb[0].mxu0 %v716
        %v801 = vpop.f32.mrb[0].mxu0
        %v802 = vadd.f32 0.0, %v801
        %v803 = vpop.f32.mrb[0].mxu0
        %v804 = vpop.f32.mrb[0].mxu0
        %v805 = vadd.f32 0.0, %v804
        %v806 = vpop.f32.mrb[0].mxu0
        %807 = vmatprep.mubr.bf16.mxu0 0
        %808 = vmatmul.mubr.bf16.gmra.mrb[0].mxu0 %v719
        %v809 = vpop.f32.mrb[0].mxu0
        %v810 = vadd.f32 0.0, %v809
        %v811 = vpop.f32.mrb[0].mxu0
        %v812 = vpop.f32.mrb[0].mxu0
        %v813 = vadd.f32 0.0, %v812
        %v814 = vpop.f32.mrb[0].mxu0
        %815 = vmatprep.mubr.bf16.mxu0 0
        %816 = vmatmul.mubr.bf16.gmra.mrb[0].mxu0 %v722
        %v817 = vpop.f32.mrb[0].mxu0
        %v818 = vadd.f32 0.0, %v817
        %v819 = vpop.f32.mrb[0].mxu0
        %v820 = vpop.f32.mrb[0].mxu0
        %v821 = vadd.f32 0.0, %v820
        %v822 = vpop.f32.mrb[0].mxu0
        %823 = vmatprep.mubr.bf16.mxu0 0
        %824 = vmatmul.mubr.bf16.gmra.mrb[0].mxu0 %v725
        %v825 = vpop.f32.mrb[0].mxu0
        %v826 = vadd.f32 0.0, %v825
        %v827 = vpop.f32.mrb[0].mxu0
        %v828 = vpop.f32.mrb[0].mxu0
        %v829 = vadd.f32 0.0, %v828
        %v830 = vpop.f32.mrb[0].mxu0
        %831 = vmatprep.mubr.bf16.mxu0 0
        %832 = vmatmul.mubr.bf16.gmra.mrb[0].mxu0 %v728
        %v833 = vpop.f32.mrb[0].mxu0
        %v834 = vadd.f32 0.0, %v833
        %v835 = vpop.f32.mrb[0].mxu0
        %v836 = vpop.f32.mrb[0].mxu0
        %v837 = vadd.f32 0.0, %v836
        %v838 = vpop.f32.mrb[0].mxu0
        %839 = vmatprep.mubr.bf16.mxu0 0
        %840 = vmatmul.mubr.bf16.gmra.mrb[0].mxu0 %v731
        %v841 = vpop.f32.mrb[0].mxu0
        %v842 = vadd.f32 0.0, %v841
        %v843 = vpop.f32.mrb[0].mxu0
        %v844 = vpop.f32.mrb[0].mxu0
        %v845 = vadd.f32 0.0, %v844
        %v846 = vpop.f32.mrb[0].mxu0
        %847 = vmatprep.mubr.bf16.mxu0 0
        %848 = vmatmul.mubr.bf16.gmra.mrb[0].mxu0 %v734
        %v849 = vpop.f32.mrb[0].mxu0
        %v850 = vadd.f32 0.0, %v849
        %v851 = vpop.f32.mrb[0].mxu0
        %v852 = vpop.f32.mrb[0].mxu0
        %v853 = vadd.f32 0.0, %v852
        %v854 = vpop.f32.mrb[0].mxu0
        %855 = vmatprep.mubr.bf16.mxu0 0
        %856 = vmatmul.mubr.bf16.gmra.mrb[0].mxu0 %v737
        %v857 = vpop.f32.mrb[0].mxu0
        %v858 = vadd.f32 0.0, %v857
        %v859 = vpop.f32.mrb[0].mxu0
        %v860 = vpop.f32.mrb[0].mxu0
        %v861 = vadd.f32 0.0, %v860
        %v862 = vpop.f32.mrb[0].mxu0
        %863 = vmatprep.mubr.bf16.mxu0 0
        %864 = vmatmul.mubr.bf16.gmra.mrb[0].mxu0 %v740
        %v865 = vpop.f32.mrb[0].mxu0
        %v866 = vadd.f32 0.0, %v865
        %v867 = vpop.f32.mrb[0].mxu0
        %v868 = vpop.f32.mrb[0].mxu0
        %v869 = vadd.f32 0.0, %v868
        %v870 = vpop.f32.mrb[0].mxu0
        %871 = vmatprep.mubr.bf16.mxu0 0
        %872 = vmatmul.mubr.bf16.gmra.mrb[0].mxu0 %v743
        %v873 = vpop.f32.mrb[0].mxu0
        %v874 = vadd.f32 0.0, %v873
        %v875 = vpop.f32.mrb[0].mxu0
        %v876 = vpop.f32.mrb[0].mxu0
        %v877 = vadd.f32 0.0, %v876
        %v878 = vpop.f32.mrb[0].mxu0
        %879 = vmatprep.mubr.bf16.mxu0 0
        %880 = vmatmul.mubr.bf16.gmra.mrb[0].mxu0 %v746
        %v881 = vpop.f32.mrb[0].mxu0
        %v882 = vadd.f32 0.0, %v881
        %v883 = vpop.f32.mrb[0].mxu0
        %v884 = vpop.f32.mrb[0].mxu0
        %v885 = vadd.f32 0.0, %v884
        %v886 = vpop.f32.mrb[0].mxu0
        %887 = vmatprep.mubr.bf16.mxu0 0
        %888 = vmatmul.mubr.bf16.gmra.mrb[0].mxu0 %v749
        %v889 = vpop.f32.mrb[0].mxu0
        %v890 = vadd.f32 0.0, %v889
        %v891 = vpop.f32.mrb[0].mxu0
        %v892 = vpop.f32.mrb[0].mxu0
        %v893 = vadd.f32 0.0, %v892
        %v894 = vpop.f32.mrb[0].mxu0
        %895 = vmatprep.mubr.bf16.mxu0 0
        %896 = vmatmul.mubr.bf16.gmra.mrb[0].mxu0 %v752
        %v897 = vpop.f32.mrb[0].mxu0
        %v898 = vadd.f32 0.0, %v897
        %v899 = vpop.f32.mrb[0].mxu0
        %v900 = vpop.f32.mrb[0].mxu0
        %v901 = vadd.f32 0.0, %v900
        %v902 = vpop.f32.mrb[0].mxu0
        %903 = vmatprep.mubr.bf16.mxu0 0
        %904 = vmatmul.mubr.bf16.gmra.mrb[0].mxu0 %v755
        %v905 = vpop.f32.mrb[0].mxu0
        %v906 = vadd.f32 0.0, %v905
        %v907 = vpop.f32.mrb[0].mxu0
        %v908 = vpop.f32.mrb[0].mxu0
        %v909 = vadd.f32 0.0, %v908
        %v910 = vpop.f32.mrb[0].mxu0
        %911 = vmatprep.mubr.bf16.mxu0 0
        %912 = vmatmul.mubr.bf16.gmra.mrb[0].mxu0 %v758
        %v913 = vpop.f32.mrb[0].mxu0
        %v914 = vadd.f32 0.0, %v913
        %v915 = vpop.f32.mrb[0].mxu0
        %v916 = vpop.f32.mrb[0].mxu0
        %v917 = vadd.f32 0.0, %v916
        %v918 = vpop.f32.mrb[0].mxu0
        %919 = vmatprep.mubr.bf16.mxu0 0
        %920 = vmatmul.mubr.bf16.gmra.mrb[0].mxu0 %v761
        %v921 = vpop.f32.mrb[0].mxu0
        %v922 = vadd.f32 0.0, %v921
        %v923 = vpop.f32.mrb[0].mxu0
        %v924 = vpop.f32.mrb[0].mxu0
        %v925 = vadd.f32 0.0, %v924
        %v926 = vpop.f32.mrb[0].mxu0
        %927 = vdwg.mxu0
        %v929 = vsel %vm714, %v521, 0
        %v932 = vsel %vm714, %v522, 0
        %v935 = vsel %vm714, %v523, 0
        %v938 = vsel %vm714, %v524, 0
        %v941 = vsel %vm714, %v525, 0
        %v944 = vsel %vm714, %v526, 0
        %v947 = vsel %vm714, %v527, 0
        %v950 = vsel %vm714, %v528, 0
        %v953 = vsel %vm714, %v529, 0
        %v956 = vsel %vm714, %v530, 0
        %v959 = vsel %vm714, %v531, 0
        %v962 = vsel %vm714, %v532, 0
        %v965 = vsel %vm714, %v533, 0
        %v968 = vsel %vm714, %v534, 0
        %v971 = vsel %vm714, %v535, 0
        %v974 = vsel %vm714, %v536, 0
        %v977 = vsel %vm763, %v512, 0
        %979 = vmatprep.subr.bf16.mxu0 0
        %980 = vmatpush1.bf16.msra.mxu0 %v977
        %981 = vmatprep.subr.bf16.mxu0 0
        %982 = vmatpush1.bf16.msra.mxu0 0
        %983 = vmatprep.subr.bf16.mxu0 0
        %984 = vmatpush1.bf16.msra.mxu0 0
        %985 = vmatprep.subr.bf16.mxu0 0
        %986 = vmatpush1.bf16.msra.mxu0 0
        %987 = vmatprep.subr.bf16.mxu0 0
        %988 = vmatpush1.bf16.msra.mxu0 0
        %989 = vmatprep.subr.bf16.mxu0 0
        %990 = vmatpush1.bf16.msra.mxu0 0
        %991 = vmatprep.subr.bf16.mxu0 0
        %992 = vmatpush1.bf16.msra.mxu0 0
        %993 = vmatprep.subr.bf16.mxu0 0
        %994 = vmatpush1.bf16.msra.mxu0 0
        %995 = vmatprep.subr.bf16.mxu0 0
        %996 = vmatpush1.bf16.msra.mxu0 0
        %997 = vmatprep.subr.bf16.mxu0 0
        %998 = vmatpush1.bf16.msra.mxu0 0
        %999 = vmatprep.subr.bf16.mxu0 0
        %1000 = vmatpush1.bf16.msra.mxu0 0
        %1001 = vmatprep.subr.bf16.mxu0 0
        %1002 = vmatpush1.bf16.msra.mxu0 0
        %1003 = vmatprep.subr.bf16.mxu0 0
        %1004 = vmatpush1.bf16.msra.mxu0 0
        %1005 = vmatprep.subr.bf16.mxu0 0
        %1006 = vmatpush1.bf16.msra.mxu0 0
        %1007 = vmatprep.subr.bf16.mxu0 0
        %1008 = vmatpush1.bf16.msra.mxu0 0
        %1009 = vmatprep.subr.bf16.mxu0 0
        %1010 = vmatpush1.bf16.msra.mxu0 0
        %1011 = vmatprep.mubr.bf16.mxu0 0
        %1012 = vmatmul.mubr.bf16.gmra.mrb[0].mxu0 %v929
        %v1013 = vpop.f32.mrb[0].mxu0
        %v1014 = vadd.f32 %v802, %v1013
        %v1015 = vpop.f32.mrb[0].mxu0
        %v1016 = vpop.f32.mrb[0].mxu0
        %v1017 = vadd.f32 %v805, %v1016
        %v1018 = vpop.f32.mrb[0].mxu0
        %1019 = vmatprep.mubr.bf16.mxu0 0
        %1020 = vmatmul.mubr.bf16.gmra.mrb[0].mxu0 %v932
        %v1021 = vpop.f32.mrb[0].mxu0
        %v1022 = vadd.f32 %v810, %v1021
        %v1023 = vpop.f32.mrb[0].mxu0
        %v1024 = vpop.f32.mrb[0].mxu0
        %v1025 = vadd.f32 %v813, %v1024
        %v1026 = vpop.f32.mrb[0].mxu0
        %1027 = vmatprep.mubr.bf16.mxu0 0
        %1028 = vmatmul.mubr.bf16.gmra.mrb[0].mxu0 %v935
        %v1029 = vpop.f32.mrb[0].mxu0
        %v1030 = vadd.f32 %v818, %v1029
        %v1031 = vpop.f32.mrb[0].mxu0
        %v1032 = vpop.f32.mrb[0].mxu0
        %v1033 = vadd.f32 %v821, %v1032
        %v1034 = vpop.f32.mrb[0].mxu0
        %1035 = vmatprep.mubr.bf16.mxu0 0
        %1036 = vmatmul.mubr.bf16.gmra.mrb[0].mxu0 %v938
        %v1037 = vpop.f32.mrb[0].mxu0
        %v1038 = vadd.f32 %v826, %v1037
        %v1039 = vpop.f32.mrb[0].mxu0
        %v1040 = vpop.f32.mrb[0].mxu0
        %v1041 = vadd.f32 %v829, %v1040
        %v1042 = vpop.f32.mrb[0].mxu0
        %1043 = vmatprep.mubr.bf16.mxu0 0
        %1044 = vmatmul.mubr.bf16.gmra.mrb[0].mxu0 %v941
        %v1045 = vpop.f32.mrb[0].mxu0
        %v1046 = vadd.f32 %v834, %v1045
        %v1047 = vpop.f32.mrb[0].mxu0
        %v1048 = vpop.f32.mrb[0].mxu0
        %v1049 = vadd.f32 %v837, %v1048
        %v1050 = vpop.f32.mrb[0].mxu0
        %1051 = vmatprep.mubr.bf16.mxu0 0
        %1052 = vmatmul.mubr.bf16.gmra.mrb[0].mxu0 %v944
        %v1053 = vpop.f32.mrb[0].mxu0
        %v1054 = vadd.f32 %v842, %v1053
        %v1055 = vpop.f32.mrb[0].mxu0
        %v1056 = vpop.f32.mrb[0].mxu0
        %v1057 = vadd.f32 %v845, %v1056
        %v1058 = vpop.f32.mrb[0].mxu0
        %1059 = vmatprep.mubr.bf16.mxu0 0
        %1060 = vmatmul.mubr.bf16.gmra.mrb[0].mxu0 %v947
        %v1061 = vpop.f32.mrb[0].mxu0
        %v1062 = vadd.f32 %v850, %v1061
        %v1063 = vpop.f32.mrb[0].mxu0
        %v1064 = vpop.f32.mrb[0].mxu0
        %v1065 = vadd.f32 %v853, %v1064
        %v1066 = vpop.f32.mrb[0].mxu0
        %1067 = vmatprep.mubr.bf16.mxu0 0
        %1068 = vmatmul.mubr.bf16.gmra.mrb[0].mxu0 %v950
        %v1069 = vpop.f32.mrb[0].mxu0
        %v1070 = vadd.f32 %v858, %v1069
        %v1071 = vpop.f32.mrb[0].mxu0
        %v1072 = vpop.f32.mrb[0].mxu0
        %v1073 = vadd.f32 %v861, %v1072
        %v1074 = vpop.f32.mrb[0].mxu0
        %1075 = vmatprep.mubr.bf16.mxu0 0
        %1076 = vmatmul.mubr.bf16.gmra.mrb[0].mxu0 %v953
        %v1077 = vpop.f32.mrb[0].mxu0
        %v1078 = vadd.f32 %v866, %v1077
        %v1079 = vpop.f32.mrb[0].mxu0
        %v1080 = vpop.f32.mrb[0].mxu0
        %v1081 = vadd.f32 %v869, %v1080
        %v1082 = vpop.f32.mrb[0].mxu0
        %1083 = vmatprep.mubr.bf16.mxu0 0
        %1084 = vmatmul.mubr.bf16.gmra.mrb[0].mxu0 %v956
        %v1085 = vpop.f32.mrb[0].mxu0
        %v1086 = vadd.f32 %v874, %v1085
        %v1087 = vpop.f32.mrb[0].mxu0
        %v1088 = vpop.f32.mrb[0].mxu0
        %v1089 = vadd.f32 %v877, %v1088
        %v1090 = vpop.f32.mrb[0].mxu0
        %1091 = vmatprep.mubr.bf16.mxu0 0
        %1092 = vmatmul.mubr.bf16.gmra.mrb[0].mxu0 %v959
        %v1093 = vpop.f32.mrb[0].mxu0
        %v1094 = vadd.f32 %v882, %v1093
        %v1095 = vpop.f32.mrb[0].mxu0
        %v1096 = vpop.f32.mrb[0].mxu0
        %v1097 = vadd.f32 %v885, %v1096
        %v1098 = vpop.f32.mrb[0].mxu0
        %1099 = vmatprep.mubr.bf16.mxu0 0
        %1100 = vmatmul.mubr.bf16.gmra.mrb[0].mxu0 %v962
        %v1101 = vpop.f32.mrb[0].mxu0
        %v1102 = vadd.f32 %v890, %v1101
        %v1103 = vpop.f32.mrb[0].mxu0
        %v1104 = vpop.f32.mrb[0].mxu0
        %v1105 = vadd.f32 %v893, %v1104
        %v1106 = vpop.f32.mrb[0].mxu0
        %1107 = vmatprep.mubr.bf16.mxu0 0
        %1108 = vmatmul.mubr.bf16.gmra.mrb[0].mxu0 %v965
        %v1109 = vpop.f32.mrb[0].mxu0
        %v1110 = vadd.f32 %v898, %v1109
        %v1111 = vpop.f32.mrb[0].mxu0
        %v1112 = vpop.f32.mrb[0].mxu0
        %v1113 = vadd.f32 %v901, %v1112
        %v1114 = vpop.f32.mrb[0].mxu0
        %1115 = vmatprep.mubr.bf16.mxu0 0
        %1116 = vmatmul.mubr.bf16.gmra.mrb[0].mxu0 %v968
        %v1117 = vpop.f32.mrb[0].mxu0
        %v1118 = vadd.f32 %v906, %v1117
        %v1119 = vpop.f32.mrb[0].mxu0
        %v1120 = vpop.f32.mrb[0].mxu0
        %v1121 = vadd.f32 %v909, %v1120
        %v1122 = vpop.f32.mrb[0].mxu0
        %1123 = vmatprep.mubr.bf16.mxu0 0
        %1124 = vmatmul.mubr.bf16.gmra.mrb[0].mxu0 %v971
        %v1125 = vpop.f32.mrb[0].mxu0
        %v1126 = vadd.f32 %v914, %v1125
        %v1127 = vpop.f32.mrb[0].mxu0
        %v1128 = vpop.f32.mrb[0].mxu0
        %v1129 = vadd.f32 %v917, %v1128
        %v1130 = vpop.f32.mrb[0].mxu0
        %1131 = vmatprep.mubr.bf16.mxu0 0
        %1132 = vmatmul.mubr.bf16.gmra.mrb[0].mxu0 %v974
        %v1133 = vpop.f32.mrb[0].mxu0
        %v1134 = vadd.f32 %v922, %v1133
        %v1135 = vpop.f32.mrb[0].mxu0
        %v1136 = vpop.f32.mrb[0].mxu0
        %v1137 = vadd.f32 %v925, %v1136
        %v1138 = vpop.f32.mrb[0].mxu0
        %1139 = vdwg.mxu0
        %vm1140 = vcmask 1045504
        %v1141 = vrot.slane %v368, 2
        %v1142 = vrot.slane %v369, 2
        %v1143 = vsel %vm1140, %v1141, %v1142
        %v1144 = vrot.slane %v370, 2
        %v1145 = vsel %vm1140, %v1142, %v1144
        %v1146 = vrot.slane %v371, 2
        %v1147 = vrot.slane %v372, 2
        %v1148 = vsel %vm1140, %v1146, %v1147
        %v1149 = vrot.slane %v373, 2
        %v1150 = vsel %vm1140, %v1147, %v1149
        %v1151 = vrot.slane %v374, 2
        %v1152 = vrot.slane %v375, 2
        %v1153 = vsel %vm1140, %v1151, %v1152
        %v1154 = vrot.slane %v376, 2
        %v1155 = vsel %vm1140, %v1152, %v1154
        %v1156 = vrot.slane %v377, 2
        %v1157 = vrot.slane %v378, 2
        %v1158 = vsel %vm1140, %v1156, %v1157
        %v1159 = vrot.slane %v379, 2
        %v1160 = vsel %vm1140, %v1157, %v1159
        %v1161 = vrot.slane %v380, 2
        %v1162 = vrot.slane %v381, 2
        %v1163 = vsel %vm1140, %v1161, %v1162
        %v1164 = vrot.slane %v382, 2
        %v1165 = vsel %vm1140, %v1162, %v1164
        %v1166 = vrot.slane %v383, 2
        %v1167 = vrot.slane %v384, 2
        %v1168 = vsel %vm1140, %v1166, %v1167
        %v1169 = vrot.slane %v385, 2
        %v1170 = vsel %vm1140, %v1167, %v1169
        %v1171 = vrot.slane %v386, 2
        %v1172 = vrot.slane %v387, 2
        %v1173 = vsel %vm1140, %v1171, %v1172
        %v1174 = vrot.slane %v388, 2
        %v1175 = vsel %vm1140, %v1172, %v1174
        %v1176 = vrot.slane %v389, 2
        %v1177 = vrot.slane %v390, 2
        %v1178 = vsel %vm1140, %v1176, %v1177
        %v1179 = vrot.slane %v391, 2
        %v1180 = vsel %vm1140, %v1177, %v1179
        %v1181 = vrot.slane %v392, 2
        %v1182 = vrot.slane %v393, 2
        %v1183 = vsel %vm1140, %v1181, %v1182
        %v1184 = vrot.slane %v394, 2
        %v1185 = vsel %vm1140, %v1182, %v1184
        %v1186 = vrot.slane %v395, 2
        %v1187 = vrot.slane %v396, 2
        %v1188 = vsel %vm1140, %v1186, %v1187
        %v1189 = vrot.slane %v397, 2
        %v1190 = vsel %vm1140, %v1187, %v1189
        %v1191 = vrot.slane %v398, 2
        %v1192 = vrot.slane %v399, 2
        %v1193 = vsel %vm1140, %v1191, %v1192
        %v1194 = vrot.slane %v400, 2
        %v1195 = vsel %vm1140, %v1192, %v1194
        %v1196 = vrot.slane %v401, 2
        %v1197 = vrot.slane %v402, 2
        %v1198 = vsel %vm1140, %v1196, %v1197
        %v1199 = vrot.slane %v403, 2
        %v1200 = vsel %vm1140, %v1197, %v1199
        %v1201 = vrot.slane %v404, 2
        %v1202 = vrot.slane %v405, 2
        %v1203 = vsel %vm1140, %v1201, %v1202
        %v1204 = vrot.slane %v406, 2
        %v1205 = vsel %vm1140, %v1202, %v1204
        %v1206 = vrot.slane %v407, 2
        %v1207 = vrot.slane %v408, 2
        %v1208 = vsel %vm1140, %v1206, %v1207
        %v1209 = vrot.slane %v409, 2
        %v1210 = vsel %vm1140, %v1207, %v1209
        %v1211 = vrot.slane %v410, 2
        %v1212 = vrot.slane %v411, 2
        %v1213 = vsel %vm1140, %v1211, %v1212
        %v1214 = vrot.slane %v412, 2
        %v1215 = vsel %vm1140, %v1212, %v1214
        %v1216 = vrot.slane %v413, 2
        %v1217 = vrot.slane %v414, 2
        %v1218 = vsel %vm1140, %v1216, %v1217
        %v1219 = vrot.slane %v415, 2
        %v1220 = vsel %vm1140, %v1217, %v1219
        %v1253 = vpack.c.bf16 %v1145, %v1143
        %v1254 = vpack.c.bf16 %v1150, %v1148
        %v1255 = vpack.c.bf16 %v1155, %v1153
        %v1256 = vpack.c.bf16 %v1160, %v1158
        %v1257 = vpack.c.bf16 %v1165, %v1163
        %v1258 = vpack.c.bf16 %v1170, %v1168
        %v1259 = vpack.c.bf16 %v1175, %v1173
        %v1260 = vpack.c.bf16 %v1180, %v1178
        %v1261 = vpack.c.bf16 %v1185, %v1183
        %v1262 = vpack.c.bf16 %v1190, %v1188
        %v1263 = vpack.c.bf16 %v1195, %v1193
        %v1264 = vpack.c.bf16 %v1200, %v1198
        %v1265 = vpack.c.bf16 %v1205, %v1203
        %v1266 = vpack.c.bf16 %v1210, %v1208
        %v1267 = vpack.c.bf16 %v1215, %v1213
        %v1268 = vpack.c.bf16 %v1220, %v1218
        %v1270 = vsel %vm714, %v1253, 0
        %v1273 = vsel %vm714, %v1254, 0
        %v1276 = vsel %vm714, %v1255, 0
        %v1279 = vsel %vm714, %v1256, 0
        %v1282 = vsel %vm714, %v1257, 0
        %v1285 = vsel %vm714, %v1258, 0
        %v1288 = vsel %vm714, %v1259, 0
        %v1291 = vsel %vm714, %v1260, 0
        %v1294 = vsel %vm714, %v1261, 0
        %v1297 = vsel %vm714, %v1262, 0
        %v1300 = vsel %vm714, %v1263, 0
        %v1303 = vsel %vm714, %v1264, 0
        %v1306 = vsel %vm714, %v1265, 0
        %v1309 = vsel %vm714, %v1266, 0
        %v1312 = vsel %vm714, %v1267, 0
        %v1315 = vsel %vm714, %v1268, 0
        %v1318 = vsel %vm763, %v514, 0
        %1320 = vmatprep.subr.bf16.mxu0 0
        %1321 = vmatpush1.bf16.msra.mxu0 %v1318
        %1322 = vmatprep.subr.bf16.mxu0 0
        %1323 = vmatpush1.bf16.msra.mxu0 0
        %1324 = vmatprep.subr.bf16.mxu0 0
        %1325 = vmatpush1.bf16.msra.mxu0 0
        %1326 = vmatprep.subr.bf16.mxu0 0
        %1327 = vmatpush1.bf16.msra.mxu0 0
        %1328 = vmatprep.subr.bf16.mxu0 0
        %1329 = vmatpush1.bf16.msra.mxu0 0
        %1330 = vmatprep.subr.bf16.mxu0 0
        %1331 = vmatpush1.bf16.msra.mxu0 0
        %1332 = vmatprep.subr.bf16.mxu0 0
        %1333 = vmatpush1.bf16.msra.mxu0 0
        %1334 = vmatprep.subr.bf16.mxu0 0
        %1335 = vmatpush1.bf16.msra.mxu0 0
        %1336 = vmatprep.subr.bf16.mxu0 0
        %1337 = vmatpush1.bf16.msra.mxu0 0
        %1338 = vmatprep.subr.bf16.mxu0 0
        %1339 = vmatpush1.bf16.msra.mxu0 0
        %1340 = vmatprep.subr.bf16.mxu0 0
        %1341 = vmatpush1.bf16.msra.mxu0 0
        %1342 = vmatprep.subr.bf16.mxu0 0
        %1343 = vmatpush1.bf16.msra.mxu0 0
        %1344 = vmatprep.subr.bf16.mxu0 0
        %1345 = vmatpush1.bf16.msra.mxu0 0
        %1346 = vmatprep.subr.bf16.mxu0 0
        %1347 = vmatpush1.bf16.msra.mxu0 0
        %1348 = vmatprep.subr.bf16.mxu0 0
        %1349 = vmatpush1.bf16.msra.mxu0 0
        %1350 = vmatprep.subr.bf16.mxu0 0
        %1351 = vmatpush1.bf16.msra.mxu0 0
        %1352 = vmatprep.mubr.bf16.mxu0 0
        %1353 = vmatmul.mubr.bf16.gmra.mrb[0].mxu0 %v1270
        %v1354 = vpop.f32.mrb[0].mxu0
        %v1355 = vadd.f32 0.0, %v1354
        %v1356 = vpop.f32.mrb[0].mxu0
        %v1357 = vpop.f32.mrb[0].mxu0
        %v1358 = vadd.f32 0.0, %v1357
        %v1359 = vpop.f32.mrb[0].mxu0
        %1360 = vmatprep.mubr.bf16.mxu0 0
        %1361 = vmatmul.mubr.bf16.gmra.mrb[0].mxu0 %v1273
        %v1362 = vpop.f32.mrb[0].mxu0
        %v1363 = vadd.f32 0.0, %v1362
        %v1364 = vpop.f32.mrb[0].mxu0
        %v1365 = vpop.f32.mrb[0].mxu0
        %v1366 = vadd.f32 0.0, %v1365
        %v1367 = vpop.f32.mrb[0].mxu0
        %1368 = vmatprep.mubr.bf16.mxu0 0
        %1369 = vmatmul.mubr.bf16.gmra.mrb[0].mxu0 %v1276
        %v1370 = vpop.f32.mrb[0].mxu0
        %v1371 = vadd.f32 0.0, %v1370
        %v1372 = vpop.f32.mrb[0].mxu0
        %v1373 = vpop.f32.mrb[0].mxu0
        %v1374 = vadd.f32 0.0, %v1373
        %v1375 = vpop.f32.mrb[0].mxu0
        %1376 = vmatprep.mubr.bf16.mxu0 0
        %1377 = vmatmul.mubr.bf16.gmra.mrb[0].mxu0 %v1279
        %v1378 = vpop.f32.mrb[0].mxu0
        %v1379 = vadd.f32 0.0, %v1378
        %v1380 = vpop.f32.mrb[0].mxu0
        %v1381 = vpop.f32.mrb[0].mxu0
        %v1382 = vadd.f32 0.0, %v1381
        %v1383 = vpop.f32.mrb[0].mxu0
        %1384 = vmatprep.mubr.bf16.mxu0 0
        %1385 = vmatmul.mubr.bf16.gmra.mrb[0].mxu0 %v1282
        %v1386 = vpop.f32.mrb[0].mxu0
        %v1387 = vadd.f32 0.0, %v1386
        %v1388 = vpop.f32.mrb[0].mxu0
        %v1389 = vpop.f32.mrb[0].mxu0
        %v1390 = vadd.f32 0.0, %v1389
        %v1391 = vpop.f32.mrb[0].mxu0
        %1392 = vmatprep.mubr.bf16.mxu0 0
        %1393 = vmatmul.mubr.bf16.gmra.mrb[0].mxu0 %v1285
        %v1394 = vpop.f32.mrb[0].mxu0
        %v1395 = vadd.f32 0.0, %v1394
        %v1396 = vpop.f32.mrb[0].mxu0
        %v1397 = vpop.f32.mrb[0].mxu0
        %v1398 = vadd.f32 0.0, %v1397
        %v1399 = vpop.f32.mrb[0].mxu0
        %1400 = vmatprep.mubr.bf16.mxu0 0
        %1401 = vmatmul.mubr.bf16.gmra.mrb[0].mxu0 %v1288
        %v1402 = vpop.f32.mrb[0].mxu0
        %v1403 = vadd.f32 0.0, %v1402
        %v1404 = vpop.f32.mrb[0].mxu0
        %v1405 = vpop.f32.mrb[0].mxu0
        %v1406 = vadd.f32 0.0, %v1405
        %v1407 = vpop.f32.mrb[0].mxu0
        %1408 = vmatprep.mubr.bf16.mxu0 0
        %1409 = vmatmul.mubr.bf16.gmra.mrb[0].mxu0 %v1291
        %v1410 = vpop.f32.mrb[0].mxu0
        %v1411 = vadd.f32 0.0, %v1410
        %v1412 = vpop.f32.mrb[0].mxu0
        %v1413 = vpop.f32.mrb[0].mxu0
        %v1414 = vadd.f32 0.0, %v1413
        %v1415 = vpop.f32.mrb[0].mxu0
        %1416 = vmatprep.mubr.bf16.mxu0 0
        %1417 = vmatmul.mubr.bf16.gmra.mrb[0].mxu0 %v1294
        %v1418 = vpop.f32.mrb[0].mxu0
        %v1419 = vadd.f32 0.0, %v1418
        %v1420 = vpop.f32.mrb[0].mxu0
        %v1421 = vpop.f32.mrb[0].mxu0
        %v1422 = vadd.f32 0.0, %v1421
        %v1423 = vpop.f32.mrb[0].mxu0
        %1424 = vmatprep.mubr.bf16.mxu0 0
        %1425 = vmatmul.mubr.bf16.gmra.mrb[0].mxu0 %v1297
        %v1426 = vpop.f32.mrb[0].mxu0
        %v1427 = vadd.f32 0.0, %v1426
        %v1428 = vpop.f32.mrb[0].mxu0
        %v1429 = vpop.f32.mrb[0].mxu0
        %v1430 = vadd.f32 0.0, %v1429
        %v1431 = vpop.f32.mrb[0].mxu0
        %1432 = vmatprep.mubr.bf16.mxu0 0
        %1433 = vmatmul.mubr.bf16.gmra.mrb[0].mxu0 %v1300
        %v1434 = vpop.f32.mrb[0].mxu0
        %v1435 = vadd.f32 0.0, %v1434
        %v1436 = vpop.f32.mrb[0].mxu0
        %v1437 = vpop.f32.mrb[0].mxu0
        %v1438 = vadd.f32 0.0, %v1437
        %v1439 = vpop.f32.mrb[0].mxu0
        %1440 = vmatprep.mubr.bf16.mxu0 0
        %1441 = vmatmul.mubr.bf16.gmra.mrb[0].mxu0 %v1303
        %v1442 = vpop.f32.mrb[0].mxu0
        %v1443 = vadd.f32 0.0, %v1442
        %v1444 = vpop.f32.mrb[0].mxu0
        %v1445 = vpop.f32.mrb[0].mxu0
        %v1446 = vadd.f32 0.0, %v1445
        %v1447 = vpop.f32.mrb[0].mxu0
        %1448 = vmatprep.mubr.bf16.mxu0 0
        %1449 = vmatmul.mubr.bf16.gmra.mrb[0].mxu0 %v1306
        %v1450 = vpop.f32.mrb[0].mxu0
        %v1451 = vadd.f32 0.0, %v1450
        %v1452 = vpop.f32.mrb[0].mxu0
        %v1453 = vpop.f32.mrb[0].mxu0
        %v1454 = vadd.f32 0.0, %v1453
        %v1455 = vpop.f32.mrb[0].mxu0
        %1456 = vmatprep.mubr.bf16.mxu0 0
        %1457 = vmatmul.mubr.bf16.gmra.mrb[0].mxu0 %v1309
        %v1458 = vpop.f32.mrb[0].mxu0
        %v1459 = vadd.f32 0.0, %v1458
        %v1460 = vpop.f32.mrb[0].mxu0
        %v1461 = vpop.f32.mrb[0].mxu0
        %v1462 = vadd.f32 0.0, %v1461
        %v1463 = vpop.f32.mrb[0].mxu0
        %1464 = vmatprep.mubr.bf16.mxu0 0
        %1465 = vmatmul.mubr.bf16.gmra.mrb[0].mxu0 %v1312
        %v1466 = vpop.f32.mrb[0].mxu0
        %v1467 = vadd.f32 0.0, %v1466
        %v1468 = vpop.f32.mrb[0].mxu0
        %v1469 = vpop.f32.mrb[0].mxu0
        %v1470 = vadd.f32 0.0, %v1469
        %v1471 = vpop.f32.mrb[0].mxu0
        %1472 = vmatprep.mubr.bf16.mxu0 0
        %1473 = vmatmul.mubr.bf16.gmra.mrb[0].mxu0 %v1315
        %v1474 = vpop.f32.mrb[0].mxu0
        %v1475 = vadd.f32 0.0, %v1474
        %v1476 = vpop.f32.mrb[0].mxu0
        %v1477 = vpop.f32.mrb[0].mxu0
        %v1478 = vadd.f32 0.0, %v1477
        %v1479 = vpop.f32.mrb[0].mxu0
        %1480 = vdwg.mxu0
        %v1481 = vadd.f32 %v1014, %v1355
        %v1482 = vadd.f32 %v1017, %v1358
        %v1483 = vadd.f32 %v1022, %v1363
        %v1484 = vadd.f32 %v1025, %v1366
        %v1485 = vadd.f32 %v1030, %v1371
        %v1486 = vadd.f32 %v1033, %v1374
        %v1487 = vadd.f32 %v1038, %v1379
        %v1488 = vadd.f32 %v1041, %v1382
        %v1489 = vadd.f32 %v1046, %v1387
        %v1490 = vadd.f32 %v1049, %v1390
        %v1491 = vadd.f32 %v1054, %v1395
        %v1492 = vadd.f32 %v1057, %v1398
        %v1493 = vadd.f32 %v1062, %v1403
        %v1494 = vadd.f32 %v1065, %v1406
        %v1495 = vadd.f32 %v1070, %v1411
        %v1496 = vadd.f32 %v1073, %v1414
        %v1497 = vadd.f32 %v1078, %v1419
        %v1498 = vadd.f32 %v1081, %v1422
        %v1499 = vadd.f32 %v1086, %v1427
        %v1500 = vadd.f32 %v1089, %v1430
        %v1501 = vadd.f32 %v1094, %v1435
        %v1502 = vadd.f32 %v1097, %v1438
        %v1503 = vadd.f32 %v1102, %v1443
        %v1504 = vadd.f32 %v1105, %v1446
        %v1505 = vadd.f32 %v1110, %v1451
        %v1506 = vadd.f32 %v1113, %v1454
        %v1507 = vadd.f32 %v1118, %v1459
        %v1508 = vadd.f32 %v1121, %v1462
        %v1509 = vadd.f32 %v1126, %v1467
        %v1510 = vadd.f32 %v1129, %v1470
        %v1511 = vadd.f32 %v1134, %v1475
        %v1512 = vadd.f32 %v1137, %v1478
        %v1513 = vpack.c.bf16 %v417, %v416
        %v1514 = vpack.c.bf16 %v420, %v419
        %v1515 = vpack.c.bf16 %v423, %v422
        %v1516 = vpack.c.bf16 %v426, %v425
        %v1517 = vpack.c.bf16 %v429, %v428
        %v1518 = vpack.c.bf16 %v432, %v431
        %v1519 = vpack.c.bf16 %v435, %v434
        %v1520 = vpack.c.bf16 %v438, %v437
        %v1521 = vpack.c.bf16 %v441, %v440
        %v1522 = vpack.c.bf16 %v444, %v443
        %v1523 = vpack.c.bf16 %v447, %v446
        %v1524 = vpack.c.bf16 %v450, %v449
        %v1525 = vpack.c.bf16 %v453, %v452
        %v1526 = vpack.c.bf16 %v456, %v455
        %v1527 = vpack.c.bf16 %v459, %v458
        %v1528 = vpack.c.bf16 %v462, %v461
        %v1530 = vsel %vm714, %v1513, 0
        %v1533 = vsel %vm714, %v1514, 0
        %v1536 = vsel %vm714, %v1515, 0
        %v1539 = vsel %vm714, %v1516, 0
        %v1542 = vsel %vm714, %v1517, 0
        %v1545 = vsel %vm714, %v1518, 0
        %v1548 = vsel %vm714, %v1519, 0
        %v1551 = vsel %vm714, %v1520, 0
        %v1554 = vsel %vm714, %v1521, 0
        %v1557 = vsel %vm714, %v1522, 0
        %v1560 = vsel %vm714, %v1523, 0
        %v1563 = vsel %vm714, %v1524, 0
        %v1566 = vsel %vm714, %v1525, 0
        %v1569 = vsel %vm714, %v1526, 0
        %v1572 = vsel %vm714, %v1527, 0
        %v1575 = vsel %vm714, %v1528, 0
        %v1578 = vsel %vm763, %v515, 0
        %1580 = vmatprep.subr.bf16.mxu0 0
        %1581 = vmatpush1.bf16.msra.mxu0 %v1578
        %1582 = vmatprep.subr.bf16.mxu0 0
        %1583 = vmatpush1.bf16.msra.mxu0 0
        %1584 = vmatprep.subr.bf16.mxu0 0
        %1585 = vmatpush1.bf16.msra.mxu0 0
        %1586 = vmatprep.subr.bf16.mxu0 0
        %1587 = vmatpush1.bf16.msra.mxu0 0
        %1588 = vmatprep.subr.bf16.mxu0 0
        %1589 = vmatpush1.bf16.msra.mxu0 0
        %1590 = vmatprep.subr.bf16.mxu0 0
        %1591 = vmatpush1.bf16.msra.mxu0 0
        %1592 = vmatprep.subr.bf16.mxu0 0
        %1593 = vmatpush1.bf16.msra.mxu0 0
        %1594 = vmatprep.subr.bf16.mxu0 0
        %1595 = vmatpush1.bf16.msra.mxu0 0
        %1596 = vmatprep.subr.bf16.mxu0 0
        %1597 = vmatpush1.bf16.msra.mxu0 0
        %1598 = vmatprep.subr.bf16.mxu0 0
        %1599 = vmatpush1.bf16.msra.mxu0 0
        %1600 = vmatprep.subr.bf16.mxu0 0
        %1601 = vmatpush1.bf16.msra.mxu0 0
        %1602 = vmatprep.subr.bf16.mxu0 0
        %1603 = vmatpush1.bf16.msra.mxu0 0
        %1604 = vmatprep.subr.bf16.mxu0 0
        %1605 = vmatpush1.bf16.msra.mxu0 0
        %1606 = vmatprep.subr.bf16.mxu0 0
        %1607 = vmatpush1.bf16.msra.mxu0 0
        %1608 = vmatprep.subr.bf16.mxu0 0
        %1609 = vmatpush1.bf16.msra.mxu0 0
        %1610 = vmatprep.subr.bf16.mxu0 0
        %1611 = vmatpush1.bf16.msra.mxu0 0
        %1612 = vmatprep.mubr.bf16.mxu0 0
        %1613 = vmatmul.mubr.bf16.gmra.mrb[0].mxu0 %v1530
        %v1614 = vpop.f32.mrb[0].mxu0
        %v1615 = vadd.f32 0.0, %v1614
        %v1616 = vpop.f32.mrb[0].mxu0
        %v1617 = vpop.f32.mrb[0].mxu0
        %v1618 = vadd.f32 0.0, %v1617
        %v1619 = vpop.f32.mrb[0].mxu0
        %1620 = vmatprep.mubr.bf16.mxu0 0
        %1621 = vmatmul.mubr.bf16.gmra.mrb[0].mxu0 %v1533
        %v1622 = vpop.f32.mrb[0].mxu0
        %v1623 = vadd.f32 0.0, %v1622
        %v1624 = vpop.f32.mrb[0].mxu0
        %v1625 = vpop.f32.mrb[0].mxu0
        %v1626 = vadd.f32 0.0, %v1625
        %v1627 = vpop.f32.mrb[0].mxu0
        %1628 = vmatprep.mubr.bf16.mxu0 0
        %1629 = vmatmul.mubr.bf16.gmra.mrb[0].mxu0 %v1536
        %v1630 = vpop.f32.mrb[0].mxu0
        %v1631 = vadd.f32 0.0, %v1630
        %v1632 = vpop.f32.mrb[0].mxu0
        %v1633 = vpop.f32.mrb[0].mxu0
        %v1634 = vadd.f32 0.0, %v1633
        %v1635 = vpop.f32.mrb[0].mxu0
        %1636 = vmatprep.mubr.bf16.mxu0 0
        %1637 = vmatmul.mubr.bf16.gmra.mrb[0].mxu0 %v1539
        %v1638 = vpop.f32.mrb[0].mxu0
        %v1639 = vadd.f32 0.0, %v1638
        %v1640 = vpop.f32.mrb[0].mxu0
        %v1641 = vpop.f32.mrb[0].mxu0
        %v1642 = vadd.f32 0.0, %v1641
        %v1643 = vpop.f32.mrb[0].mxu0
        %1644 = vmatprep.mubr.bf16.mxu0 0
        %1645 = vmatmul.mubr.bf16.gmra.mrb[0].mxu0 %v1542
        %v1646 = vpop.f32.mrb[0].mxu0
        %v1647 = vadd.f32 0.0, %v1646
        %v1648 = vpop.f32.mrb[0].mxu0
        %v1649 = vpop.f32.mrb[0].mxu0
        %v1650 = vadd.f32 0.0, %v1649
        %v1651 = vpop.f32.mrb[0].mxu0
        %1652 = vmatprep.mubr.bf16.mxu0 0
        %1653 = vmatmul.mubr.bf16.gmra.mrb[0].mxu0 %v1545
        %v1654 = vpop.f32.mrb[0].mxu0
        %v1655 = vadd.f32 0.0, %v1654
        %v1656 = vpop.f32.mrb[0].mxu0
        %v1657 = vpop.f32.mrb[0].mxu0
        %v1658 = vadd.f32 0.0, %v1657
        %v1659 = vpop.f32.mrb[0].mxu0
        %1660 = vmatprep.mubr.bf16.mxu0 0
        %1661 = vmatmul.mubr.bf16.gmra.mrb[0].mxu0 %v1548
        %v1662 = vpop.f32.mrb[0].mxu0
        %v1663 = vadd.f32 0.0, %v1662
        %v1664 = vpop.f32.mrb[0].mxu0
        %v1665 = vpop.f32.mrb[0].mxu0
        %v1666 = vadd.f32 0.0, %v1665
        %v1667 = vpop.f32.mrb[0].mxu0
        %1668 = vmatprep.mubr.bf16.mxu0 0
        %1669 = vmatmul.mubr.bf16.gmra.mrb[0].mxu0 %v1551
        %v1670 = vpop.f32.mrb[0].mxu0
        %v1671 = vadd.f32 0.0, %v1670
        %v1672 = vpop.f32.mrb[0].mxu0
        %v1673 = vpop.f32.mrb[0].mxu0
        %v1674 = vadd.f32 0.0, %v1673
        %v1675 = vpop.f32.mrb[0].mxu0
        %1676 = vmatprep.mubr.bf16.mxu0 0
        %1677 = vmatmul.mubr.bf16.gmra.mrb[0].mxu0 %v1554
        %v1678 = vpop.f32.mrb[0].mxu0
        %v1679 = vadd.f32 0.0, %v1678
        %v1680 = vpop.f32.mrb[0].mxu0
        %v1681 = vpop.f32.mrb[0].mxu0
        %v1682 = vadd.f32 0.0, %v1681
        %v1683 = vpop.f32.mrb[0].mxu0
        %1684 = vmatprep.mubr.bf16.mxu0 0
        %1685 = vmatmul.mubr.bf16.gmra.mrb[0].mxu0 %v1557
        %v1686 = vpop.f32.mrb[0].mxu0
        %v1687 = vadd.f32 0.0, %v1686
        %v1688 = vpop.f32.mrb[0].mxu0
        %v1689 = vpop.f32.mrb[0].mxu0
        %v1690 = vadd.f32 0.0, %v1689
        %v1691 = vpop.f32.mrb[0].mxu0
        %1692 = vmatprep.mubr.bf16.mxu0 0
        %1693 = vmatmul.mubr.bf16.gmra.mrb[0].mxu0 %v1560
        %v1694 = vpop.f32.mrb[0].mxu0
        %v1695 = vadd.f32 0.0, %v1694
        %v1696 = vpop.f32.mrb[0].mxu0
        %v1697 = vpop.f32.mrb[0].mxu0
        %v1698 = vadd.f32 0.0, %v1697
        %v1699 = vpop.f32.mrb[0].mxu0
        %1700 = vmatprep.mubr.bf16.mxu0 0
        %1701 = vmatmul.mubr.bf16.gmra.mrb[0].mxu0 %v1563
        %v1702 = vpop.f32.mrb[0].mxu0
        %v1703 = vadd.f32 0.0, %v1702
        %v1704 = vpop.f32.mrb[0].mxu0
        %v1705 = vpop.f32.mrb[0].mxu0
        %v1706 = vadd.f32 0.0, %v1705
        %v1707 = vpop.f32.mrb[0].mxu0
        %1708 = vmatprep.mubr.bf16.mxu0 0
        %1709 = vmatmul.mubr.bf16.gmra.mrb[0].mxu0 %v1566
        %v1710 = vpop.f32.mrb[0].mxu0
        %v1711 = vadd.f32 0.0, %v1710
        %v1712 = vpop.f32.mrb[0].mxu0
        %v1713 = vpop.f32.mrb[0].mxu0
        %v1714 = vadd.f32 0.0, %v1713
        %v1715 = vpop.f32.mrb[0].mxu0
        %1716 = vmatprep.mubr.bf16.mxu0 0
        %1717 = vmatmul.mubr.bf16.gmra.mrb[0].mxu0 %v1569
        %v1718 = vpop.f32.mrb[0].mxu0
        %v1719 = vadd.f32 0.0, %v1718
        %v1720 = vpop.f32.mrb[0].mxu0
        %v1721 = vpop.f32.mrb[0].mxu0
        %v1722 = vadd.f32 0.0, %v1721
        %v1723 = vpop.f32.mrb[0].mxu0
        %1724 = vmatprep.mubr.bf16.mxu0 0
        %1725 = vmatmul.mubr.bf16.gmra.mrb[0].mxu0 %v1572
        %v1726 = vpop.f32.mrb[0].mxu0
        %v1727 = vadd.f32 0.0, %v1726
        %v1728 = vpop.f32.mrb[0].mxu0
        %v1729 = vpop.f32.mrb[0].mxu0
        %v1730 = vadd.f32 0.0, %v1729
        %v1731 = vpop.f32.mrb[0].mxu0
        %1732 = vmatprep.mubr.bf16.mxu0 0
        %1733 = vmatmul.mubr.bf16.gmra.mrb[0].mxu0 %v1575
        %v1734 = vpop.f32.mrb[0].mxu0
        %v1735 = vadd.f32 0.0, %v1734
        %v1736 = vpop.f32.mrb[0].mxu0
        %v1737 = vpop.f32.mrb[0].mxu0
        %v1738 = vadd.f32 0.0, %v1737
        %v1739 = vpop.f32.mrb[0].mxu0
        %1740 = vdwg.mxu0
        %v1741 = vadd.f32 %v1481, %v1615
        %v1742 = vadd.f32 %v1482, %v1618
        %v1743 = vadd.f32 %v1483, %v1623
        %v1744 = vadd.f32 %v1484, %v1626
        %v1745 = vadd.f32 %v1485, %v1631
        %v1746 = vadd.f32 %v1486, %v1634
        %v1747 = vadd.f32 %v1487, %v1639
        %v1748 = vadd.f32 %v1488, %v1642
        %v1749 = vadd.f32 %v1489, %v1647
        %v1750 = vadd.f32 %v1490, %v1650
        %v1751 = vadd.f32 %v1491, %v1655
        %v1752 = vadd.f32 %v1492, %v1658
        %v1753 = vadd.f32 %v1493, %v1663
        %v1754 = vadd.f32 %v1494, %v1666
        %v1755 = vadd.f32 %v1495, %v1671
        %v1756 = vadd.f32 %v1496, %v1674
        %v1757 = vadd.f32 %v1497, %v1679
        %v1758 = vadd.f32 %v1498, %v1682
        %v1759 = vadd.f32 %v1499, %v1687
        %v1760 = vadd.f32 %v1500, %v1690
        %v1761 = vadd.f32 %v1501, %v1695
        %v1762 = vadd.f32 %v1502, %v1698
        %v1763 = vadd.f32 %v1503, %v1703
        %v1764 = vadd.f32 %v1504, %v1706
        %v1765 = vadd.f32 %v1505, %v1711
        %v1766 = vadd.f32 %v1506, %v1714
        %v1767 = vadd.f32 %v1507, %v1719
        %v1768 = vadd.f32 %v1508, %v1722
        %v1769 = vadd.f32 %v1509, %v1727
        %v1770 = vadd.f32 %v1510, %v1730
        %v1771 = vadd.f32 %v1511, %v1735
        %v1772 = vadd.f32 %v1512, %v1738
        %v1821 = vrot.slane %v416, 1
        %v1822 = vrot.slane %v417, 1
        %v1823 = vsel %vm585, %v1821, %v1822
        %v1824 = vrot.slane %v418, 1
        %v1825 = vsel %vm585, %v1822, %v1824
        %v1826 = vrot.slane %v419, 1
        %v1827 = vrot.slane %v420, 1
        %v1828 = vsel %vm585, %v1826, %v1827
        %v1829 = vrot.slane %v421, 1
        %v1830 = vsel %vm585, %v1827, %v1829
        %v1831 = vrot.slane %v422, 1
        %v1832 = vrot.slane %v423, 1
        %v1833 = vsel %vm585, %v1831, %v1832
        %v1834 = vrot.slane %v424, 1
        %v1835 = vsel %vm585, %v1832, %v1834
        %v1836 = vrot.slane %v425, 1
        %v1837 = vrot.slane %v426, 1
        %v1838 = vsel %vm585, %v1836, %v1837
        %v1839 = vrot.slane %v427, 1
        %v1840 = vsel %vm585, %v1837, %v1839
        %v1841 = vrot.slane %v428, 1
        %v1842 = vrot.slane %v429, 1
        %v1843 = vsel %vm585, %v1841, %v1842
        %v1844 = vrot.slane %v430, 1
        %v1845 = vsel %vm585, %v1842, %v1844
        %v1846 = vrot.slane %v431, 1
        %v1847 = vrot.slane %v432, 1
        %v1848 = vsel %vm585, %v1846, %v1847
        %v1849 = vrot.slane %v433, 1
        %v1850 = vsel %vm585, %v1847, %v1849
        %v1851 = vrot.slane %v434, 1
        %v1852 = vrot.slane %v435, 1
        %v1853 = vsel %vm585, %v1851, %v1852
        %v1854 = vrot.slane %v436, 1
        %v1855 = vsel %vm585, %v1852, %v1854
        %v1856 = vrot.slane %v437, 1
        %v1857 = vrot.slane %v438, 1
        %v1858 = vsel %vm585, %v1856, %v1857
        %v1859 = vrot.slane %v439, 1
        %v1860 = vsel %vm585, %v1857, %v1859
        %v1861 = vrot.slane %v440, 1
        %v1862 = vrot.slane %v441, 1
        %v1863 = vsel %vm585, %v1861, %v1862
        %v1864 = vrot.slane %v442, 1
        %v1865 = vsel %vm585, %v1862, %v1864
        %v1866 = vrot.slane %v443, 1
        %v1867 = vrot.slane %v444, 1
        %v1868 = vsel %vm585, %v1866, %v1867
        %v1869 = vrot.slane %v445, 1
        %v1870 = vsel %vm585, %v1867, %v1869
        %v1871 = vrot.slane %v446, 1
        %v1872 = vrot.slane %v447, 1
        %v1873 = vsel %vm585, %v1871, %v1872
        %v1874 = vrot.slane %v448, 1
        %v1875 = vsel %vm585, %v1872, %v1874
        %v1876 = vrot.slane %v449, 1
        %v1877 = vrot.slane %v450, 1
        %v1878 = vsel %vm585, %v1876, %v1877
        %v1879 = vrot.slane %v451, 1
        %v1880 = vsel %vm585, %v1877, %v1879
        %v1881 = vrot.slane %v452, 1
        %v1882 = vrot.slane %v453, 1
        %v1883 = vsel %vm585, %v1881, %v1882
        %v1884 = vrot.slane %v454, 1
        %v1885 = vsel %vm585, %v1882, %v1884
        %v1886 = vrot.slane %v455, 1
        %v1887 = vrot.slane %v456, 1
        %v1888 = vsel %vm585, %v1886, %v1887
        %v1889 = vrot.slane %v457, 1
        %v1890 = vsel %vm585, %v1887, %v1889
        %v1891 = vrot.slane %v458, 1
        %v1892 = vrot.slane %v459, 1
        %v1893 = vsel %vm585, %v1891, %v1892
        %v1894 = vrot.slane %v460, 1
        %v1895 = vsel %vm585, %v1892, %v1894
        %v1896 = vrot.slane %v461, 1
        %v1897 = vrot.slane %v462, 1
        %v1898 = vsel %vm585, %v1896, %v1897
        %v1899 = vrot.slane %v463, 1
        %v1900 = vsel %vm585, %v1897, %v1899
        %v1933 = vpack.c.bf16 %v1825, %v1823
        %v1934 = vpack.c.bf16 %v1830, %v1828
        %v1935 = vpack.c.bf16 %v1835, %v1833
        %v1936 = vpack.c.bf16 %v1840, %v1838
        %v1937 = vpack.c.bf16 %v1845, %v1843
        %v1938 = vpack.c.bf16 %v1850, %v1848
        %v1939 = vpack.c.bf16 %v1855, %v1853
        %v1940 = vpack.c.bf16 %v1860, %v1858
        %v1941 = vpack.c.bf16 %v1865, %v1863
        %v1942 = vpack.c.bf16 %v1870, %v1868
        %v1943 = vpack.c.bf16 %v1875, %v1873
        %v1944 = vpack.c.bf16 %v1880, %v1878
        %v1945 = vpack.c.bf16 %v1885, %v1883
        %v1946 = vpack.c.bf16 %v1890, %v1888
        %v1947 = vpack.c.bf16 %v1895, %v1893
        %v1948 = vpack.c.bf16 %v1900, %v1898
        %v1950 = vsel %vm714, %v1933, 0
        %v1953 = vsel %vm714, %v1934, 0
        %v1956 = vsel %vm714, %v1935, 0
        %v1959 = vsel %vm714, %v1936, 0
        %v1962 = vsel %vm714, %v1937, 0
        %v1965 = vsel %vm714, %v1938, 0
        %v1968 = vsel %vm714, %v1939, 0
        %v1971 = vsel %vm714, %v1940, 0
        %v1974 = vsel %vm714, %v1941, 0
        %v1977 = vsel %vm714, %v1942, 0
        %v1980 = vsel %vm714, %v1943, 0
        %v1983 = vsel %vm714, %v1944, 0
        %v1986 = vsel %vm714, %v1945, 0
        %v1989 = vsel %vm714, %v1946, 0
        %v1992 = vsel %vm714, %v1947, 0
        %v1995 = vsel %vm714, %v1948, 0
        %v1998 = vsel %vm763, %v516, 0
        %2000 = vmatprep.subr.bf16.mxu0 0
        %2001 = vmatpush1.bf16.msra.mxu0 %v1998
        %2002 = vmatprep.subr.bf16.mxu0 0
        %2003 = vmatpush1.bf16.msra.mxu0 0
        %2004 = vmatprep.subr.bf16.mxu0 0
        %2005 = vmatpush1.bf16.msra.mxu0 0
        %2006 = vmatprep.subr.bf16.mxu0 0
        %2007 = vmatpush1.bf16.msra.mxu0 0
        %2008 = vmatprep.subr.bf16.mxu0 0
        %2009 = vmatpush1.bf16.msra.mxu0 0
        %2010 = vmatprep.subr.bf16.mxu0 0
        %2011 = vmatpush1.bf16.msra.mxu0 0
        %2012 = vmatprep.subr.bf16.mxu0 0
        %2013 = vmatpush1.bf16.msra.mxu0 0
        %2014 = vmatprep.subr.bf16.mxu0 0
        %2015 = vmatpush1.bf16.msra.mxu0 0
        %2016 = vmatprep.subr.bf16.mxu0 0
        %2017 = vmatpush1.bf16.msra.mxu0 0
        %2018 = vmatprep.subr.bf16.mxu0 0
        %2019 = vmatpush1.bf16.msra.mxu0 0
        %2020 = vmatprep.subr.bf16.mxu0 0
        %2021 = vmatpush1.bf16.msra.mxu0 0
        %2022 = vmatprep.subr.bf16.mxu0 0
        %2023 = vmatpush1.bf16.msra.mxu0 0
        %2024 = vmatprep.subr.bf16.mxu0 0
        %2025 = vmatpush1.bf16.msra.mxu0 0
        %2026 = vmatprep.subr.bf16.mxu0 0
        %2027 = vmatpush1.bf16.msra.mxu0 0
        %2028 = vmatprep.subr.bf16.mxu0 0
        %2029 = vmatpush1.bf16.msra.mxu0 0
        %2030 = vmatprep.subr.bf16.mxu0 0
        %2031 = vmatpush1.bf16.msra.mxu0 0
        %2032 = vmatprep.mubr.bf16.mxu0 0
        %2033 = vmatmul.mubr.bf16.gmra.mrb[0].mxu0 %v1950
        %v2034 = vpop.f32.mrb[0].mxu0
        %v2035 = vadd.f32 0.0, %v2034
        %v2036 = vpop.f32.mrb[0].mxu0
        %v2037 = vpop.f32.mrb[0].mxu0
        %v2038 = vadd.f32 0.0, %v2037
        %v2039 = vpop.f32.mrb[0].mxu0
        %2040 = vmatprep.mubr.bf16.mxu0 0
        %2041 = vmatmul.mubr.bf16.gmra.mrb[0].mxu0 %v1953
        %v2042 = vpop.f32.mrb[0].mxu0
        %v2043 = vadd.f32 0.0, %v2042
        %v2044 = vpop.f32.mrb[0].mxu0
        %v2045 = vpop.f32.mrb[0].mxu0
        %v2046 = vadd.f32 0.0, %v2045
        %v2047 = vpop.f32.mrb[0].mxu0
        %2048 = vmatprep.mubr.bf16.mxu0 0
        %2049 = vmatmul.mubr.bf16.gmra.mrb[0].mxu0 %v1956
        %v2050 = vpop.f32.mrb[0].mxu0
        %v2051 = vadd.f32 0.0, %v2050
        %v2052 = vpop.f32.mrb[0].mxu0
        %v2053 = vpop.f32.mrb[0].mxu0
        %v2054 = vadd.f32 0.0, %v2053
        %v2055 = vpop.f32.mrb[0].mxu0
        %2056 = vmatprep.mubr.bf16.mxu0 0
        %2057 = vmatmul.mubr.bf16.gmra.mrb[0].mxu0 %v1959
        %v2058 = vpop.f32.mrb[0].mxu0
        %v2059 = vadd.f32 0.0, %v2058
        %v2060 = vpop.f32.mrb[0].mxu0
        %v2061 = vpop.f32.mrb[0].mxu0
        %v2062 = vadd.f32 0.0, %v2061
        %v2063 = vpop.f32.mrb[0].mxu0
        %2064 = vmatprep.mubr.bf16.mxu0 0
        %2065 = vmatmul.mubr.bf16.gmra.mrb[0].mxu0 %v1962
        %v2066 = vpop.f32.mrb[0].mxu0
        %v2067 = vadd.f32 0.0, %v2066
        %v2068 = vpop.f32.mrb[0].mxu0
        %v2069 = vpop.f32.mrb[0].mxu0
        %v2070 = vadd.f32 0.0, %v2069
        %v2071 = vpop.f32.mrb[0].mxu0
        %2072 = vmatprep.mubr.bf16.mxu0 0
        %2073 = vmatmul.mubr.bf16.gmra.mrb[0].mxu0 %v1965
        %v2074 = vpop.f32.mrb[0].mxu0
        %v2075 = vadd.f32 0.0, %v2074
        %v2076 = vpop.f32.mrb[0].mxu0
        %v2077 = vpop.f32.mrb[0].mxu0
        %v2078 = vadd.f32 0.0, %v2077
        %v2079 = vpop.f32.mrb[0].mxu0
        %2080 = vmatprep.mubr.bf16.mxu0 0
        %2081 = vmatmul.mubr.bf16.gmra.mrb[0].mxu0 %v1968
        %v2082 = vpop.f32.mrb[0].mxu0
        %v2083 = vadd.f32 0.0, %v2082
        %v2084 = vpop.f32.mrb[0].mxu0
        %v2085 = vpop.f32.mrb[0].mxu0
        %v2086 = vadd.f32 0.0, %v2085
        %v2087 = vpop.f32.mrb[0].mxu0
        %2088 = vmatprep.mubr.bf16.mxu0 0
        %2089 = vmatmul.mubr.bf16.gmra.mrb[0].mxu0 %v1971
        %v2090 = vpop.f32.mrb[0].mxu0
        %v2091 = vadd.f32 0.0, %v2090
        %v2092 = vpop.f32.mrb[0].mxu0
        %v2093 = vpop.f32.mrb[0].mxu0
        %v2094 = vadd.f32 0.0, %v2093
        %v2095 = vpop.f32.mrb[0].mxu0
        %2096 = vmatprep.mubr.bf16.mxu0 0
        %2097 = vmatmul.mubr.bf16.gmra.mrb[0].mxu0 %v1974
        %v2098 = vpop.f32.mrb[0].mxu0
        %v2099 = vadd.f32 0.0, %v2098
        %v2100 = vpop.f32.mrb[0].mxu0
        %v2101 = vpop.f32.mrb[0].mxu0
        %v2102 = vadd.f32 0.0, %v2101
        %v2103 = vpop.f32.mrb[0].mxu0
        %2104 = vmatprep.mubr.bf16.mxu0 0
        %2105 = vmatmul.mubr.bf16.gmra.mrb[0].mxu0 %v1977
        %v2106 = vpop.f32.mrb[0].mxu0
        %v2107 = vadd.f32 0.0, %v2106
        %v2108 = vpop.f32.mrb[0].mxu0
        %v2109 = vpop.f32.mrb[0].mxu0
        %v2110 = vadd.f32 0.0, %v2109
        %v2111 = vpop.f32.mrb[0].mxu0
        %2112 = vmatprep.mubr.bf16.mxu0 0
        %2113 = vmatmul.mubr.bf16.gmra.mrb[0].mxu0 %v1980
        %v2114 = vpop.f32.mrb[0].mxu0
        %v2115 = vadd.f32 0.0, %v2114
        %v2116 = vpop.f32.mrb[0].mxu0
        %v2117 = vpop.f32.mrb[0].mxu0
        %v2118 = vadd.f32 0.0, %v2117
        %v2119 = vpop.f32.mrb[0].mxu0
        %2120 = vmatprep.mubr.bf16.mxu0 0
        %2121 = vmatmul.mubr.bf16.gmra.mrb[0].mxu0 %v1983
        %v2122 = vpop.f32.mrb[0].mxu0
        %v2123 = vadd.f32 0.0, %v2122
        %v2124 = vpop.f32.mrb[0].mxu0
        %v2125 = vpop.f32.mrb[0].mxu0
        %v2126 = vadd.f32 0.0, %v2125
        %v2127 = vpop.f32.mrb[0].mxu0
        %2128 = vmatprep.mubr.bf16.mxu0 0
        %2129 = vmatmul.mubr.bf16.gmra.mrb[0].mxu0 %v1986
        %v2130 = vpop.f32.mrb[0].mxu0
        %v2131 = vadd.f32 0.0, %v2130
        %v2132 = vpop.f32.mrb[0].mxu0
        %v2133 = vpop.f32.mrb[0].mxu0
        %v2134 = vadd.f32 0.0, %v2133
        %v2135 = vpop.f32.mrb[0].mxu0
        %2136 = vmatprep.mubr.bf16.mxu0 0
        %2137 = vmatmul.mubr.bf16.gmra.mrb[0].mxu0 %v1989
        %v2138 = vpop.f32.mrb[0].mxu0
        %v2139 = vadd.f32 0.0, %v2138
        %v2140 = vpop.f32.mrb[0].mxu0
        %v2141 = vpop.f32.mrb[0].mxu0
        %v2142 = vadd.f32 0.0, %v2141
        %v2143 = vpop.f32.mrb[0].mxu0
        %2144 = vmatprep.mubr.bf16.mxu0 0
        %2145 = vmatmul.mubr.bf16.gmra.mrb[0].mxu0 %v1992
        %v2146 = vpop.f32.mrb[0].mxu0
        %v2147 = vadd.f32 0.0, %v2146
        %v2148 = vpop.f32.mrb[0].mxu0
        %v2149 = vpop.f32.mrb[0].mxu0
        %v2150 = vadd.f32 0.0, %v2149
        %v2151 = vpop.f32.mrb[0].mxu0
        %2152 = vmatprep.mubr.bf16.mxu0 0
        %2153 = vmatmul.mubr.bf16.gmra.mrb[0].mxu0 %v1995
        %v2154 = vpop.f32.mrb[0].mxu0
        %v2155 = vadd.f32 0.0, %v2154
        %v2156 = vpop.f32.mrb[0].mxu0
        %v2157 = vpop.f32.mrb[0].mxu0
        %v2158 = vadd.f32 0.0, %v2157
        %v2159 = vpop.f32.mrb[0].mxu0
        %2160 = vdwg.mxu0
        %v2161 = vadd.f32 %v1741, %v2035
        %v2162 = vadd.f32 %v1742, %v2038
        %v2163 = vadd.f32 %v1743, %v2043
        %v2164 = vadd.f32 %v1744, %v2046
        %v2165 = vadd.f32 %v1745, %v2051
        %v2166 = vadd.f32 %v1746, %v2054
        %v2167 = vadd.f32 %v1747, %v2059
        %v2168 = vadd.f32 %v1748, %v2062
        %v2169 = vadd.f32 %v1749, %v2067
        %v2170 = vadd.f32 %v1750, %v2070
        %v2171 = vadd.f32 %v1751, %v2075
        %v2172 = vadd.f32 %v1752, %v2078
        %v2173 = vadd.f32 %v1753, %v2083
        %v2174 = vadd.f32 %v1754, %v2086
        %v2175 = vadd.f32 %v1755, %v2091
        %v2176 = vadd.f32 %v1756, %v2094
        %v2177 = vadd.f32 %v1757, %v2099
        %v2178 = vadd.f32 %v1758, %v2102
        %v2179 = vadd.f32 %v1759, %v2107
        %v2180 = vadd.f32 %v1760, %v2110
        %v2181 = vadd.f32 %v1761, %v2115
        %v2182 = vadd.f32 %v1762, %v2118
        %v2183 = vadd.f32 %v1763, %v2123
        %v2184 = vadd.f32 %v1764, %v2126
        %v2185 = vadd.f32 %v1765, %v2131
        %v2186 = vadd.f32 %v1766, %v2134
        %v2187 = vadd.f32 %v1767, %v2139
        %v2188 = vadd.f32 %v1768, %v2142
        %v2189 = vadd.f32 %v1769, %v2147
        %v2190 = vadd.f32 %v1770, %v2150
        %v2191 = vadd.f32 %v1771, %v2155
        %v2192 = vadd.f32 %v1772, %v2158
        %v2193 = vrot.slane %v416, 2
        %v2194 = vrot.slane %v417, 2
        %v2195 = vsel %vm1140, %v2193, %v2194
        %v2196 = vrot.slane %v418, 2
        %v2197 = vsel %vm1140, %v2194, %v2196
        %v2198 = vrot.slane %v419, 2
        %v2199 = vrot.slane %v420, 2
        %v2200 = vsel %vm1140, %v2198, %v2199
        %v2201 = vrot.slane %v421, 2
        %v2202 = vsel %vm1140, %v2199, %v2201
        %v2203 = vrot.slane %v422, 2
        %v2204 = vrot.slane %v423, 2
        %v2205 = vsel %vm1140, %v2203, %v2204
        %v2206 = vrot.slane %v424, 2
        %v2207 = vsel %vm1140, %v2204, %v2206
        %v2208 = vrot.slane %v425, 2
        %v2209 = vrot.slane %v426, 2
        %v2210 = vsel %vm1140, %v2208, %v2209
        %v2211 = vrot.slane %v427, 2
        %v2212 = vsel %vm1140, %v2209, %v2211
        %v2213 = vrot.slane %v428, 2
        %v2214 = vrot.slane %v429, 2
        %v2215 = vsel %vm1140, %v2213, %v2214
        %v2216 = vrot.slane %v430, 2
        %v2217 = vsel %vm1140, %v2214, %v2216
        %v2218 = vrot.slane %v431, 2
        %v2219 = vrot.slane %v432, 2
        %v2220 = vsel %vm1140, %v2218, %v2219
        %v2221 = vrot.slane %v433, 2
        %v2222 = vsel %vm1140, %v2219, %v2221
        %v2223 = vrot.slane %v434, 2
        %v2224 = vrot.slane %v435, 2
        %v2225 = vsel %vm1140, %v2223, %v2224
        %v2226 = vrot.slane %v436, 2
        %v2227 = vsel %vm1140, %v2224, %v2226
        %v2228 = vrot.slane %v437, 2
        %v2229 = vrot.slane %v438, 2
        %v2230 = vsel %vm1140, %v2228, %v2229
        %v2231 = vrot.slane %v439, 2
        %v2232 = vsel %vm1140, %v2229, %v2231
        %v2233 = vrot.slane %v440, 2
        %v2234 = vrot.slane %v441, 2
        %v2235 = vsel %vm1140, %v2233, %v2234
        %v2236 = vrot.slane %v442, 2
        %v2237 = vsel %vm1140, %v2234, %v2236
        %v2238 = vrot.slane %v443, 2
        %v2239 = vrot.slane %v444, 2
        %v2240 = vsel %vm1140, %v2238, %v2239
        %v2241 = vrot.slane %v445, 2
        %v2242 = vsel %vm1140, %v2239, %v2241
        %v2243 = vrot.slane %v446, 2
        %v2244 = vrot.slane %v447, 2
        %v2245 = vsel %vm1140, %v2243, %v2244
        %v2246 = vrot.slane %v448, 2
        %v2247 = vsel %vm1140, %v2244, %v2246
        %v2248 = vrot.slane %v449, 2
        %v2249 = vrot.slane %v450, 2
        %v2250 = vsel %vm1140, %v2248, %v2249
        %v2251 = vrot.slane %v451, 2
        %v2252 = vsel %vm1140, %v2249, %v2251
        %v2253 = vrot.slane %v452, 2
        %v2254 = vrot.slane %v453, 2
        %v2255 = vsel %vm1140, %v2253, %v2254
        %v2256 = vrot.slane %v454, 2
        %v2257 = vsel %vm1140, %v2254, %v2256
        %v2258 = vrot.slane %v455, 2
        %v2259 = vrot.slane %v456, 2
        %v2260 = vsel %vm1140, %v2258, %v2259
        %v2261 = vrot.slane %v457, 2
        %v2262 = vsel %vm1140, %v2259, %v2261
        %v2263 = vrot.slane %v458, 2
        %v2264 = vrot.slane %v459, 2
        %v2265 = vsel %vm1140, %v2263, %v2264
        %v2266 = vrot.slane %v460, 2
        %v2267 = vsel %vm1140, %v2264, %v2266
        %v2268 = vrot.slane %v461, 2
        %v2269 = vrot.slane %v462, 2
        %v2270 = vsel %vm1140, %v2268, %v2269
        %v2271 = vrot.slane %v463, 2
        %v2272 = vsel %vm1140, %v2269, %v2271
        %v2305 = vpack.c.bf16 %v2197, %v2195
        %v2306 = vpack.c.bf16 %v2202, %v2200
        %v2307 = vpack.c.bf16 %v2207, %v2205
        %v2308 = vpack.c.bf16 %v2212, %v2210
        %v2309 = vpack.c.bf16 %v2217, %v2215
        %v2310 = vpack.c.bf16 %v2222, %v2220
        %v2311 = vpack.c.bf16 %v2227, %v2225
        %v2312 = vpack.c.bf16 %v2232, %v2230
        %v2313 = vpack.c.bf16 %v2237, %v2235
        %v2314 = vpack.c.bf16 %v2242, %v2240
        %v2315 = vpack.c.bf16 %v2247, %v2245
        %v2316 = vpack.c.bf16 %v2252, %v2250
        %v2317 = vpack.c.bf16 %v2257, %v2255
        %v2318 = vpack.c.bf16 %v2262, %v2260
        %v2319 = vpack.c.bf16 %v2267, %v2265
        %v2320 = vpack.c.bf16 %v2272, %v2270
        %v2322 = vsel %vm714, %v2305, 0
        %v2325 = vsel %vm714, %v2306, 0
        %v2328 = vsel %vm714, %v2307, 0
        %v2331 = vsel %vm714, %v2308, 0
        %v2334 = vsel %vm714, %v2309, 0
        %v2337 = vsel %vm714, %v2310, 0
        %v2340 = vsel %vm714, %v2311, 0
        %v2343 = vsel %vm714, %v2312, 0
        %v2346 = vsel %vm714, %v2313, 0
        %v2349 = vsel %vm714, %v2314, 0
        %v2352 = vsel %vm714, %v2315, 0
        %v2355 = vsel %vm714, %v2316, 0
        %v2358 = vsel %vm714, %v2317, 0
        %v2361 = vsel %vm714, %v2318, 0
        %v2364 = vsel %vm714, %v2319, 0
        %v2367 = vsel %vm714, %v2320, 0
        %v2370 = vsel %vm763, %v517, 0
        %2372 = vmatprep.subr.bf16.mxu0 0
        %2373 = vmatpush1.bf16.msra.mxu0 %v2370
        %2374 = vmatprep.subr.bf16.mxu0 0
        %2375 = vmatpush1.bf16.msra.mxu0 0
        %2376 = vmatprep.subr.bf16.mxu0 0
        %2377 = vmatpush1.bf16.msra.mxu0 0
        %2378 = vmatprep.subr.bf16.mxu0 0
        %2379 = vmatpush1.bf16.msra.mxu0 0
        %2380 = vmatprep.subr.bf16.mxu0 0
        %2381 = vmatpush1.bf16.msra.mxu0 0
        %2382 = vmatprep.subr.bf16.mxu0 0
        %2383 = vmatpush1.bf16.msra.mxu0 0
        %2384 = vmatprep.subr.bf16.mxu0 0
        %2385 = vmatpush1.bf16.msra.mxu0 0
        %2386 = vmatprep.subr.bf16.mxu0 0
        %2387 = vmatpush1.bf16.msra.mxu0 0
        %2388 = vmatprep.subr.bf16.mxu0 0
        %2389 = vmatpush1.bf16.msra.mxu0 0
        %2390 = vmatprep.subr.bf16.mxu0 0
        %2391 = vmatpush1.bf16.msra.mxu0 0
        %2392 = vmatprep.subr.bf16.mxu0 0
        %2393 = vmatpush1.bf16.msra.mxu0 0
        %2394 = vmatprep.subr.bf16.mxu0 0
        %2395 = vmatpush1.bf16.msra.mxu0 0
        %2396 = vmatprep.subr.bf16.mxu0 0
        %2397 = vmatpush1.bf16.msra.mxu0 0
        %2398 = vmatprep.subr.bf16.mxu0 0
        %2399 = vmatpush1.bf16.msra.mxu0 0
        %2400 = vmatprep.subr.bf16.mxu0 0
        %2401 = vmatpush1.bf16.msra.mxu0 0
        %2402 = vmatprep.subr.bf16.mxu0 0
        %2403 = vmatpush1.bf16.msra.mxu0 0
        %2404 = vmatprep.mubr.bf16.mxu0 0
        %2405 = vmatmul.mubr.bf16.gmra.mrb[0].mxu0 %v2322
        %v2406 = vpop.f32.mrb[0].mxu0
        %v2407 = vadd.f32 0.0, %v2406
        %v2408 = vpop.f32.mrb[0].mxu0
        %v2409 = vpop.f32.mrb[0].mxu0
        %v2410 = vadd.f32 0.0, %v2409
        %v2411 = vpop.f32.mrb[0].mxu0
        %2412 = vmatprep.mubr.bf16.mxu0 0
        %2413 = vmatmul.mubr.bf16.gmra.mrb[0].mxu0 %v2325
        %v2414 = vpop.f32.mrb[0].mxu0
        %v2415 = vadd.f32 0.0, %v2414
        %v2416 = vpop.f32.mrb[0].mxu0
        %v2417 = vpop.f32.mrb[0].mxu0
        %v2418 = vadd.f32 0.0, %v2417
        %v2419 = vpop.f32.mrb[0].mxu0
        %2420 = vmatprep.mubr.bf16.mxu0 0
        %2421 = vmatmul.mubr.bf16.gmra.mrb[0].mxu0 %v2328
        %v2422 = vpop.f32.mrb[0].mxu0
        %v2423 = vadd.f32 0.0, %v2422
        %v2424 = vpop.f32.mrb[0].mxu0
        %v2425 = vpop.f32.mrb[0].mxu0
        %v2426 = vadd.f32 0.0, %v2425
        %v2427 = vpop.f32.mrb[0].mxu0
        %2428 = vmatprep.mubr.bf16.mxu0 0
        %2429 = vmatmul.mubr.bf16.gmra.mrb[0].mxu0 %v2331
        %v2430 = vpop.f32.mrb[0].mxu0
        %v2431 = vadd.f32 0.0, %v2430
        %v2432 = vpop.f32.mrb[0].mxu0
        %v2433 = vpop.f32.mrb[0].mxu0
        %v2434 = vadd.f32 0.0, %v2433
        %v2435 = vpop.f32.mrb[0].mxu0
        %2436 = vmatprep.mubr.bf16.mxu0 0
        %2437 = vmatmul.mubr.bf16.gmra.mrb[0].mxu0 %v2334
        %v2438 = vpop.f32.mrb[0].mxu0
        %v2439 = vadd.f32 0.0, %v2438
        %v2440 = vpop.f32.mrb[0].mxu0
        %v2441 = vpop.f32.mrb[0].mxu0
        %v2442 = vadd.f32 0.0, %v2441
        %v2443 = vpop.f32.mrb[0].mxu0
        %2444 = vmatprep.mubr.bf16.mxu0 0
        %2445 = vmatmul.mubr.bf16.gmra.mrb[0].mxu0 %v2337
        %v2446 = vpop.f32.mrb[0].mxu0
        %v2447 = vadd.f32 0.0, %v2446
        %v2448 = vpop.f32.mrb[0].mxu0
        %v2449 = vpop.f32.mrb[0].mxu0
        %v2450 = vadd.f32 0.0, %v2449
        %v2451 = vpop.f32.mrb[0].mxu0
        %2452 = vmatprep.mubr.bf16.mxu0 0
        %2453 = vmatmul.mubr.bf16.gmra.mrb[0].mxu0 %v2340
        %v2454 = vpop.f32.mrb[0].mxu0
        %v2455 = vadd.f32 0.0, %v2454
        %v2456 = vpop.f32.mrb[0].mxu0
        %v2457 = vpop.f32.mrb[0].mxu0
        %v2458 = vadd.f32 0.0, %v2457
        %v2459 = vpop.f32.mrb[0].mxu0
        %2460 = vmatprep.mubr.bf16.mxu0 0
        %2461 = vmatmul.mubr.bf16.gmra.mrb[0].mxu0 %v2343
        %v2462 = vpop.f32.mrb[0].mxu0
        %v2463 = vadd.f32 0.0, %v2462
        %v2464 = vpop.f32.mrb[0].mxu0
        %v2465 = vpop.f32.mrb[0].mxu0
        %v2466 = vadd.f32 0.0, %v2465
        %v2467 = vpop.f32.mrb[0].mxu0
        %2468 = vmatprep.mubr.bf16.mxu0 0
        %2469 = vmatmul.mubr.bf16.gmra.mrb[0].mxu0 %v2346
        %v2470 = vpop.f32.mrb[0].mxu0
        %v2471 = vadd.f32 0.0, %v2470
        %v2472 = vpop.f32.mrb[0].mxu0
        %v2473 = vpop.f32.mrb[0].mxu0
        %v2474 = vadd.f32 0.0, %v2473
        %v2475 = vpop.f32.mrb[0].mxu0
        %2476 = vmatprep.mubr.bf16.mxu0 0
        %2477 = vmatmul.mubr.bf16.gmra.mrb[0].mxu0 %v2349
        %v2478 = vpop.f32.mrb[0].mxu0
        %v2479 = vadd.f32 0.0, %v2478
        %v2480 = vpop.f32.mrb[0].mxu0
        %v2481 = vpop.f32.mrb[0].mxu0
        %v2482 = vadd.f32 0.0, %v2481
        %v2483 = vpop.f32.mrb[0].mxu0
        %2484 = vmatprep.mubr.bf16.mxu0 0
        %2485 = vmatmul.mubr.bf16.gmra.mrb[0].mxu0 %v2352
        %v2486 = vpop.f32.mrb[0].mxu0
        %v2487 = vadd.f32 0.0, %v2486
        %v2488 = vpop.f32.mrb[0].mxu0
        %v2489 = vpop.f32.mrb[0].mxu0
        %v2490 = vadd.f32 0.0, %v2489
        %v2491 = vpop.f32.mrb[0].mxu0
        %2492 = vmatprep.mubr.bf16.mxu0 0
        %2493 = vmatmul.mubr.bf16.gmra.mrb[0].mxu0 %v2355
        %v2494 = vpop.f32.mrb[0].mxu0
        %v2495 = vadd.f32 0.0, %v2494
        %v2496 = vpop.f32.mrb[0].mxu0
        %v2497 = vpop.f32.mrb[0].mxu0
        %v2498 = vadd.f32 0.0, %v2497
        %v2499 = vpop.f32.mrb[0].mxu0
        %2500 = vmatprep.mubr.bf16.mxu0 0
        %2501 = vmatmul.mubr.bf16.gmra.mrb[0].mxu0 %v2358
        %v2502 = vpop.f32.mrb[0].mxu0
        %v2503 = vadd.f32 0.0, %v2502
        %v2504 = vpop.f32.mrb[0].mxu0
        %v2505 = vpop.f32.mrb[0].mxu0
        %v2506 = vadd.f32 0.0, %v2505
        %v2507 = vpop.f32.mrb[0].mxu0
        %2508 = vmatprep.mubr.bf16.mxu0 0
        %2509 = vmatmul.mubr.bf16.gmra.mrb[0].mxu0 %v2361
        %v2510 = vpop.f32.mrb[0].mxu0
        %v2511 = vadd.f32 0.0, %v2510
        %v2512 = vpop.f32.mrb[0].mxu0
        %v2513 = vpop.f32.mrb[0].mxu0
        %v2514 = vadd.f32 0.0, %v2513
        %v2515 = vpop.f32.mrb[0].mxu0
        %2516 = vmatprep.mubr.bf16.mxu0 0
        %2517 = vmatmul.mubr.bf16.gmra.mrb[0].mxu0 %v2364
        %v2518 = vpop.f32.mrb[0].mxu0
        %v2519 = vadd.f32 0.0, %v2518
        %v2520 = vpop.f32.mrb[0].mxu0
        %v2521 = vpop.f32.mrb[0].mxu0
        %v2522 = vadd.f32 0.0, %v2521
        %v2523 = vpop.f32.mrb[0].mxu0
        %2524 = vmatprep.mubr.bf16.mxu0 0
        %2525 = vmatmul.mubr.bf16.gmra.mrb[0].mxu0 %v2367
        %v2526 = vpop.f32.mrb[0].mxu0
        %v2527 = vadd.f32 0.0, %v2526
        %v2528 = vpop.f32.mrb[0].mxu0
        %v2529 = vpop.f32.mrb[0].mxu0
        %v2530 = vadd.f32 0.0, %v2529
        %v2531 = vpop.f32.mrb[0].mxu0
        %2532 = vdwg.mxu0
        %v2533 = vadd.f32 %v2161, %v2407
        %v2534 = vadd.f32 %v2162, %v2410
        %v2535 = vadd.f32 %v2163, %v2415
        %v2536 = vadd.f32 %v2164, %v2418
        %v2537 = vadd.f32 %v2165, %v2423
        %v2538 = vadd.f32 %v2166, %v2426
        %v2539 = vadd.f32 %v2167, %v2431
        %v2540 = vadd.f32 %v2168, %v2434
        %v2541 = vadd.f32 %v2169, %v2439
        %v2542 = vadd.f32 %v2170, %v2442
        %v2543 = vadd.f32 %v2171, %v2447
        %v2544 = vadd.f32 %v2172, %v2450
        %v2545 = vadd.f32 %v2173, %v2455
        %v2546 = vadd.f32 %v2174, %v2458
        %v2547 = vadd.f32 %v2175, %v2463
        %v2548 = vadd.f32 %v2176, %v2466
        %v2549 = vadd.f32 %v2177, %v2471
        %v2550 = vadd.f32 %v2178, %v2474
        %v2551 = vadd.f32 %v2179, %v2479
        %v2552 = vadd.f32 %v2180, %v2482
        %v2553 = vadd.f32 %v2181, %v2487
        %v2554 = vadd.f32 %v2182, %v2490
        %v2555 = vadd.f32 %v2183, %v2495
        %v2556 = vadd.f32 %v2184, %v2498
        %v2557 = vadd.f32 %v2185, %v2503
        %v2558 = vadd.f32 %v2186, %v2506
        %v2559 = vadd.f32 %v2187, %v2511
        %v2560 = vadd.f32 %v2188, %v2514
        %v2561 = vadd.f32 %v2189, %v2519
        %v2562 = vadd.f32 %v2190, %v2522
        %v2563 = vadd.f32 %v2191, %v2527
        %v2564 = vadd.f32 %v2192, %v2530
        %v2565 = vpack.c.bf16 %v465, %v464
        %v2566 = vpack.c.bf16 %v468, %v467
        %v2567 = vpack.c.bf16 %v471, %v470
        %v2568 = vpack.c.bf16 %v474, %v473
        %v2569 = vpack.c.bf16 %v477, %v476
        %v2570 = vpack.c.bf16 %v480, %v479
        %v2571 = vpack.c.bf16 %v483, %v482
        %v2572 = vpack.c.bf16 %v486, %v485
        %v2573 = vpack.c.bf16 %v489, %v488
        %v2574 = vpack.c.bf16 %v492, %v491
        %v2575 = vpack.c.bf16 %v495, %v494
        %v2576 = vpack.c.bf16 %v498, %v497
        %v2577 = vpack.c.bf16 %v501, %v500
        %v2578 = vpack.c.bf16 %v504, %v503
        %v2579 = vpack.c.bf16 %v507, %v506
        %v2580 = vpack.c.bf16 %v510, %v509
        %v2582 = vsel %vm714, %v2565, 0
        %v2585 = vsel %vm714, %v2566, 0
        %v2588 = vsel %vm714, %v2567, 0
        %v2591 = vsel %vm714, %v2568, 0
        %v2594 = vsel %vm714, %v2569, 0
        %v2597 = vsel %vm714, %v2570, 0
        %v2600 = vsel %vm714, %v2571, 0
        %v2603 = vsel %vm714, %v2572, 0
        %v2606 = vsel %vm714, %v2573, 0
        %v2609 = vsel %vm714, %v2574, 0
        %v2612 = vsel %vm714, %v2575, 0
        %v2615 = vsel %vm714, %v2576, 0
        %v2618 = vsel %vm714, %v2577, 0
        %v2621 = vsel %vm714, %v2578, 0
        %v2624 = vsel %vm714, %v2579, 0
        %v2627 = vsel %vm714, %v2580, 0
        %v2630 = vsel %vm763, %v518, 0
        %2632 = vmatprep.subr.bf16.mxu0 0
        %2633 = vmatpush1.bf16.msra.mxu0 %v2630
        %2634 = vmatprep.subr.bf16.mxu0 0
        %2635 = vmatpush1.bf16.msra.mxu0 0
        %2636 = vmatprep.subr.bf16.mxu0 0
        %2637 = vmatpush1.bf16.msra.mxu0 0
        %2638 = vmatprep.subr.bf16.mxu0 0
        %2639 = vmatpush1.bf16.msra.mxu0 0
        %2640 = vmatprep.subr.bf16.mxu0 0
        %2641 = vmatpush1.bf16.msra.mxu0 0
        %2642 = vmatprep.subr.bf16.mxu0 0
        %2643 = vmatpush1.bf16.msra.mxu0 0
        %2644 = vmatprep.subr.bf16.mxu0 0
        %2645 = vmatpush1.bf16.msra.mxu0 0
        %2646 = vmatprep.subr.bf16.mxu0 0
        %2647 = vmatpush1.bf16.msra.mxu0 0
        %2648 = vmatprep.subr.bf16.mxu0 0
        %2649 = vmatpush1.bf16.msra.mxu0 0
        %2650 = vmatprep.subr.bf16.mxu0 0
        %2651 = vmatpush1.bf16.msra.mxu0 0
        %2652 = vmatprep.subr.bf16.mxu0 0
        %2653 = vmatpush1.bf16.msra.mxu0 0
        %2654 = vmatprep.subr.bf16.mxu0 0
        %2655 = vmatpush1.bf16.msra.mxu0 0
        %2656 = vmatprep.subr.bf16.mxu0 0
        %2657 = vmatpush1.bf16.msra.mxu0 0
        %2658 = vmatprep.subr.bf16.mxu0 0
        %2659 = vmatpush1.bf16.msra.mxu0 0
        %2660 = vmatprep.subr.bf16.mxu0 0
        %2661 = vmatpush1.bf16.msra.mxu0 0
        %2662 = vmatprep.subr.bf16.mxu0 0
        %2663 = vmatpush1.bf16.msra.mxu0 0
        %2664 = vmatprep.mubr.bf16.mxu0 0
        %2665 = vmatmul.mubr.bf16.gmra.mrb[0].mxu0 %v2582
        %v2666 = vpop.f32.mrb[0].mxu0
        %v2667 = vadd.f32 0.0, %v2666
        %v2668 = vpop.f32.mrb[0].mxu0
        %v2669 = vpop.f32.mrb[0].mxu0
        %v2670 = vadd.f32 0.0, %v2669
        %v2671 = vpop.f32.mrb[0].mxu0
        %2672 = vmatprep.mubr.bf16.mxu0 0
        %2673 = vmatmul.mubr.bf16.gmra.mrb[0].mxu0 %v2585
        %v2674 = vpop.f32.mrb[0].mxu0
        %v2675 = vadd.f32 0.0, %v2674
        %v2676 = vpop.f32.mrb[0].mxu0
        %v2677 = vpop.f32.mrb[0].mxu0
        %v2678 = vadd.f32 0.0, %v2677
        %v2679 = vpop.f32.mrb[0].mxu0
        %2680 = vmatprep.mubr.bf16.mxu0 0
        %2681 = vmatmul.mubr.bf16.gmra.mrb[0].mxu0 %v2588
        %v2682 = vpop.f32.mrb[0].mxu0
        %v2683 = vadd.f32 0.0, %v2682
        %v2684 = vpop.f32.mrb[0].mxu0
        %v2685 = vpop.f32.mrb[0].mxu0
        %v2686 = vadd.f32 0.0, %v2685
        %v2687 = vpop.f32.mrb[0].mxu0
        %2688 = vmatprep.mubr.bf16.mxu0 0
        %2689 = vmatmul.mubr.bf16.gmra.mrb[0].mxu0 %v2591
        %v2690 = vpop.f32.mrb[0].mxu0
        %v2691 = vadd.f32 0.0, %v2690
        %v2692 = vpop.f32.mrb[0].mxu0
        %v2693 = vpop.f32.mrb[0].mxu0
        %v2694 = vadd.f32 0.0, %v2693
        %v2695 = vpop.f32.mrb[0].mxu0
        %2696 = vmatprep.mubr.bf16.mxu0 0
        %2697 = vmatmul.mubr.bf16.gmra.mrb[0].mxu0 %v2594
        %v2698 = vpop.f32.mrb[0].mxu0
        %v2699 = vadd.f32 0.0, %v2698
        %v2700 = vpop.f32.mrb[0].mxu0
        %v2701 = vpop.f32.mrb[0].mxu0
        %v2702 = vadd.f32 0.0, %v2701
        %v2703 = vpop.f32.mrb[0].mxu0
        %2704 = vmatprep.mubr.bf16.mxu0 0
        %2705 = vmatmul.mubr.bf16.gmra.mrb[0].mxu0 %v2597
        %v2706 = vpop.f32.mrb[0].mxu0
        %v2707 = vadd.f32 0.0, %v2706
        %v2708 = vpop.f32.mrb[0].mxu0
        %v2709 = vpop.f32.mrb[0].mxu0
        %v2710 = vadd.f32 0.0, %v2709
        %v2711 = vpop.f32.mrb[0].mxu0
        %2712 = vmatprep.mubr.bf16.mxu0 0
        %2713 = vmatmul.mubr.bf16.gmra.mrb[0].mxu0 %v2600
        %v2714 = vpop.f32.mrb[0].mxu0
        %v2715 = vadd.f32 0.0, %v2714
        %v2716 = vpop.f32.mrb[0].mxu0
        %v2717 = vpop.f32.mrb[0].mxu0
        %v2718 = vadd.f32 0.0, %v2717
        %v2719 = vpop.f32.mrb[0].mxu0
        %2720 = vmatprep.mubr.bf16.mxu0 0
        %2721 = vmatmul.mubr.bf16.gmra.mrb[0].mxu0 %v2603
        %v2722 = vpop.f32.mrb[0].mxu0
        %v2723 = vadd.f32 0.0, %v2722
        %v2724 = vpop.f32.mrb[0].mxu0
        %v2725 = vpop.f32.mrb[0].mxu0
        %v2726 = vadd.f32 0.0, %v2725
        %v2727 = vpop.f32.mrb[0].mxu0
        %2728 = vmatprep.mubr.bf16.mxu0 0
        %2729 = vmatmul.mubr.bf16.gmra.mrb[0].mxu0 %v2606
        %v2730 = vpop.f32.mrb[0].mxu0
        %v2731 = vadd.f32 0.0, %v2730
        %v2732 = vpop.f32.mrb[0].mxu0
        %v2733 = vpop.f32.mrb[0].mxu0
        %v2734 = vadd.f32 0.0, %v2733
        %v2735 = vpop.f32.mrb[0].mxu0
        %2736 = vmatprep.mubr.bf16.mxu0 0
        %2737 = vmatmul.mubr.bf16.gmra.mrb[0].mxu0 %v2609
        %v2738 = vpop.f32.mrb[0].mxu0
        %v2739 = vadd.f32 0.0, %v2738
        %v2740 = vpop.f32.mrb[0].mxu0
        %v2741 = vpop.f32.mrb[0].mxu0
        %v2742 = vadd.f32 0.0, %v2741
        %v2743 = vpop.f32.mrb[0].mxu0
        %2744 = vmatprep.mubr.bf16.mxu0 0
        %2745 = vmatmul.mubr.bf16.gmra.mrb[0].mxu0 %v2612
        %v2746 = vpop.f32.mrb[0].mxu0
        %v2747 = vadd.f32 0.0, %v2746
        %v2748 = vpop.f32.mrb[0].mxu0
        %v2749 = vpop.f32.mrb[0].mxu0
        %v2750 = vadd.f32 0.0, %v2749
        %v2751 = vpop.f32.mrb[0].mxu0
        %2752 = vmatprep.mubr.bf16.mxu0 0
        %2753 = vmatmul.mubr.bf16.gmra.mrb[0].mxu0 %v2615
        %v2754 = vpop.f32.mrb[0].mxu0
        %v2755 = vadd.f32 0.0, %v2754
        %v2756 = vpop.f32.mrb[0].mxu0
        %v2757 = vpop.f32.mrb[0].mxu0
        %v2758 = vadd.f32 0.0, %v2757
        %v2759 = vpop.f32.mrb[0].mxu0
        %2760 = vmatprep.mubr.bf16.mxu0 0
        %2761 = vmatmul.mubr.bf16.gmra.mrb[0].mxu0 %v2618
        %v2762 = vpop.f32.mrb[0].mxu0
        %v2763 = vadd.f32 0.0, %v2762
        %v2764 = vpop.f32.mrb[0].mxu0
        %v2765 = vpop.f32.mrb[0].mxu0
        %v2766 = vadd.f32 0.0, %v2765
        %v2767 = vpop.f32.mrb[0].mxu0
        %2768 = vmatprep.mubr.bf16.mxu0 0
        %2769 = vmatmul.mubr.bf16.gmra.mrb[0].mxu0 %v2621
        %v2770 = vpop.f32.mrb[0].mxu0
        %v2771 = vadd.f32 0.0, %v2770
        %v2772 = vpop.f32.mrb[0].mxu0
        %v2773 = vpop.f32.mrb[0].mxu0
        %v2774 = vadd.f32 0.0, %v2773
        %v2775 = vpop.f32.mrb[0].mxu0
        %2776 = vmatprep.mubr.bf16.mxu0 0
        %2777 = vmatmul.mubr.bf16.gmra.mrb[0].mxu0 %v2624
        %v2778 = vpop.f32.mrb[0].mxu0
        %v2779 = vadd.f32 0.0, %v2778
        %v2780 = vpop.f32.mrb[0].mxu0
        %v2781 = vpop.f32.mrb[0].mxu0
        %v2782 = vadd.f32 0.0, %v2781
        %v2783 = vpop.f32.mrb[0].mxu0
        %2784 = vmatprep.mubr.bf16.mxu0 0
        %2785 = vmatmul.mubr.bf16.gmra.mrb[0].mxu0 %v2627
        %v2786 = vpop.f32.mrb[0].mxu0
        %v2787 = vadd.f32 0.0, %v2786
        %v2788 = vpop.f32.mrb[0].mxu0
        %v2789 = vpop.f32.mrb[0].mxu0
        %v2790 = vadd.f32 0.0, %v2789
        %v2791 = vpop.f32.mrb[0].mxu0
        %2792 = vdwg.mxu0
        %v2793 = vadd.f32 %v2533, %v2667
        %v2794 = vadd.f32 %v2534, %v2670
        %v2795 = vadd.f32 %v2535, %v2675
        %v2796 = vadd.f32 %v2536, %v2678
        %v2797 = vadd.f32 %v2537, %v2683
        %v2798 = vadd.f32 %v2538, %v2686
        %v2799 = vadd.f32 %v2539, %v2691
        %v2800 = vadd.f32 %v2540, %v2694
        %v2801 = vadd.f32 %v2541, %v2699
        %v2802 = vadd.f32 %v2542, %v2702
        %v2803 = vadd.f32 %v2543, %v2707
        %v2804 = vadd.f32 %v2544, %v2710
        %v2805 = vadd.f32 %v2545, %v2715
        %v2806 = vadd.f32 %v2546, %v2718
        %v2807 = vadd.f32 %v2547, %v2723
        %v2808 = vadd.f32 %v2548, %v2726
        %v2809 = vadd.f32 %v2549, %v2731
        %v2810 = vadd.f32 %v2550, %v2734
        %v2811 = vadd.f32 %v2551, %v2739
        %v2812 = vadd.f32 %v2552, %v2742
        %v2813 = vadd.f32 %v2553, %v2747
        %v2814 = vadd.f32 %v2554, %v2750
        %v2815 = vadd.f32 %v2555, %v2755
        %v2816 = vadd.f32 %v2556, %v2758
        %v2817 = vadd.f32 %v2557, %v2763
        %v2818 = vadd.f32 %v2558, %v2766
        %v2819 = vadd.f32 %v2559, %v2771
        %v2820 = vadd.f32 %v2560, %v2774
        %v2821 = vadd.f32 %v2561, %v2779
        %v2822 = vadd.f32 %v2562, %v2782
        %v2823 = vadd.f32 %v2563, %v2787
        %v2824 = vadd.f32 %v2564, %v2790
        %v2873 = vrot.slane %v464, 1
        %v2874 = vrot.slane %v465, 1
        %v2875 = vsel %vm585, %v2873, %v2874
        %v2876 = vrot.slane %v466, 1
        %v2877 = vsel %vm585, %v2874, %v2876
        %v2878 = vrot.slane %v467, 1
        %v2879 = vrot.slane %v468, 1
        %v2880 = vsel %vm585, %v2878, %v2879
        %v2881 = vrot.slane %v469, 1
        %v2882 = vsel %vm585, %v2879, %v2881
        %v2883 = vrot.slane %v470, 1
        %v2884 = vrot.slane %v471, 1
        %v2885 = vsel %vm585, %v2883, %v2884
        %v2886 = vrot.slane %v472, 1
        %v2887 = vsel %vm585, %v2884, %v2886
        %v2888 = vrot.slane %v473, 1
        %v2889 = vrot.slane %v474, 1
        %v2890 = vsel %vm585, %v2888, %v2889
        %v2891 = vrot.slane %v475, 1
        %v2892 = vsel %vm585, %v2889, %v2891
        %v2893 = vrot.slane %v476, 1
        %v2894 = vrot.slane %v477, 1
        %v2895 = vsel %vm585, %v2893, %v2894
        %v2896 = vrot.slane %v478, 1
        %v2897 = vsel %vm585, %v2894, %v2896
        %v2898 = vrot.slane %v479, 1
        %v2899 = vrot.slane %v480, 1
        %v2900 = vsel %vm585, %v2898, %v2899
        %v2901 = vrot.slane %v481, 1
        %v2902 = vsel %vm585, %v2899, %v2901
        %v2903 = vrot.slane %v482, 1
        %v2904 = vrot.slane %v483, 1
        %v2905 = vsel %vm585, %v2903, %v2904
        %v2906 = vrot.slane %v484, 1
        %v2907 = vsel %vm585, %v2904, %v2906
        %v2908 = vrot.slane %v485, 1
        %v2909 = vrot.slane %v486, 1
        %v2910 = vsel %vm585, %v2908, %v2909
        %v2911 = vrot.slane %v487, 1
        %v2912 = vsel %vm585, %v2909, %v2911
        %v2913 = vrot.slane %v488, 1
        %v2914 = vrot.slane %v489, 1
        %v2915 = vsel %vm585, %v2913, %v2914
        %v2916 = vrot.slane %v490, 1
        %v2917 = vsel %vm585, %v2914, %v2916
        %v2918 = vrot.slane %v491, 1
        %v2919 = vrot.slane %v492, 1
        %v2920 = vsel %vm585, %v2918, %v2919
        %v2921 = vrot.slane %v493, 1
        %v2922 = vsel %vm585, %v2919, %v2921
        %v2923 = vrot.slane %v494, 1
        %v2924 = vrot.slane %v495, 1
        %v2925 = vsel %vm585, %v2923, %v2924
        %v2926 = vrot.slane %v496, 1
        %v2927 = vsel %vm585, %v2924, %v2926
        %v2928 = vrot.slane %v497, 1
        %v2929 = vrot.slane %v498, 1
        %v2930 = vsel %vm585, %v2928, %v2929
        %v2931 = vrot.slane %v499, 1
        %v2932 = vsel %vm585, %v2929, %v2931
        %v2933 = vrot.slane %v500, 1
        %v2934 = vrot.slane %v501, 1
        %v2935 = vsel %vm585, %v2933, %v2934
        %v2936 = vrot.slane %v502, 1
        %v2937 = vsel %vm585, %v2934, %v2936
        %v2938 = vrot.slane %v503, 1
        %v2939 = vrot.slane %v504, 1
        %v2940 = vsel %vm585, %v2938, %v2939
        %v2941 = vrot.slane %v505, 1
        %v2942 = vsel %vm585, %v2939, %v2941
        %v2943 = vrot.slane %v506, 1
        %v2944 = vrot.slane %v507, 1
        %v2945 = vsel %vm585, %v2943, %v2944
        %v2946 = vrot.slane %v508, 1
        %v2947 = vsel %vm585, %v2944, %v2946
        %v2948 = vrot.slane %v509, 1
        %v2949 = vrot.slane %v510, 1
        %v2950 = vsel %vm585, %v2948, %v2949
        %v2951 = vrot.slane %v511, 1
        %v2952 = vsel %vm585, %v2949, %v2951
        %v2985 = vpack.c.bf16 %v2877, %v2875
        %v2986 = vpack.c.bf16 %v2882, %v2880
        %v2987 = vpack.c.bf16 %v2887, %v2885
        %v2988 = vpack.c.bf16 %v2892, %v2890
        %v2989 = vpack.c.bf16 %v2897, %v2895
        %v2990 = vpack.c.bf16 %v2902, %v2900
        %v2991 = vpack.c.bf16 %v2907, %v2905
        %v2992 = vpack.c.bf16 %v2912, %v2910
        %v2993 = vpack.c.bf16 %v2917, %v2915
        %v2994 = vpack.c.bf16 %v2922, %v2920
        %v2995 = vpack.c.bf16 %v2927, %v2925
        %v2996 = vpack.c.bf16 %v2932, %v2930
        %v2997 = vpack.c.bf16 %v2937, %v2935
        %v2998 = vpack.c.bf16 %v2942, %v2940
        %v2999 = vpack.c.bf16 %v2947, %v2945
        %v3000 = vpack.c.bf16 %v2952, %v2950
        %v3002 = vsel %vm714, %v2985, 0
        %v3005 = vsel %vm714, %v2986, 0
        %v3008 = vsel %vm714, %v2987, 0
        %v3011 = vsel %vm714, %v2988, 0
        %v3014 = vsel %vm714, %v2989, 0
        %v3017 = vsel %vm714, %v2990, 0
        %v3020 = vsel %vm714, %v2991, 0
        %v3023 = vsel %vm714, %v2992, 0
        %v3026 = vsel %vm714, %v2993, 0
        %v3029 = vsel %vm714, %v2994, 0
        %v3032 = vsel %vm714, %v2995, 0
        %v3035 = vsel %vm714, %v2996, 0
        %v3038 = vsel %vm714, %v2997, 0
        %v3041 = vsel %vm714, %v2998, 0
        %v3044 = vsel %vm714, %v2999, 0
        %v3047 = vsel %vm714, %v3000, 0
        %v3050 = vsel %vm763, %v519, 0
        %3052 = vmatprep.subr.bf16.mxu0 0
        %3053 = vmatpush1.bf16.msra.mxu0 %v3050
        %3054 = vmatprep.subr.bf16.mxu0 0
        %3055 = vmatpush1.bf16.msra.mxu0 0
        %3056 = vmatprep.subr.bf16.mxu0 0
        %3057 = vmatpush1.bf16.msra.mxu0 0
        %3058 = vmatprep.subr.bf16.mxu0 0
        %3059 = vmatpush1.bf16.msra.mxu0 0
        %3060 = vmatprep.subr.bf16.mxu0 0
        %3061 = vmatpush1.bf16.msra.mxu0 0
        %3062 = vmatprep.subr.bf16.mxu0 0
        %3063 = vmatpush1.bf16.msra.mxu0 0
        %3064 = vmatprep.subr.bf16.mxu0 0
        %3065 = vmatpush1.bf16.msra.mxu0 0
        %3066 = vmatprep.subr.bf16.mxu0 0
        %3067 = vmatpush1.bf16.msra.mxu0 0
        %3068 = vmatprep.subr.bf16.mxu0 0
        %3069 = vmatpush1.bf16.msra.mxu0 0
        %3070 = vmatprep.subr.bf16.mxu0 0
        %3071 = vmatpush1.bf16.msra.mxu0 0
        %3072 = vmatprep.subr.bf16.mxu0 0
        %3073 = vmatpush1.bf16.msra.mxu0 0
        %3074 = vmatprep.subr.bf16.mxu0 0
        %3075 = vmatpush1.bf16.msra.mxu0 0
        %3076 = vmatprep.subr.bf16.mxu0 0
        %3077 = vmatpush1.bf16.msra.mxu0 0
        %3078 = vmatprep.subr.bf16.mxu0 0
        %3079 = vmatpush1.bf16.msra.mxu0 0
        %3080 = vmatprep.subr.bf16.mxu0 0
        %3081 = vmatpush1.bf16.msra.mxu0 0
        %3082 = vmatprep.subr.bf16.mxu0 0
        %3083 = vmatpush1.bf16.msra.mxu0 0
        %3084 = vmatprep.mubr.bf16.mxu0 0
        %3085 = vmatmul.mubr.bf16.gmra.mrb[0].mxu0 %v3002
        %v3086 = vpop.f32.mrb[0].mxu0
        %v3087 = vadd.f32 0.0, %v3086
        %v3088 = vpop.f32.mrb[0].mxu0
        %v3089 = vpop.f32.mrb[0].mxu0
        %v3090 = vadd.f32 0.0, %v3089
        %v3091 = vpop.f32.mrb[0].mxu0
        %3092 = vmatprep.mubr.bf16.mxu0 0
        %3093 = vmatmul.mubr.bf16.gmra.mrb[0].mxu0 %v3005
        %v3094 = vpop.f32.mrb[0].mxu0
        %v3095 = vadd.f32 0.0, %v3094
        %v3096 = vpop.f32.mrb[0].mxu0
        %v3097 = vpop.f32.mrb[0].mxu0
        %v3098 = vadd.f32 0.0, %v3097
        %v3099 = vpop.f32.mrb[0].mxu0
        %3100 = vmatprep.mubr.bf16.mxu0 0
        %3101 = vmatmul.mubr.bf16.gmra.mrb[0].mxu0 %v3008
        %v3102 = vpop.f32.mrb[0].mxu0
        %v3103 = vadd.f32 0.0, %v3102
        %v3104 = vpop.f32.mrb[0].mxu0
        %v3105 = vpop.f32.mrb[0].mxu0
        %v3106 = vadd.f32 0.0, %v3105
        %v3107 = vpop.f32.mrb[0].mxu0
        %3108 = vmatprep.mubr.bf16.mxu0 0
        %3109 = vmatmul.mubr.bf16.gmra.mrb[0].mxu0 %v3011
        %v3110 = vpop.f32.mrb[0].mxu0
        %v3111 = vadd.f32 0.0, %v3110
        %v3112 = vpop.f32.mrb[0].mxu0
        %v3113 = vpop.f32.mrb[0].mxu0
        %v3114 = vadd.f32 0.0, %v3113
        %v3115 = vpop.f32.mrb[0].mxu0
        %3116 = vmatprep.mubr.bf16.mxu0 0
        %3117 = vmatmul.mubr.bf16.gmra.mrb[0].mxu0 %v3014
        %v3118 = vpop.f32.mrb[0].mxu0
        %v3119 = vadd.f32 0.0, %v3118
        %v3120 = vpop.f32.mrb[0].mxu0
        %v3121 = vpop.f32.mrb[0].mxu0
        %v3122 = vadd.f32 0.0, %v3121
        %v3123 = vpop.f32.mrb[0].mxu0
        %3124 = vmatprep.mubr.bf16.mxu0 0
        %3125 = vmatmul.mubr.bf16.gmra.mrb[0].mxu0 %v3017
        %v3126 = vpop.f32.mrb[0].mxu0
        %v3127 = vadd.f32 0.0, %v3126
        %v3128 = vpop.f32.mrb[0].mxu0
        %v3129 = vpop.f32.mrb[0].mxu0
        %v3130 = vadd.f32 0.0, %v3129
        %v3131 = vpop.f32.mrb[0].mxu0
        %3132 = vmatprep.mubr.bf16.mxu0 0
        %3133 = vmatmul.mubr.bf16.gmra.mrb[0].mxu0 %v3020
        %v3134 = vpop.f32.mrb[0].mxu0
        %v3135 = vadd.f32 0.0, %v3134
        %v3136 = vpop.f32.mrb[0].mxu0
        %v3137 = vpop.f32.mrb[0].mxu0
        %v3138 = vadd.f32 0.0, %v3137
        %v3139 = vpop.f32.mrb[0].mxu0
        %3140 = vmatprep.mubr.bf16.mxu0 0
        %3141 = vmatmul.mubr.bf16.gmra.mrb[0].mxu0 %v3023
        %v3142 = vpop.f32.mrb[0].mxu0
        %v3143 = vadd.f32 0.0, %v3142
        %v3144 = vpop.f32.mrb[0].mxu0
        %v3145 = vpop.f32.mrb[0].mxu0
        %v3146 = vadd.f32 0.0, %v3145
        %v3147 = vpop.f32.mrb[0].mxu0
        %3148 = vmatprep.mubr.bf16.mxu0 0
        %3149 = vmatmul.mubr.bf16.gmra.mrb[0].mxu0 %v3026
        %v3150 = vpop.f32.mrb[0].mxu0
        %v3151 = vadd.f32 0.0, %v3150
        %v3152 = vpop.f32.mrb[0].mxu0
        %v3153 = vpop.f32.mrb[0].mxu0
        %v3154 = vadd.f32 0.0, %v3153
        %v3155 = vpop.f32.mrb[0].mxu0
        %3156 = vmatprep.mubr.bf16.mxu0 0
        %3157 = vmatmul.mubr.bf16.gmra.mrb[0].mxu0 %v3029
        %v3158 = vpop.f32.mrb[0].mxu0
        %v3159 = vadd.f32 0.0, %v3158
        %v3160 = vpop.f32.mrb[0].mxu0
        %v3161 = vpop.f32.mrb[0].mxu0
        %v3162 = vadd.f32 0.0, %v3161
        %v3163 = vpop.f32.mrb[0].mxu0
        %3164 = vmatprep.mubr.bf16.mxu0 0
        %3165 = vmatmul.mubr.bf16.gmra.mrb[0].mxu0 %v3032
        %v3166 = vpop.f32.mrb[0].mxu0
        %v3167 = vadd.f32 0.0, %v3166
        %v3168 = vpop.f32.mrb[0].mxu0
        %v3169 = vpop.f32.mrb[0].mxu0
        %v3170 = vadd.f32 0.0, %v3169
        %v3171 = vpop.f32.mrb[0].mxu0
        %3172 = vmatprep.mubr.bf16.mxu0 0
        %3173 = vmatmul.mubr.bf16.gmra.mrb[0].mxu0 %v3035
        %v3174 = vpop.f32.mrb[0].mxu0
        %v3175 = vadd.f32 0.0, %v3174
        %v3176 = vpop.f32.mrb[0].mxu0
        %v3177 = vpop.f32.mrb[0].mxu0
        %v3178 = vadd.f32 0.0, %v3177
        %v3179 = vpop.f32.mrb[0].mxu0
        %3180 = vmatprep.mubr.bf16.mxu0 0
        %3181 = vmatmul.mubr.bf16.gmra.mrb[0].mxu0 %v3038
        %v3182 = vpop.f32.mrb[0].mxu0
        %v3183 = vadd.f32 0.0, %v3182
        %v3184 = vpop.f32.mrb[0].mxu0
        %v3185 = vpop.f32.mrb[0].mxu0
        %v3186 = vadd.f32 0.0, %v3185
        %v3187 = vpop.f32.mrb[0].mxu0
        %3188 = vmatprep.mubr.bf16.mxu0 0
        %3189 = vmatmul.mubr.bf16.gmra.mrb[0].mxu0 %v3041
        %v3190 = vpop.f32.mrb[0].mxu0
        %v3191 = vadd.f32 0.0, %v3190
        %v3192 = vpop.f32.mrb[0].mxu0
        %v3193 = vpop.f32.mrb[0].mxu0
        %v3194 = vadd.f32 0.0, %v3193
        %v3195 = vpop.f32.mrb[0].mxu0
        %3196 = vmatprep.mubr.bf16.mxu0 0
        %3197 = vmatmul.mubr.bf16.gmra.mrb[0].mxu0 %v3044
        %v3198 = vpop.f32.mrb[0].mxu0
        %v3199 = vadd.f32 0.0, %v3198
        %v3200 = vpop.f32.mrb[0].mxu0
        %v3201 = vpop.f32.mrb[0].mxu0
        %v3202 = vadd.f32 0.0, %v3201
        %v3203 = vpop.f32.mrb[0].mxu0
        %3204 = vmatprep.mubr.bf16.mxu0 0
        %3205 = vmatmul.mubr.bf16.gmra.mrb[0].mxu0 %v3047
        %v3206 = vpop.f32.mrb[0].mxu0
        %v3207 = vadd.f32 0.0, %v3206
        %v3208 = vpop.f32.mrb[0].mxu0
        %v3209 = vpop.f32.mrb[0].mxu0
        %v3210 = vadd.f32 0.0, %v3209
        %v3211 = vpop.f32.mrb[0].mxu0
        %3212 = vdwg.mxu0
        %v3213 = vadd.f32 %v2793, %v3087
        %v3214 = vadd.f32 %v2794, %v3090
        %v3215 = vadd.f32 %v2795, %v3095
        %v3216 = vadd.f32 %v2796, %v3098
        %v3217 = vadd.f32 %v2797, %v3103
        %v3218 = vadd.f32 %v2798, %v3106
        %v3219 = vadd.f32 %v2799, %v3111
        %v3220 = vadd.f32 %v2800, %v3114
        %v3221 = vadd.f32 %v2801, %v3119
        %v3222 = vadd.f32 %v2802, %v3122
        %v3223 = vadd.f32 %v2803, %v3127
        %v3224 = vadd.f32 %v2804, %v3130
        %v3225 = vadd.f32 %v2805, %v3135
        %v3226 = vadd.f32 %v2806, %v3138
        %v3227 = vadd.f32 %v2807, %v3143
        %v3228 = vadd.f32 %v2808, %v3146
        %v3229 = vadd.f32 %v2809, %v3151
        %v3230 = vadd.f32 %v2810, %v3154
        %v3231 = vadd.f32 %v2811, %v3159
        %v3232 = vadd.f32 %v2812, %v3162
        %v3233 = vadd.f32 %v2813, %v3167
        %v3234 = vadd.f32 %v2814, %v3170
        %v3235 = vadd.f32 %v2815, %v3175
        %v3236 = vadd.f32 %v2816, %v3178
        %v3237 = vadd.f32 %v2817, %v3183
        %v3238 = vadd.f32 %v2818, %v3186
        %v3239 = vadd.f32 %v2819, %v3191
        %v3240 = vadd.f32 %v2820, %v3194
        %v3241 = vadd.f32 %v2821, %v3199
        %v3242 = vadd.f32 %v2822, %v3202
        %v3243 = vadd.f32 %v2823, %v3207
        %v3244 = vadd.f32 %v2824, %v3210
        %v3245 = vrot.slane %v464, 2
        %v3246 = vrot.slane %v465, 2
        %v3247 = vsel %vm1140, %v3245, %v3246
        %v3248 = vrot.slane %v466, 2
        %v3249 = vsel %vm1140, %v3246, %v3248
        %v3250 = vrot.slane %v467, 2
        %v3251 = vrot.slane %v468, 2
        %v3252 = vsel %vm1140, %v3250, %v3251
        %v3253 = vrot.slane %v469, 2
        %v3254 = vsel %vm1140, %v3251, %v3253
        %v3255 = vrot.slane %v470, 2
        %v3256 = vrot.slane %v471, 2
        %v3257 = vsel %vm1140, %v3255, %v3256
        %v3258 = vrot.slane %v472, 2
        %v3259 = vsel %vm1140, %v3256, %v3258
        %v3260 = vrot.slane %v473, 2
        %v3261 = vrot.slane %v474, 2
        %v3262 = vsel %vm1140, %v3260, %v3261
        %v3263 = vrot.slane %v475, 2
        %v3264 = vsel %vm1140, %v3261, %v3263
        %v3265 = vrot.slane %v476, 2
        %v3266 = vrot.slane %v477, 2
        %v3267 = vsel %vm1140, %v3265, %v3266
        %v3268 = vrot.slane %v478, 2
        %v3269 = vsel %vm1140, %v3266, %v3268
        %v3270 = vrot.slane %v479, 2
        %v3271 = vrot.slane %v480, 2
        %v3272 = vsel %vm1140, %v3270, %v3271
        %v3273 = vrot.slane %v481, 2
        %v3274 = vsel %vm1140, %v3271, %v3273
        %v3275 = vrot.slane %v482, 2
        %v3276 = vrot.slane %v483, 2
        %v3277 = vsel %vm1140, %v3275, %v3276
        %v3278 = vrot.slane %v484, 2
        %v3279 = vsel %vm1140, %v3276, %v3278
        %v3280 = vrot.slane %v485, 2
        %v3281 = vrot.slane %v486, 2
        %v3282 = vsel %vm1140, %v3280, %v3281
        %v3283 = vrot.slane %v487, 2
        %v3284 = vsel %vm1140, %v3281, %v3283
        %v3285 = vrot.slane %v488, 2
        %v3286 = vrot.slane %v489, 2
        %v3287 = vsel %vm1140, %v3285, %v3286
        %v3288 = vrot.slane %v490, 2
        %v3289 = vsel %vm1140, %v3286, %v3288
        %v3290 = vrot.slane %v491, 2
        %v3291 = vrot.slane %v492, 2
        %v3292 = vsel %vm1140, %v3290, %v3291
        %v3293 = vrot.slane %v493, 2
        %v3294 = vsel %vm1140, %v3291, %v3293
        %v3295 = vrot.slane %v494, 2
        %v3296 = vrot.slane %v495, 2
        %v3297 = vsel %vm1140, %v3295, %v3296
        %v3298 = vrot.slane %v496, 2
        %v3299 = vsel %vm1140, %v3296, %v3298
        %v3300 = vrot.slane %v497, 2
        %v3301 = vrot.slane %v498, 2
        %v3302 = vsel %vm1140, %v3300, %v3301
        %v3303 = vrot.slane %v499, 2
        %v3304 = vsel %vm1140, %v3301, %v3303
        %v3305 = vrot.slane %v500, 2
        %v3306 = vrot.slane %v501, 2
        %v3307 = vsel %vm1140, %v3305, %v3306
        %v3308 = vrot.slane %v502, 2
        %v3309 = vsel %vm1140, %v3306, %v3308
        %v3310 = vrot.slane %v503, 2
        %v3311 = vrot.slane %v504, 2
        %v3312 = vsel %vm1140, %v3310, %v3311
        %v3313 = vrot.slane %v505, 2
        %v3314 = vsel %vm1140, %v3311, %v3313
        %v3315 = vrot.slane %v506, 2
        %v3316 = vrot.slane %v507, 2
        %v3317 = vsel %vm1140, %v3315, %v3316
        %v3318 = vrot.slane %v508, 2
        %v3319 = vsel %vm1140, %v3316, %v3318
        %v3320 = vrot.slane %v509, 2
        %v3321 = vrot.slane %v510, 2
        %v3322 = vsel %vm1140, %v3320, %v3321
        %v3323 = vrot.slane %v511, 2
        %v3324 = vsel %vm1140, %v3321, %v3323
        %v3357 = vpack.c.bf16 %v3249, %v3247
        %v3358 = vpack.c.bf16 %v3254, %v3252
        %v3359 = vpack.c.bf16 %v3259, %v3257
        %v3360 = vpack.c.bf16 %v3264, %v3262
        %v3361 = vpack.c.bf16 %v3269, %v3267
        %v3362 = vpack.c.bf16 %v3274, %v3272
        %v3363 = vpack.c.bf16 %v3279, %v3277
        %v3364 = vpack.c.bf16 %v3284, %v3282
        %v3365 = vpack.c.bf16 %v3289, %v3287
        %v3366 = vpack.c.bf16 %v3294, %v3292
        %v3367 = vpack.c.bf16 %v3299, %v3297
        %v3368 = vpack.c.bf16 %v3304, %v3302
        %v3369 = vpack.c.bf16 %v3309, %v3307
        %v3370 = vpack.c.bf16 %v3314, %v3312
        %v3371 = vpack.c.bf16 %v3319, %v3317
        %v3372 = vpack.c.bf16 %v3324, %v3322
        %v3374 = vsel %vm714, %v3357, 0
        %v3377 = vsel %vm714, %v3358, 0
        %v3380 = vsel %vm714, %v3359, 0
        %v3383 = vsel %vm714, %v3360, 0
        %v3386 = vsel %vm714, %v3361, 0
        %v3389 = vsel %vm714, %v3362, 0
        %v3392 = vsel %vm714, %v3363, 0
        %v3395 = vsel %vm714, %v3364, 0
        %v3398 = vsel %vm714, %v3365, 0
        %v3401 = vsel %vm714, %v3366, 0
        %v3404 = vsel %vm714, %v3367, 0
        %v3407 = vsel %vm714, %v3368, 0
        %v3410 = vsel %vm714, %v3369, 0
        %v3413 = vsel %vm714, %v3370, 0
        %v3416 = vsel %vm714, %v3371, 0
        %v3419 = vsel %vm714, %v3372, 0
        %v3422 = vsel %vm763, %v520, 0
        %3424 = vmatprep.subr.bf16.mxu0 0
        %3425 = vmatpush1.bf16.msra.mxu0 %v3422
        %3426 = vmatprep.subr.bf16.mxu0 0
        %3427 = vmatpush1.bf16.msra.mxu0 0
        %3428 = vmatprep.subr.bf16.mxu0 0
        %3429 = vmatpush1.bf16.msra.mxu0 0
        %3430 = vmatprep.subr.bf16.mxu0 0
        %3431 = vmatpush1.bf16.msra.mxu0 0
        %3432 = vmatprep.subr.bf16.mxu0 0
        %3433 = vmatpush1.bf16.msra.mxu0 0
        %3434 = vmatprep.subr.bf16.mxu0 0
        %3435 = vmatpush1.bf16.msra.mxu0 0
        %3436 = vmatprep.subr.bf16.mxu0 0
        %3437 = vmatpush1.bf16.msra.mxu0 0
        %3438 = vmatprep.subr.bf16.mxu0 0
        %3439 = vmatpush1.bf16.msra.mxu0 0
        %3440 = vmatprep.subr.bf16.mxu0 0
        %3441 = vmatpush1.bf16.msra.mxu0 0
        %3442 = vmatprep.subr.bf16.mxu0 0
        %3443 = vmatpush1.bf16.msra.mxu0 0
        %3444 = vmatprep.subr.bf16.mxu0 0
        %3445 = vmatpush1.bf16.msra.mxu0 0
        %3446 = vmatprep.subr.bf16.mxu0 0
        %3447 = vmatpush1.bf16.msra.mxu0 0
        %3448 = vmatprep.subr.bf16.mxu0 0
        %3449 = vmatpush1.bf16.msra.mxu0 0
        %3450 = vmatprep.subr.bf16.mxu0 0
        %3451 = vmatpush1.bf16.msra.mxu0 0
        %3452 = vmatprep.subr.bf16.mxu0 0
        %3453 = vmatpush1.bf16.msra.mxu0 0
        %3454 = vmatprep.subr.bf16.mxu0 0
        %3455 = vmatpush1.bf16.msra.mxu0 0
        %3456 = vmatprep.mubr.bf16.mxu0 0
        %3457 = vmatmul.mubr.bf16.gmra.mrb[0].mxu0 %v3374
        %v3458 = vpop.f32.mrb[0].mxu0
        %v3459 = vadd.f32 0.0, %v3458
        %v3460 = vpop.f32.mrb[0].mxu0
        %v3461 = vpop.f32.mrb[0].mxu0
        %v3462 = vadd.f32 0.0, %v3461
        %v3463 = vpop.f32.mrb[0].mxu0
        %3464 = vmatprep.mubr.bf16.mxu0 0
        %3465 = vmatmul.mubr.bf16.gmra.mrb[0].mxu0 %v3377
        %v3466 = vpop.f32.mrb[0].mxu0
        %v3467 = vadd.f32 0.0, %v3466
        %v3468 = vpop.f32.mrb[0].mxu0
        %v3469 = vpop.f32.mrb[0].mxu0
        %v3470 = vadd.f32 0.0, %v3469
        %v3471 = vpop.f32.mrb[0].mxu0
        %3472 = vmatprep.mubr.bf16.mxu0 0
        %3473 = vmatmul.mubr.bf16.gmra.mrb[0].mxu0 %v3380
        %v3474 = vpop.f32.mrb[0].mxu0
        %v3475 = vadd.f32 0.0, %v3474
        %v3476 = vpop.f32.mrb[0].mxu0
        %v3477 = vpop.f32.mrb[0].mxu0
        %v3478 = vadd.f32 0.0, %v3477
        %v3479 = vpop.f32.mrb[0].mxu0
        %3480 = vmatprep.mubr.bf16.mxu0 0
        %3481 = vmatmul.mubr.bf16.gmra.mrb[0].mxu0 %v3383
        %v3482 = vpop.f32.mrb[0].mxu0
        %v3483 = vadd.f32 0.0, %v3482
        %v3484 = vpop.f32.mrb[0].mxu0
        %v3485 = vpop.f32.mrb[0].mxu0
        %v3486 = vadd.f32 0.0, %v3485
        %v3487 = vpop.f32.mrb[0].mxu0
        %3488 = vmatprep.mubr.bf16.mxu0 0
        %3489 = vmatmul.mubr.bf16.gmra.mrb[0].mxu0 %v3386
        %v3490 = vpop.f32.mrb[0].mxu0
        %v3491 = vadd.f32 0.0, %v3490
        %v3492 = vpop.f32.mrb[0].mxu0
        %v3493 = vpop.f32.mrb[0].mxu0
        %v3494 = vadd.f32 0.0, %v3493
        %v3495 = vpop.f32.mrb[0].mxu0
        %3496 = vmatprep.mubr.bf16.mxu0 0
        %3497 = vmatmul.mubr.bf16.gmra.mrb[0].mxu0 %v3389
        %v3498 = vpop.f32.mrb[0].mxu0
        %v3499 = vadd.f32 0.0, %v3498
        %v3500 = vpop.f32.mrb[0].mxu0
        %v3501 = vpop.f32.mrb[0].mxu0
        %v3502 = vadd.f32 0.0, %v3501
        %v3503 = vpop.f32.mrb[0].mxu0
        %3504 = vmatprep.mubr.bf16.mxu0 0
        %3505 = vmatmul.mubr.bf16.gmra.mrb[0].mxu0 %v3392
        %v3506 = vpop.f32.mrb[0].mxu0
        %v3507 = vadd.f32 0.0, %v3506
        %v3508 = vpop.f32.mrb[0].mxu0
        %v3509 = vpop.f32.mrb[0].mxu0
        %v3510 = vadd.f32 0.0, %v3509
        %v3511 = vpop.f32.mrb[0].mxu0
        %3512 = vmatprep.mubr.bf16.mxu0 0
        %3513 = vmatmul.mubr.bf16.gmra.mrb[0].mxu0 %v3395
        %v3514 = vpop.f32.mrb[0].mxu0
        %v3515 = vadd.f32 0.0, %v3514
        %v3516 = vpop.f32.mrb[0].mxu0
        %v3517 = vpop.f32.mrb[0].mxu0
        %v3518 = vadd.f32 0.0, %v3517
        %v3519 = vpop.f32.mrb[0].mxu0
        %3520 = vmatprep.mubr.bf16.mxu0 0
        %3521 = vmatmul.mubr.bf16.gmra.mrb[0].mxu0 %v3398
        %v3522 = vpop.f32.mrb[0].mxu0
        %v3523 = vadd.f32 0.0, %v3522
        %v3524 = vpop.f32.mrb[0].mxu0
        %v3525 = vpop.f32.mrb[0].mxu0
        %v3526 = vadd.f32 0.0, %v3525
        %v3527 = vpop.f32.mrb[0].mxu0
        %3528 = vmatprep.mubr.bf16.mxu0 0
        %3529 = vmatmul.mubr.bf16.gmra.mrb[0].mxu0 %v3401
        %v3530 = vpop.f32.mrb[0].mxu0
        %v3531 = vadd.f32 0.0, %v3530
        %v3532 = vpop.f32.mrb[0].mxu0
        %v3533 = vpop.f32.mrb[0].mxu0
        %v3534 = vadd.f32 0.0, %v3533
        %v3535 = vpop.f32.mrb[0].mxu0
        %3536 = vmatprep.mubr.bf16.mxu0 0
        %3537 = vmatmul.mubr.bf16.gmra.mrb[0].mxu0 %v3404
        %v3538 = vpop.f32.mrb[0].mxu0
        %v3539 = vadd.f32 0.0, %v3538
        %v3540 = vpop.f32.mrb[0].mxu0
        %v3541 = vpop.f32.mrb[0].mxu0
        %v3542 = vadd.f32 0.0, %v3541
        %v3543 = vpop.f32.mrb[0].mxu0
        %3544 = vmatprep.mubr.bf16.mxu0 0
        %3545 = vmatmul.mubr.bf16.gmra.mrb[0].mxu0 %v3407
        %v3546 = vpop.f32.mrb[0].mxu0
        %v3547 = vadd.f32 0.0, %v3546
        %v3548 = vpop.f32.mrb[0].mxu0
        %v3549 = vpop.f32.mrb[0].mxu0
        %v3550 = vadd.f32 0.0, %v3549
        %v3551 = vpop.f32.mrb[0].mxu0
        %3552 = vmatprep.mubr.bf16.mxu0 0
        %3553 = vmatmul.mubr.bf16.gmra.mrb[0].mxu0 %v3410
        %v3554 = vpop.f32.mrb[0].mxu0
        %v3555 = vadd.f32 0.0, %v3554
        %v3556 = vpop.f32.mrb[0].mxu0
        %v3557 = vpop.f32.mrb[0].mxu0
        %v3558 = vadd.f32 0.0, %v3557
        %v3559 = vpop.f32.mrb[0].mxu0
        %3560 = vmatprep.mubr.bf16.mxu0 0
        %3561 = vmatmul.mubr.bf16.gmra.mrb[0].mxu0 %v3413
        %v3562 = vpop.f32.mrb[0].mxu0
        %v3563 = vadd.f32 0.0, %v3562
        %v3564 = vpop.f32.mrb[0].mxu0
        %v3565 = vpop.f32.mrb[0].mxu0
        %v3566 = vadd.f32 0.0, %v3565
        %v3567 = vpop.f32.mrb[0].mxu0
        %3568 = vmatprep.mubr.bf16.mxu0 0
        %3569 = vmatmul.mubr.bf16.gmra.mrb[0].mxu0 %v3416
        %v3570 = vpop.f32.mrb[0].mxu0
        %v3571 = vadd.f32 0.0, %v3570
        %v3572 = vpop.f32.mrb[0].mxu0
        %v3573 = vpop.f32.mrb[0].mxu0
        %v3574 = vadd.f32 0.0, %v3573
        %v3575 = vpop.f32.mrb[0].mxu0
        %3576 = vmatprep.mubr.bf16.mxu0 0
        %3577 = vmatmul.mubr.bf16.gmra.mrb[0].mxu0 %v3419
        %v3578 = vpop.f32.mrb[0].mxu0
        %v3579 = vadd.f32 0.0, %v3578
        %v3580 = vpop.f32.mrb[0].mxu0
        %v3581 = vpop.f32.mrb[0].mxu0
        %v3582 = vadd.f32 0.0, %v3581
        %v3583 = vpop.f32.mrb[0].mxu0
        %3584 = vdwg.mxu0
        %v3585 = vadd.f32 %v3213, %v3459
        %v3586 = vadd.f32 %v3214, %v3462
        %v3587 = vadd.f32 %v3215, %v3467
        %v3588 = vadd.f32 %v3216, %v3470
        %v3589 = vadd.f32 %v3217, %v3475
        %v3590 = vadd.f32 %v3218, %v3478
        %v3591 = vadd.f32 %v3219, %v3483
        %v3592 = vadd.f32 %v3220, %v3486
        %v3593 = vadd.f32 %v3221, %v3491
        %v3594 = vadd.f32 %v3222, %v3494
        %v3595 = vadd.f32 %v3223, %v3499
        %v3596 = vadd.f32 %v3224, %v3502
        %v3597 = vadd.f32 %v3225, %v3507
        %v3598 = vadd.f32 %v3226, %v3510
        %v3599 = vadd.f32 %v3227, %v3515
        %v3600 = vadd.f32 %v3228, %v3518
        %v3601 = vadd.f32 %v3229, %v3523
        %v3602 = vadd.f32 %v3230, %v3526
        %v3603 = vadd.f32 %v3231, %v3531
        %v3604 = vadd.f32 %v3232, %v3534
        %v3605 = vadd.f32 %v3233, %v3539
        %v3606 = vadd.f32 %v3234, %v3542
        %v3607 = vadd.f32 %v3235, %v3547
        %v3608 = vadd.f32 %v3236, %v3550
        %v3609 = vadd.f32 %v3237, %v3555
        %v3610 = vadd.f32 %v3238, %v3558
        %v3611 = vadd.f32 %v3239, %v3563
        %v3612 = vadd.f32 %v3240, %v3566
        %v3613 = vadd.f32 %v3241, %v3571
        %v3614 = vadd.f32 %v3242, %v3574
        %v3615 = vadd.f32 %v3243, %v3579
        %v3616 = vadd.f32 %v3244, %v3582
        %3617 = vst [vmem:[%s199] sm:$0xff] %v3585
        %3618 = vst [vmem:[%s199 + $0x8] sm:$0xff] %v3586
        %3619 = vst [vmem:[%s199 + $0x10] sm:$0xff] %v3587
        %3620 = vst [vmem:[%s199 + $0x18] sm:$0xff] %v3588
        %3621 = vst [vmem:[%s199 + $0x20] sm:$0xff] %v3589
        %3622 = vst [vmem:[%s199 + $0x28] sm:$0xff] %v3590
        %3623 = vst [vmem:[%s199 + $0x30] sm:$0xff] %v3591
        %3624 = vst [vmem:[%s199 + $0x38] sm:$0xff] %v3592
        %3625 = vst [vmem:[%s199 + $0x40] sm:$0xff] %v3593
        %3626 = vst [vmem:[%s199 + $0x48] sm:$0xff] %v3594
        %3627 = vst [vmem:[%s199 + $0x50] sm:$0xff] %v3595
        %3628 = vst [vmem:[%s199 + $0x58] sm:$0xff] %v3596
        %3629 = vst [vmem:[%s199 + $0x60] sm:$0xff] %v3597
        %3630 = vst [vmem:[%s199 + $0x68] sm:$0xff] %v3598
        %3631 = vst [vmem:[%s199 + $0x70] sm:$0xff] %v3599
        %3632 = vst [vmem:[%s199 + $0x78] sm:$0xff] %v3600
        %3633 = vst [vmem:[%s199 + $0x80] sm:$0xff] %v3601
        %3634 = vst [vmem:[%s199 + $0x88] sm:$0xff] %v3602
        %3635 = vst [vmem:[%s199 + $0x90] sm:$0xff] %v3603
        %3636 = vst [vmem:[%s199 + $0x98] sm:$0xff] %v3604
        %3637 = vst [vmem:[%s199 + $0xa0] sm:$0xff] %v3605
        %3638 = vst [vmem:[%s199 + $0xa8] sm:$0xff] %v3606
        %3639 = vst [vmem:[%s199 + $0xb0] sm:$0xff] %v3607
        %3640 = vst [vmem:[%s199 + $0xb8] sm:$0xff] %v3608
        %3641 = vst [vmem:[%s199 + $0xc0] sm:$0xff] %v3609
        %3642 = vst [vmem:[%s199 + $0xc8] sm:$0xff] %v3610
        %3643 = vst [vmem:[%s199 + $0xd0] sm:$0xff] %v3611
        %3644 = vst [vmem:[%s199 + $0xd8] sm:$0xff] %v3612
        %3645 = vst [vmem:[%s199 + $0xe0] sm:$0xff] %v3613
        %3646 = vst [vmem:[%s199 + $0xe8] sm:$0xff] %v3614
        %3647 = vst [vmem:[%s199 + $0xf0] sm:$0xff] %v3615
        %3648 = vst [vmem:[%s199 + $0xf8] sm:$0xff] %v3616
        %v3649 = vadd.f32 %v3585, %v3586
        %v3650 = vadd.f32 %v3649, %v3587
        %v3651 = vadd.f32 %v3650, %v3588
        %v3652 = vadd.f32 %v3651, %v3589
        %v3653 = vadd.f32 %v3652, %v3590
        %v3654 = vadd.f32 %v3653, %v3591
        %v3655 = vadd.f32 %v3654, %v3592
        %v3656 = vadd.f32 %v3655, %v3593
        %v3657 = vadd.f32 %v3656, %v3594
        %v3658 = vadd.f32 %v3657, %v3595
        %v3659 = vadd.f32 %v3658, %v3596
        %v3660 = vadd.f32 %v3659, %v3597
        %v3661 = vadd.f32 %v3660, %v3598
        %v3662 = vadd.f32 %v3661, %v3599
        %v3663 = vadd.f32 %v3662, %v3600
        %v3664 = vadd.f32 %v3663, %v3601
        %v3665 = vadd.f32 %v3664, %v3602
        %v3666 = vadd.f32 %v3665, %v3603
        %v3667 = vadd.f32 %v3666, %v3604
        %v3668 = vadd.f32 %v3667, %v3605
        %v3669 = vadd.f32 %v3668, %v3606
        %v3670 = vadd.f32 %v3669, %v3607
        %v3671 = vadd.f32 %v3670, %v3608
        %v3672 = vadd.f32 %v3671, %v3609
        %v3673 = vadd.f32 %v3672, %v3610
        %v3674 = vadd.f32 %v3673, %v3611
        %v3675 = vadd.f32 %v3674, %v3612
        %v3676 = vadd.f32 %v3675, %v3613
        %v3677 = vadd.f32 %v3676, %v3614
        %v3678 = vadd.f32 %v3677, %v3615
        %v3679 = vadd.f32 %v3678, %v3616
        %v3680 = vrot.slane %v3679, 4
        %v3681 = vadd.f32 %v3679, %v3680
        %v3682 = vrot.slane %v3681, 2
        %v3683 = vadd.f32 %v3681, %v3682
        %v3684 = vrot.slane %v3683, 1
        %v3685 = vadd.f32 %v3683, %v3684
        %v3686 = vmul.f32 %v3585, %v3585
        %v3687 = vmul.f32 %v3586, %v3586
        %v3688 = vmul.f32 %v3587, %v3587
        %v3689 = vmul.f32 %v3588, %v3588
        %v3690 = vmul.f32 %v3589, %v3589
        %v3691 = vmul.f32 %v3590, %v3590
        %v3692 = vmul.f32 %v3591, %v3591
        %v3693 = vmul.f32 %v3592, %v3592
        %v3694 = vmul.f32 %v3593, %v3593
        %v3695 = vmul.f32 %v3594, %v3594
        %v3696 = vmul.f32 %v3595, %v3595
        %v3697 = vmul.f32 %v3596, %v3596
        %v3698 = vmul.f32 %v3597, %v3597
        %v3699 = vmul.f32 %v3598, %v3598
        %v3700 = vmul.f32 %v3599, %v3599
        %v3701 = vmul.f32 %v3600, %v3600
        %v3702 = vmul.f32 %v3601, %v3601
        %v3703 = vmul.f32 %v3602, %v3602
        %v3704 = vmul.f32 %v3603, %v3603
        %v3705 = vmul.f32 %v3604, %v3604
        %v3706 = vmul.f32 %v3605, %v3605
        %v3707 = vmul.f32 %v3606, %v3606
        %v3708 = vmul.f32 %v3607, %v3607
        %v3709 = vmul.f32 %v3608, %v3608
        %v3710 = vmul.f32 %v3609, %v3609
        %v3711 = vmul.f32 %v3610, %v3610
        %v3712 = vmul.f32 %v3611, %v3611
        %v3713 = vmul.f32 %v3612, %v3612
        %v3714 = vmul.f32 %v3613, %v3613
        %v3715 = vmul.f32 %v3614, %v3614
        %v3716 = vmul.f32 %v3615, %v3615
        %v3717 = vmul.f32 %v3616, %v3616
        %v3718 = vadd.f32 %v3686, %v3687
        %v3719 = vadd.f32 %v3718, %v3688
        %v3720 = vadd.f32 %v3719, %v3689
        %v3721 = vadd.f32 %v3720, %v3690
        %v3722 = vadd.f32 %v3721, %v3691
        %v3723 = vadd.f32 %v3722, %v3692
        %v3724 = vadd.f32 %v3723, %v3693
        %v3725 = vadd.f32 %v3724, %v3694
        %v3726 = vadd.f32 %v3725, %v3695
        %v3727 = vadd.f32 %v3726, %v3696
        %v3728 = vadd.f32 %v3727, %v3697
        %v3729 = vadd.f32 %v3728, %v3698
        %v3730 = vadd.f32 %v3729, %v3699
        %v3731 = vadd.f32 %v3730, %v3700
        %v3732 = vadd.f32 %v3731, %v3701
        %v3733 = vadd.f32 %v3732, %v3702
        %v3734 = vadd.f32 %v3733, %v3703
        %v3735 = vadd.f32 %v3734, %v3704
        %v3736 = vadd.f32 %v3735, %v3705
        %v3737 = vadd.f32 %v3736, %v3706
        %v3738 = vadd.f32 %v3737, %v3707
        %v3739 = vadd.f32 %v3738, %v3708
        %v3740 = vadd.f32 %v3739, %v3709
        %v3741 = vadd.f32 %v3740, %v3710
        %v3742 = vadd.f32 %v3741, %v3711
        %v3743 = vadd.f32 %v3742, %v3712
        %v3744 = vadd.f32 %v3743, %v3713
        %v3745 = vadd.f32 %v3744, %v3714
        %v3746 = vadd.f32 %v3745, %v3715
        %v3747 = vadd.f32 %v3746, %v3716
        %v3748 = vadd.f32 %v3747, %v3717
        %v3749 = vrot.slane %v3748, 4
        %v3750 = vadd.f32 %v3748, %v3749
        %v3751 = vrot.slane %v3750, 2
        %v3752 = vadd.f32 %v3750, %v3751
        %v3753 = vrot.slane %v3752, 1
        %v3754 = vadd.f32 %v3752, %v3753
        %vm3755 = vcmask 1040384
        %v3756 = vsel %vm3755, %v3685, %v3754
        %3757 = vst [vmem:[%s206] sm:$0x3] %v3756
        %s3758 = sand.u32 %s92, 1
        %s3759 = scalar_lea.sflag [#allocation3], %s3758
        %s3760 = sand.u32 %s92, 1
        %s3761 = smul.addr %s3760, 256
        %s3762 = scalar_lea.vmem [#allocation2], %s3761
        %s3763 = sand.u32 %s120, 1
        %s3764 = scalar_lea.sflag [#allocation5], %s3763
        %s3765 = sand.u32 %s120, 1
        %s3766 = smul.addr %s3765, 2
        %s3767 = scalar_lea.vmem [#allocation4], %s3766
        // Predicated region
        $region29: #{tpu_custom_call.1} parent=27 // pred_check
          %p3768 = pneg %p102
        $region30: #{tpu_custom_call.1} parent=27 // pred_check_branch
          %3770 = sbr.rel (%p3768) target = $region32
        $region31: #{tpu_custom_call.1} parent=27 // pred_region
          %s3771 = sadd.s32 %s25, %s26
          %s3772 = smul.u32 32, %s3771
          %s3774 = ssub.s32 4096, 4096
          %3775 = vsyncadd %s3759, %s3774
          %s3776 = smul.addr %s3772, 128
          %s3777 = scalar_lea.hbm %s2, %s3776
          %s3778 = sshll.u32 %s3762, 4
          %s3779 = int_to_ptr.vmem [resolvable:$true] %s3778
          %3784 = dma.vmem_to_hbm [thread:$0]  %s3779, 4096, %s3777, %s3759, 128, 128, 8
        $region32: #{tpu_custom_call.1} parent=27 // pred_fallthru
          _
        // Predicated region
        $region33: #{tpu_custom_call.1} parent=27 // pred_check
          %p3785 = pneg %p130
        $region34: #{tpu_custom_call.1} parent=27 // pred_check_branch
          %3787 = sbr.rel (%p3785) target = $region36
        $region35: #{tpu_custom_call.1} parent=27 // pred_region
          %s3788 = sadd.s32 %s25, %s26
          %s3790 = ssub.s32 32, 32
          %3791 = vsyncadd %s3764, %s3790
          %s3792 = smul.addr %s3788, 32
          %s3793 = scalar_lea.hbm %s3, %s3792
          %s3795 = sshll.u32 %s3767, 4
          %s3796 = int_to_ptr.vmem [resolvable:$true] %s3795
          %3798 = dma.vmem_to_hbm [thread:$0]  %s3796, 32, %s3793, %s3764
        $region36: #{tpu_custom_call.1} parent=27 // pred_fallthru
          _
      $region28: #{tpu_custom_call.1} parent=5 // pred_fallthru
        _
      %p3799 = scmp.le.s32.totalorder 2, %s16
      // Predicated region
      $region37: #{tpu_custom_call.1} parent=5 // pred_check
        %p3800 = pneg %p3799
      $region38: #{tpu_custom_call.1} parent=5 // pred_check_branch
        %3802 = sbr.rel (%p3800) target = $region40
      $region39: #{tpu_custom_call.1} parent=5 // pred_region
        %s3803 = ssub.s32 %s16, 2
        // Predicated region
        $region41: #{tpu_custom_call.1} parent=39 // pred_check
          %p3804 = pneg %p108
        $region42: #{tpu_custom_call.1} parent=39 // pred_check_branch
          %3806 = sbr.rel (%p3804) target = $region44
        $region43: #{tpu_custom_call.1} parent=39 // pred_region
          %s3807 = sand.u32 %s93, 1
          %s3808 = scalar_lea.sflag [#allocation3], %s3807
          %s3809 = sand.u32 %s93, 1
          %s3810 = smul.addr %s3809, 256
          %s3811 = scalar_lea.vmem [#allocation2], %s3810
          %3812 = dma.done %s3808, 4096
        $region44: #{tpu_custom_call.1} parent=39 // pred_fallthru
          _
        // Predicated region
        $region45: #{tpu_custom_call.1} parent=39 // pred_check
          %p3813 = pneg %p136
        $region46: #{tpu_custom_call.1} parent=39 // pred_check_branch
          %3815 = sbr.rel (%p3813) target = $region48
        $region47: #{tpu_custom_call.1} parent=39 // pred_region
          %s3816 = sand.u32 %s121, 1
          %s3817 = scalar_lea.sflag [#allocation5], %s3816
          %s3818 = sand.u32 %s121, 1
          %s3819 = smul.addr %s3818, 2
          %s3820 = scalar_lea.vmem [#allocation4], %s3819
          %3821 = dma.done %s3817, 32
        $region48: #{tpu_custom_call.1} parent=39 // pred_fallthru
          _
      $region40: #{tpu_custom_call.1} parent=5 // pred_fallthru
        _
    $region6: #{tpu_custom_call.1} parent=1 // loop_footer
      %s20 = sadd.s32 1, %s16
    $region7: #{tpu_custom_call.1} parent=1 // loop_footer_branch
      %15 = sbr.rel target = $region3
    $region8: #{tpu_custom_call.1} parent=1 // loop_exit
      _
    %3822 = vsyncpa [#allocation3], 1
    %s3823 = scalar_lea.sflag [#allocation3], 1
    %3824 = vsyncpa %s3823, 1
    %3825 = vsyncpa [#allocation5], 1
    %s3826 = scalar_lea.sflag [#allocation5], 1
    %3827 = vsyncpa %s3826, 1

</llo_original>
